<compile_context>
chip_gen: v7x
topology: tpu7x:2x2x1
jax: 0.10.0
libtpu: 0.0.40
codegen_flags: <defaults>
</compile_context>

<pallas_src>
import functools

import jax
import jax.numpy as jnp
from jax.experimental import pallas as pl
from jax.experimental.pallas import tpu as pltpu


# ----------------------------------------------------------------------------
# Fused kernel: wavefront 3-layer GRU recurrence + masked FC head, all in VMEM.
# PyTorch nn.GRU gate equations:
#   r = sigmoid(W_ir x + b_ir + W_hr h + b_hr)
#   z = sigmoid(W_iz x + b_iz + W_hz h + b_hz)
#   n = tanh   (W_in x + b_in + r * (W_hn h + b_hn))
#   h = (1 - z) * n + z * h
# ----------------------------------------------------------------------------
def _make_fused_kernel(T, B_pad, H, num_layers, out_pad):
    def kernel(*refs):
        # refs = x, lengths, (wih, whh, bx, bhn) * L, w1, b1, w2, b2, out
        x_ref, len_ref = refs[0], refs[1]
        layer_refs = refs[2:2 + 4 * num_layers]
        idx = 2 + 4 * num_layers
        w1_ref, b1_ref, w2_ref, b2_ref = refs[idx:idx + 4]
        out_ref = refs[idx + 4]

        # Hoisted per-layer parameter loads (bf16 weights, f32 biases) and the
        # hoisted b_hn broadcast (never re-broadcast inside the wave loop).
        wih, whh, bx, bhn = [], [], [], []
        for l in range(num_layers):
            wih_r, whh_r, bx_r, bhn_r = layer_refs[4 * l:4 * l + 4]
            wih.append(wih_r[...])                              # (Din_l, 3H) bf16
            whh.append(whh_r[...])                              # (H, 3H)     bf16
            bx.append(bx_r[...])                                # (1, 3H)     f32
            bhn.append(jnp.broadcast_to(bhn_r[...], (B_pad, H)))  # (B_pad, H) f32

        # Layer-0 input projection hoisted over all timesteps (bias folded in):
        # one (T*B_pad, Din) x (Din, 3H) matmul, t-major rows.
        xp0 = (jnp.dot(x_ref[...].astype(jnp.bfloat16), wih[0],
                       preferred_element_type=jnp.float32) + bx[0])

        lengths = len_ref[...]                                  # (B_pad, 1) int32

        def cell(l, gx, h_prev):
            # bf16 operands on the MXU, f32 accumulate; gate math in f32.
            gh = jnp.dot(h_prev.astype(jnp.bfloat16), whh[l],
                         preferred_element_type=jnp.float32)
            r = jax.nn.sigmoid(gx[:, 0:H] + gh[:, 0:H])
            z = jax.nn.sigmoid(gx[:, H:2 * H] + gh[:, H:2 * H])
            n = jnp.tanh(gx[:, 2 * H:3 * H] + r * (gh[:, 2 * H:3 * H] + bhn[l]))
            return (1.0 - z) * n + z * h_prev

        # Wavefront: wave w computes (layer l, t = w - l).  Inputs of every cell
        # come from the *previous* wave's committed state, so the L cells of one
        # wave are independent and their latency chains interleave.
        h = [jnp.zeros((B_pad, H), jnp.float32) for _ in range(num_layers)]
        outs = [None] * T
        for w in range(T + num_layers - 1):
            new_h = list(h)
            for l in range(num_layers):
                t = w - l
                if 0 <= t < T:
                    if l == 0:
                        gx = xp0[t * B_pad:(t + 1) * B_pad, :]   # tile-aligned
                    else:
                        gx = (jnp.dot(h[l - 1].astype(jnp.bfloat16), wih[l],
                                      preferred_element_type=jnp.float32)
                              + bx[l])
                    new_h[l] = cell(l, gx, h[l])
            h = new_h
            t_out = w - (num_layers - 1)
            if 0 <= t_out < T:
                # pad_packed_sequence semantics: rows t >= lengths[b] are zeroed
                # before fc (jnp.where, so NaNs in padded inputs cannot leak).
                outs[t_out] = jnp.where(lengths > t_out, h[num_layers - 1], 0.0)

        # In-register (no VMEM scratch) layer output, t-major: (T*B_pad, H).
        h_all = jnp.concatenate(outs, axis=0)

        # Lane-dense FC head (hidden padded to 128 lanes, output padded to 128).
        f1 = jnp.maximum(
            jnp.dot(h_all, w1_ref[...], preferred_element_type=jnp.float32)
            + b1_ref[...], 0.0)                                  # ReLU; dropout = id
        f2 = (jnp.dot(f1, w2_ref[...], preferred_element_type=jnp.float32)
              + b2_ref[...])                                     # (T*B_pad, out_pad)

        # Write batch-major directly: out_ref is (B_pad, T*out_pad); each store
        # is a full, lane-aligned, unmasked (B_pad, 128) slab.
        for t in range(T):
            out_ref[:, t * out_pad:(t + 1) * out_pad] = \
                f2[t * B_pad:(t + 1) * B_pad, :]

    return kernel


def _fused_pallas_forward(x_flat, len_p, gru_layers, fc_params,
                          *, T, B_pad, H, out_pad, num_layers):
    flat_layer_args = []
    for lp in gru_layers:
        flat_layer_args.extend(lp)
    w1p, b1p, w2p, b2p = fc_params
    n_in = 2 + 4 * num_layers + 4
    kernel = _make_fused_kernel(T, B_pad, H, num_layers, out_pad)
    return pl.pallas_call(
        kernel,
        out_shape=jax.ShapeDtypeStruct((B_pad, T * out_pad), jnp.float32),
        in_specs=[pl.BlockSpec(memory_space=pltpu.MemorySpace.VMEM)] * n_in,
        out_specs=pl.BlockSpec(memory_space=pltpu.MemorySpace.VMEM),
    )(x_flat, len_p, *flat_layer_args, w1p, b1p, w2p, b2p)


# ----------------------------------------------------------------------------
# Parameters: PyTorch-layout init, then packed into the fused kernel layout.
# ----------------------------------------------------------------------------
def init_pytorch_params(key, input_size=6, hidden_size=32, output_size=2,
                        num_layers=3):
    """Deterministic params in PyTorch nn.GRU / nn.Linear layout (f32)."""
    params = {"gru": [], "fc": None,
              "hidden_size": hidden_size, "output_size": output_size}
    k_gru = 1.0 / jnp.sqrt(float(hidden_size))
    keys = jax.random.split(key, num_layers * 4 + 4)
    i = 0
    for layer in range(num_layers):
        din = input_size if layer == 0 else hidden_size
        w_ih = jax.random.uniform(keys[i + 0], (3 * hidden_size, din),
                                  jnp.float32, -k_gru, k_gru)
        w_hh = jax.random.uniform(keys[i + 1], (3 * hidden_size, hidden_size),
                                  jnp.float32, -k_gru, k_gru)
        b_ih = jax.random.uniform(keys[i + 2], (3 * hidden_size,),
                                  jnp.float32, -k_gru, k_gru)
        b_hh = jax.random.uniform(keys[i + 3], (3 * hidden_size,),
                                  jnp.float32, -k_gru, k_gru)
        params["gru"].append((w_ih, w_hh, b_ih, b_hh))
        i += 4
    hid2 = hidden_size // 2
    k1 = 1.0 / jnp.sqrt(float(hidden_size))
    k2 = 1.0 / jnp.sqrt(float(hid2))
    w1 = jax.random.uniform(keys[i + 0], (hid2, hidden_size), jnp.float32, -k1, k1)
    b1 = jax.random.uniform(keys[i + 1], (hid2,), jnp.float32, -k1, k1)
    w2 = jax.random.uniform(keys[i + 2], (output_size, hid2), jnp.float32, -k2, k2)
    b2 = jax.random.uniform(keys[i + 3], (output_size,), jnp.float32, -k2, k2)
    params["fc"] = (w1, b1, w2, b2)
    return params


def pack_params(pt):
    """PyTorch layout -> fused kernel layout (arrays only, jit-friendly)."""
    H = pt["hidden_size"]
    out_size = pt["output_size"]
    packed = {"gru": [], "fc": None}
    for (w_ih, w_hh, b_ih, b_hh) in pt["gru"]:
        # bf16 MXU operands for the recurrent path; biases stay f32.
        wih_f = jnp.transpose(w_ih).astype(jnp.bfloat16)     # (Din, 3H) cols r|z|n
        whh_f = jnp.transpose(w_hh).astype(jnp.bfloat16)     # (H, 3H)
        # r/z: fold input+hidden biases; n: only b_in folds into the input
        # projection, b_hn stays separate (inside r * (W_hn h + b_hn)).
        bx = b_ih + jnp.concatenate([b_hh[:2 * H], jnp.zeros((H,), jnp.float32)])
        bhn = b_hh[2 * H:3 * H]
        packed["gru"].append((wih_f, whh_f,
                              bx.reshape(1, 3 * H), bhn.reshape(1, H)))
    w1, b1, w2, b2 = pt["fc"]
    hid2 = w1.shape[0]
    hid_pad = 128 * pl.cdiv(hid2, 128)                       # lane-dense FC hidden
    out_pad = 128 * pl.cdiv(out_size, 128)                   # lane-dense output
    w1p = jnp.zeros((H, hid_pad), jnp.float32).at[:, :hid2].set(jnp.transpose(w1))
    b1p = jnp.zeros((1, hid_pad), jnp.float32).at[:, :hid2].set(b1[None, :])
    w2p = jnp.zeros((hid_pad, out_pad), jnp.float32).at[:hid2, :out_size].set(
        jnp.transpose(w2))
    b2p = jnp.zeros((1, out_pad), jnp.float32).at[:, :out_size].set(b2[None, :])
    packed["fc"] = (w1p, b1p, w2p, b2p)
    return packed


# ----------------------------------------------------------------------------
# Forward wrapper (fully jittable; no host syncs).
# ----------------------------------------------------------------------------
def imu_to_trajectory_forward(packed_params, x, lengths, *, output_size):
    """x: (B, T, input_size) f32 batch_first; lengths: (B,) int32.

    Matches IMUToTrajectoryNet.forward in eval mode with
    pad_packed_sequence(..., total_length=T): returns (B, T, output_size).
    Rows with t < lengths[b] equal PyTorch's output exactly; rows beyond carry
    fc(zeros), identical to PyTorch's fc applied to pad_packed zero rows.
    """
    gru_layers = packed_params["gru"]
    fc_params = packed_params["fc"]
    B, T, Din = x.shape
    H = gru_layers[0][1].shape[0]                       # whh_f is (H, 3H)
    out_pad = fc_params[2].shape[1]
    num_layers = len(gru_layers)

    # Pad batch to full sublane tiles; phantom rows get length 0 and are masked.
    B_pad = 8 * ((B + 7) // 8)
    x_p = jnp.pad(x.astype(jnp.float32), ((0, B_pad - B), (0, 0), (0, 0)))
    x_flat = jnp.transpose(x_p, (1, 0, 2)).reshape(T * B_pad, Din)  # t-major rows
    len_p = jnp.pad(lengths.astype(jnp.int32), (0, B_pad - B)).reshape(B_pad, 1)

    out_slab = _fused_pallas_forward(
        x_flat, len_p, gru_layers, fc_params,
        T=T, B_pad=B_pad, H=H, out_pad=out_pad, num_layers=num_layers)

    # (B_pad, T*out_pad) -> (B_pad, T, out_pad) is a free contiguous reshape;
    # only a single crop slice remains on the wrapper side.
    pred = out_slab.reshape(B_pad, T, out_pad)
    return pred[:B, :, :output_size]


# ----------------------------------------------------------------------------
# Pure-JAX f32 reference (PyTorch GRU + pad_packed + fc semantics).
# ----------------------------------------------------------------------------
def reference_forward(pt_params, x, lengths, output_size):
    B, T, _ = x.shape
    H = pt_params["hidden_size"]
    h_in = x.astype(jnp.float32)
    for (w_ih, w_hh, b_ih, b_hh) in pt_params["gru"]:
        h = jnp.zeros((B, H), jnp.float32)
        outs = []
        for t in range(T):
            xt = h_in[:, t, :]
            gx = xt @ w_ih.T + b_ih
            gh = h @ w_hh.T + b_hh
            r = jax.nn.sigmoid(gx[:, :H] + gh[:, :H])
            z = jax.nn.sigmoid(gx[:, H:2 * H] + gh[:, H:2 * H])
            n = jnp.tanh(gx[:, 2 * H:] + r * gh[:, 2 * H:])
            h = (1.0 - z) * n + z * h
            outs.append(h)
        h_in = jnp.stack(outs, axis=1)                          # (B, T, H)
    mask = (jnp.arange(T)[None, :] < lengths[:, None]).astype(jnp.float32)
    h_masked = h_in * mask[..., None]
    w1, b1, w2, b2 = pt_params["fc"]
    f1 = jnp.maximum(h_masked @ w1.T + b1, 0.0)
    return (f1 @ w2.T + b2)[:, :, :output_size]


if __name__ == "__main__":
    INPUT_SIZE, HIDDEN_SIZE, OUTPUT_SIZE, NUM_LAYERS = 6, 32, 2, 3
    B, T = 2, 8
    LENGTHS = [8, 5]                                    # ragged batch, like packing

    key = jax.random.PRNGKey(0)
    pkey, xkey = jax.random.split(key)
    pt_params = init_pytorch_params(pkey, INPUT_SIZE, HIDDEN_SIZE,
                                    OUTPUT_SIZE, NUM_LAYERS)
    params = pack_params(pt_params)

    x = jax.random.normal(xkey, (B, T, INPUT_SIZE), jnp.float32)
    lengths = jnp.array(LENGTHS, dtype=jnp.int32)

    fwd = jax.jit(functools.partial(imu_to_trajectory_forward,
                                    output_size=OUTPUT_SIZE))
    preds = fwd(params, x, lengths)
    jax.block_until_ready(preds)
    assert preds.shape == (B, T, OUTPUT_SIZE), preds.shape

    # Validate against the f32 reference (bf16 recurrent matmuls are a
    # deliberate precision trade-off; tolerance sized accordingly).
    ref = reference_forward(pt_params, x, lengths, OUTPUT_SIZE)
    max_err = float(jnp.max(jnp.abs(preds - ref)))
    assert max_err < 5e-2, f"max abs err vs f32 reference: {max_err}"

    print("KERNEL_OK")
</pallas_src>

<mosaic_0001>
module attributes {stable_mosaic.version = 11 : i64} {
  func.func @kernel(%arg0: memref<64x6xf32, #tpu.memory_space<vmem>>, %arg1: memref<8x1xi32, #tpu.memory_space<vmem>>, %arg2: memref<6x96xbf16, #tpu.memory_space<vmem>>, %arg3: memref<32x96xbf16, #tpu.memory_space<vmem>>, %arg4: memref<1x96xf32, #tpu.memory_space<vmem>>, %arg5: memref<1x32xf32, #tpu.memory_space<vmem>>, %arg6: memref<32x96xbf16, #tpu.memory_space<vmem>>, %arg7: memref<32x96xbf16, #tpu.memory_space<vmem>>, %arg8: memref<1x96xf32, #tpu.memory_space<vmem>>, %arg9: memref<1x32xf32, #tpu.memory_space<vmem>>, %arg10: memref<32x96xbf16, #tpu.memory_space<vmem>>, %arg11: memref<32x96xbf16, #tpu.memory_space<vmem>>, %arg12: memref<1x96xf32, #tpu.memory_space<vmem>>, %arg13: memref<1x32xf32, #tpu.memory_space<vmem>>, %arg14: memref<32x128xf32, #tpu.memory_space<vmem>>, %arg15: memref<1x128xf32, #tpu.memory_space<vmem>>, %arg16: memref<128x128xf32, #tpu.memory_space<vmem>>, %arg17: memref<1x128xf32, #tpu.memory_space<vmem>>, %arg18: memref<8x1024xf32, #tpu.memory_space<vmem>>) attributes {dimension_semantics = [], scalar_prefetch = 0 : i64, scratch_operands = 0 : i64, tpu.core_type = #tpu.core_type<tc>} {
    %c0 = arith.constant 0 : index
    %c0_0 = arith.constant 0 : index
    %0 = vector.load %arg2[%c0, %c0_0] : memref<6x96xbf16, #tpu.memory_space<vmem>>, vector<6x96xbf16>
    %c0_1 = arith.constant 0 : index
    %c0_2 = arith.constant 0 : index
    %1 = vector.load %arg3[%c0_1, %c0_2] : memref<32x96xbf16, #tpu.memory_space<vmem>>, vector<32x96xbf16>
    %c0_3 = arith.constant 0 : index
    %c0_4 = arith.constant 0 : index
    %2 = vector.load %arg4[%c0_3, %c0_4] : memref<1x96xf32, #tpu.memory_space<vmem>>, vector<1x96xf32>
    %c0_5 = arith.constant 0 : index
    %c0_6 = arith.constant 0 : index
    %3 = vector.load %arg5[%c0_5, %c0_6] : memref<1x32xf32, #tpu.memory_space<vmem>>, vector<1x32xf32>
    %4 = vector.shape_cast %3 : vector<1x32xf32> to vector<1x32xf32>
    %5 = vector.broadcast %4 : vector<1x32xf32> to vector<8x32xf32>
    %c0_7 = arith.constant 0 : index
    %c0_8 = arith.constant 0 : index
    %6 = vector.load %arg6[%c0_7, %c0_8] : memref<32x96xbf16, #tpu.memory_space<vmem>>, vector<32x96xbf16>
    %c0_9 = arith.constant 0 : index
    %c0_10 = arith.constant 0 : index
    %7 = vector.load %arg7[%c0_9, %c0_10] : memref<32x96xbf16, #tpu.memory_space<vmem>>, vector<32x96xbf16>
    %c0_11 = arith.constant 0 : index
    %c0_12 = arith.constant 0 : index
    %8 = vector.load %arg8[%c0_11, %c0_12] : memref<1x96xf32, #tpu.memory_space<vmem>>, vector<1x96xf32>
    %c0_13 = arith.constant 0 : index
    %c0_14 = arith.constant 0 : index
    %9 = vector.load %arg9[%c0_13, %c0_14] : memref<1x32xf32, #tpu.memory_space<vmem>>, vector<1x32xf32>
    %10 = vector.shape_cast %9 : vector<1x32xf32> to vector<1x32xf32>
    %11 = vector.broadcast %10 : vector<1x32xf32> to vector<8x32xf32>
    %c0_15 = arith.constant 0 : index
    %c0_16 = arith.constant 0 : index
    %12 = vector.load %arg10[%c0_15, %c0_16] : memref<32x96xbf16, #tpu.memory_space<vmem>>, vector<32x96xbf16>
    %c0_17 = arith.constant 0 : index
    %c0_18 = arith.constant 0 : index
    %13 = vector.load %arg11[%c0_17, %c0_18] : memref<32x96xbf16, #tpu.memory_space<vmem>>, vector<32x96xbf16>
    %c0_19 = arith.constant 0 : index
    %c0_20 = arith.constant 0 : index
    %14 = vector.load %arg12[%c0_19, %c0_20] : memref<1x96xf32, #tpu.memory_space<vmem>>, vector<1x96xf32>
    %c0_21 = arith.constant 0 : index
    %c0_22 = arith.constant 0 : index
    %15 = vector.load %arg13[%c0_21, %c0_22] : memref<1x32xf32, #tpu.memory_space<vmem>>, vector<1x32xf32>
    %16 = vector.shape_cast %15 : vector<1x32xf32> to vector<1x32xf32>
    %17 = vector.broadcast %16 : vector<1x32xf32> to vector<8x32xf32>
    %c0_23 = arith.constant 0 : index
    %c0_24 = arith.constant 0 : index
    %18 = vector.load %arg0[%c0_23, %c0_24] : memref<64x6xf32, #tpu.memory_space<vmem>>, vector<64x6xf32>
    %19 = arith.truncf %18 : vector<64x6xf32> to vector<64x6xbf16>
    %cst = arith.constant dense<0.000000e+00> : vector<64x96xf32>
    %20 = tpu.matmul %19, %0, %cst {dimension_numbers = #tpu.dot_dimension_numbers<[1], [0], [0], [1], [0, 0, 1, 1], [], []>} : vector<64x6xbf16>, vector<6x96xbf16>, vector<64x96xf32> -> vector<64x96xf32>
    %21 = vector.broadcast %2 : vector<1x96xf32> to vector<64x96xf32>
    %22 = arith.addf %20, %21 : vector<64x96xf32>
    %c0_25 = arith.constant 0 : index
    %c0_26 = arith.constant 0 : index
    %23 = vector.load %arg1[%c0_25, %c0_26] : memref<8x1xi32, #tpu.memory_space<vmem>>, vector<8x1xi32>
    %cst_27 = arith.constant 0.000000e+00 : f32
    %24 = vector.broadcast %cst_27 : f32 to vector<8x32xf32>
    %cst_28 = arith.constant 0.000000e+00 : f32
    %25 = vector.broadcast %cst_28 : f32 to vector<8x32xf32>
    %cst_29 = arith.constant 0.000000e+00 : f32
    %26 = vector.broadcast %cst_29 : f32 to vector<8x32xf32>
    %27 = vector.extract_strided_slice %22 {offsets = [0, 0], sizes = [8, 96], strides = [1, 1]} : vector<64x96xf32> to vector<8x96xf32>
    %28 = arith.truncf %24 : vector<8x32xf32> to vector<8x32xbf16>
    %cst_30 = arith.constant dense<0.000000e+00> : vector<8x96xf32>
    %29 = tpu.matmul %28, %1, %cst_30 {dimension_numbers = #tpu.dot_dimension_numbers<[1], [0], [0], [1], [0, 0, 1, 1], [], []>} : vector<8x32xbf16>, vector<32x96xbf16>, vector<8x96xf32> -> vector<8x96xf32>
    %30 = vector.extract_strided_slice %27 {offsets = [0, 0], sizes = [8, 32], strides = [1, 1]} : vector<8x96xf32> to vector<8x32xf32>
    %31 = vector.extract_strided_slice %29 {offsets = [0, 0], sizes = [8, 32], strides = [1, 1]} : vector<8x96xf32> to vector<8x32xf32>
    %32 = arith.addf %30, %31 : vector<8x32xf32>
    %33 = arith.negf %32 : vector<8x32xf32>
    %34 = math.exp %33 : vector<8x32xf32>
    %cst_31 = arith.constant 1.000000e+00 : f32
    %35 = vector.broadcast %cst_31 : f32 to vector<8x32xf32>
    %36 = arith.addf %35, %34 : vector<8x32xf32>
    %37 = arith.divf %35, %36 : vector<8x32xf32>
    %38 = vector.extract_strided_slice %27 {offsets = [0, 32], sizes = [8, 32], strides = [1, 1]} : vector<8x96xf32> to vector<8x32xf32>
    %39 = vector.extract_strided_slice %29 {offsets = [0, 32], sizes = [8, 32], strides = [1, 1]} : vector<8x96xf32> to vector<8x32xf32>
    %40 = arith.addf %38, %39 : vector<8x32xf32>
    %41 = arith.negf %40 : vector<8x32xf32>
    %42 = math.exp %41 : vector<8x32xf32>
    %cst_32 = arith.constant 1.000000e+00 : f32
    %43 = vector.broadcast %cst_32 : f32 to vector<8x32xf32>
    %44 = arith.addf %43, %42 : vector<8x32xf32>
    %45 = arith.divf %43, %44 : vector<8x32xf32>
    %46 = vector.extract_strided_slice %27 {offsets = [0, 64], sizes = [8, 32], strides = [1, 1]} : vector<8x96xf32> to vector<8x32xf32>
    %47 = vector.extract_strided_slice %29 {offsets = [0, 64], sizes = [8, 32], strides = [1, 1]} : vector<8x96xf32> to vector<8x32xf32>
    %48 = arith.addf %47, %5 : vector<8x32xf32>
    %49 = arith.mulf %37, %48 : vector<8x32xf32>
    %50 = arith.addf %46, %49 : vector<8x32xf32>
    %51 = math.tanh %50 : vector<8x32xf32>
    %cst_33 = arith.constant 1.000000e+00 : f32
    %52 = vector.broadcast %cst_33 : f32 to vector<8x32xf32>
    %53 = arith.subf %52, %45 : vector<8x32xf32>
    %54 = arith.mulf %53, %51 : vector<8x32xf32>
    %55 = arith.mulf %45, %24 : vector<8x32xf32>
    %56 = arith.addf %54, %55 : vector<8x32xf32>
    %57 = vector.extract_strided_slice %22 {offsets = [8, 0], sizes = [8, 96], strides = [1, 1]} : vector<64x96xf32> to vector<8x96xf32>
    %58 = arith.truncf %56 : vector<8x32xf32> to vector<8x32xbf16>
    %cst_34 = arith.constant dense<0.000000e+00> : vector<8x96xf32>
    %59 = tpu.matmul %58, %1, %cst_34 {dimension_numbers = #tpu.dot_dimension_numbers<[1], [0], [0], [1], [0, 0, 1, 1], [], []>} : vector<8x32xbf16>, vector<32x96xbf16>, vector<8x96xf32> -> vector<8x96xf32>
    %60 = vector.extract_strided_slice %57 {offsets = [0, 0], sizes = [8, 32], strides = [1, 1]} : vector<8x96xf32> to vector<8x32xf32>
    %61 = vector.extract_strided_slice %59 {offsets = [0, 0], sizes = [8, 32], strides = [1, 1]} : vector<8x96xf32> to vector<8x32xf32>
    %62 = arith.addf %60, %61 : vector<8x32xf32>
    %63 = arith.negf %62 : vector<8x32xf32>
    %64 = math.exp %63 : vector<8x32xf32>
    %cst_35 = arith.constant 1.000000e+00 : f32
    %65 = vector.broadcast %cst_35 : f32 to vector<8x32xf32>
    %66 = arith.addf %65, %64 : vector<8x32xf32>
    %67 = arith.divf %65, %66 : vector<8x32xf32>
    %68 = vector.extract_strided_slice %57 {offsets = [0, 32], sizes = [8, 32], strides = [1, 1]} : vector<8x96xf32> to vector<8x32xf32>
    %69 = vector.extract_strided_slice %59 {offsets = [0, 32], sizes = [8, 32], strides = [1, 1]} : vector<8x96xf32> to vector<8x32xf32>
    %70 = arith.addf %68, %69 : vector<8x32xf32>
    %71 = arith.negf %70 : vector<8x32xf32>
    %72 = math.exp %71 : vector<8x32xf32>
    %cst_36 = arith.constant 1.000000e+00 : f32
    %73 = vector.broadcast %cst_36 : f32 to vector<8x32xf32>
    %74 = arith.addf %73, %72 : vector<8x32xf32>
    %75 = arith.divf %73, %74 : vector<8x32xf32>
    %76 = vector.extract_strided_slice %57 {offsets = [0, 64], sizes = [8, 32], strides = [1, 1]} : vector<8x96xf32> to vector<8x32xf32>
    %77 = vector.extract_strided_slice %59 {offsets = [0, 64], sizes = [8, 32], strides = [1, 1]} : vector<8x96xf32> to vector<8x32xf32>
    %78 = arith.addf %77, %5 : vector<8x32xf32>
    %79 = arith.mulf %67, %78 : vector<8x32xf32>
    %80 = arith.addf %76, %79 : vector<8x32xf32>
    %81 = math.tanh %80 : vector<8x32xf32>
    %cst_37 = arith.constant 1.000000e+00 : f32
    %82 = vector.broadcast %cst_37 : f32 to vector<8x32xf32>
    %83 = arith.subf %82, %75 : vector<8x32xf32>
    %84 = arith.mulf %83, %81 : vector<8x32xf32>
    %85 = arith.mulf %75, %56 : vector<8x32xf32>
    %86 = arith.addf %84, %85 : vector<8x32xf32>
    %87 = arith.truncf %56 : vector<8x32xf32> to vector<8x32xbf16>
    %cst_38 = arith.constant dense<0.000000e+00> : vector<8x96xf32>
    %88 = tpu.matmul %87, %6, %cst_38 {dimension_numbers = #tpu.dot_dimension_numbers<[1], [0], [0], [1], [0, 0, 1, 1], [], []>} : vector<8x32xbf16>, vector<32x96xbf16>, vector<8x96xf32> -> vector<8x96xf32>
    %89 = vector.broadcast %8 : vector<1x96xf32> to vector<8x96xf32>
    %90 = arith.addf %88, %89 : vector<8x96xf32>
    %91 = arith.truncf %25 : vector<8x32xf32> to vector<8x32xbf16>
    %cst_39 = arith.constant dense<0.000000e+00> : vector<8x96xf32>
    %92 = tpu.matmul %91, %7, %cst_39 {dimension_numbers = #tpu.dot_dimension_numbers<[1], [0], [0], [1], [0, 0, 1, 1], [], []>} : vector<8x32xbf16>, vector<32x96xbf16>, vector<8x96xf32> -> vector<8x96xf32>
    %93 = vector.extract_strided_slice %90 {offsets = [0, 0], sizes = [8, 32], strides = [1, 1]} : vector<8x96xf32> to vector<8x32xf32>
    %94 = vector.extract_strided_slice %92 {offsets = [0, 0], sizes = [8, 32], strides = [1, 1]} : vector<8x96xf32> to vector<8x32xf32>
    %95 = arith.addf %93, %94 : vector<8x32xf32>
    %96 = arith.negf %95 : vector<8x32xf32>
    %97 = math.exp %96 : vector<8x32xf32>
    %cst_40 = arith.constant 1.000000e+00 : f32
    %98 = vector.broadcast %cst_40 : f32 to vector<8x32xf32>
    %99 = arith.addf %98, %97 : vector<8x32xf32>
    %100 = arith.divf %98, %99 : vector<8x32xf32>
    %101 = vector.extract_strided_slice %90 {offsets = [0, 32], sizes = [8, 32], strides = [1, 1]} : vector<8x96xf32> to vector<8x32xf32>
    %102 = vector.extract_strided_slice %92 {offsets = [0, 32], sizes = [8, 32], strides = [1, 1]} : vector<8x96xf32> to vector<8x32xf32>
    %103 = arith.addf %101, %102 : vector<8x32xf32>
    %104 = arith.negf %103 : vector<8x32xf32>
    %105 = math.exp %104 : vector<8x32xf32>
    %cst_41 = arith.constant 1.000000e+00 : f32
    %106 = vector.broadcast %cst_41 : f32 to vector<8x32xf32>
    %107 = arith.addf %106, %105 : vector<8x32xf32>
    %108 = arith.divf %106, %107 : vector<8x32xf32>
    %109 = vector.extract_strided_slice %90 {offsets = [0, 64], sizes = [8, 32], strides = [1, 1]} : vector<8x96xf32> to vector<8x32xf32>
    %110 = vector.extract_strided_slice %92 {offsets = [0, 64], sizes = [8, 32], strides = [1, 1]} : vector<8x96xf32> to vector<8x32xf32>
    %111 = arith.addf %110, %11 : vector<8x32xf32>
    %112 = arith.mulf %100, %111 : vector<8x32xf32>
    %113 = arith.addf %109, %112 : vector<8x32xf32>
    %114 = math.tanh %113 : vector<8x32xf32>
    %cst_42 = arith.constant 1.000000e+00 : f32
    %115 = vector.broadcast %cst_42 : f32 to vector<8x32xf32>
    %116 = arith.subf %115, %108 : vector<8x32xf32>
    %117 = arith.mulf %116, %114 : vector<8x32xf32>
    %118 = arith.mulf %108, %25 : vector<8x32xf32>
    %119 = arith.addf %117, %118 : vector<8x32xf32>
    %120 = vector.extract_strided_slice %22 {offsets = [16, 0], sizes = [8, 96], strides = [1, 1]} : vector<64x96xf32> to vector<8x96xf32>
    %121 = arith.truncf %86 : vector<8x32xf32> to vector<8x32xbf16>
    %cst_43 = arith.constant dense<0.000000e+00> : vector<8x96xf32>
    %122 = tpu.matmul %121, %1, %cst_43 {dimension_numbers = #tpu.dot_dimension_numbers<[1], [0], [0], [1], [0, 0, 1, 1], [], []>} : vector<8x32xbf16>, vector<32x96xbf16>, vector<8x96xf32> -> vector<8x96xf32>
    %123 = vector.extract_strided_slice %120 {offsets = [0, 0], sizes = [8, 32], strides = [1, 1]} : vector<8x96xf32> to vector<8x32xf32>
    %124 = vector.extract_strided_slice %122 {offsets = [0, 0], sizes = [8, 32], strides = [1, 1]} : vector<8x96xf32> to vector<8x32xf32>
    %125 = arith.addf %123, %124 : vector<8x32xf32>
    %126 = arith.negf %125 : vector<8x32xf32>
    %127 = math.exp %126 : vector<8x32xf32>
    %cst_44 = arith.constant 1.000000e+00 : f32
    %128 = vector.broadcast %cst_44 : f32 to vector<8x32xf32>
    %129 = arith.addf %128, %127 : vector<8x32xf32>
    %130 = arith.divf %128, %129 : vector<8x32xf32>
    %131 = vector.extract_strided_slice %120 {offsets = [0, 32], sizes = [8, 32], strides = [1, 1]} : vector<8x96xf32> to vector<8x32xf32>
    %132 = vector.extract_strided_slice %122 {offsets = [0, 32], sizes = [8, 32], strides = [1, 1]} : vector<8x96xf32> to vector<8x32xf32>
    %133 = arith.addf %131, %132 : vector<8x32xf32>
    %134 = arith.negf %133 : vector<8x32xf32>
    %135 = math.exp %134 : vector<8x32xf32>
    %cst_45 = arith.constant 1.000000e+00 : f32
    %136 = vector.broadcast %cst_45 : f32 to vector<8x32xf32>
    %137 = arith.addf %136, %135 : vector<8x32xf32>
    %138 = arith.divf %136, %137 : vector<8x32xf32>
    %139 = vector.extract_strided_slice %120 {offsets = [0, 64], sizes = [8, 32], strides = [1, 1]} : vector<8x96xf32> to vector<8x32xf32>
    %140 = vector.extract_strided_slice %122 {offsets = [0, 64], sizes = [8, 32], strides = [1, 1]} : vector<8x96xf32> to vector<8x32xf32>
    %141 = arith.addf %140, %5 : vector<8x32xf32>
    %142 = arith.mulf %130, %141 : vector<8x32xf32>
    %143 = arith.addf %139, %142 : vector<8x32xf32>
    %144 = math.tanh %143 : vector<8x32xf32>
    %cst_46 = arith.constant 1.000000e+00 : f32
    %145 = vector.broadcast %cst_46 : f32 to vector<8x32xf32>
    %146 = arith.subf %145, %138 : vector<8x32xf32>
    %147 = arith.mulf %146, %144 : vector<8x32xf32>
    %148 = arith.mulf %138, %86 : vector<8x32xf32>
    %149 = arith.addf %147, %148 : vector<8x32xf32>
    %150 = arith.truncf %86 : vector<8x32xf32> to vector<8x32xbf16>
    %cst_47 = arith.constant dense<0.000000e+00> : vector<8x96xf32>
    %151 = tpu.matmul %150, %6, %cst_47 {dimension_numbers = #tpu.dot_dimension_numbers<[1], [0], [0], [1], [0, 0, 1, 1], [], []>} : vector<8x32xbf16>, vector<32x96xbf16>, vector<8x96xf32> -> vector<8x96xf32>
    %152 = vector.broadcast %8 : vector<1x96xf32> to vector<8x96xf32>
    %153 = arith.addf %151, %152 : vector<8x96xf32>
    %154 = arith.truncf %119 : vector<8x32xf32> to vector<8x32xbf16>
    %cst_48 = arith.constant dense<0.000000e+00> : vector<8x96xf32>
    %155 = tpu.matmul %154, %7, %cst_48 {dimension_numbers = #tpu.dot_dimension_numbers<[1], [0], [0], [1], [0, 0, 1, 1], [], []>} : vector<8x32xbf16>, vector<32x96xbf16>, vector<8x96xf32> -> vector<8x96xf32>
    %156 = vector.extract_strided_slice %153 {offsets = [0, 0], sizes = [8, 32], strides = [1, 1]} : vector<8x96xf32> to vector<8x32xf32>
    %157 = vector.extract_strided_slice %155 {offsets = [0, 0], sizes = [8, 32], strides = [1, 1]} : vector<8x96xf32> to vector<8x32xf32>
    %158 = arith.addf %156, %157 : vector<8x32xf32>
    %159 = arith.negf %158 : vector<8x32xf32>
    %160 = math.exp %159 : vector<8x32xf32>
    %cst_49 = arith.constant 1.000000e+00 : f32
    %161 = vector.broadcast %cst_49 : f32 to vector<8x32xf32>
    %162 = arith.addf %161, %160 : vector<8x32xf32>
    %163 = arith.divf %161, %162 : vector<8x32xf32>
    %164 = vector.extract_strided_slice %153 {offsets = [0, 32], sizes = [8, 32], strides = [1, 1]} : vector<8x96xf32> to vector<8x32xf32>
    %165 = vector.extract_strided_slice %155 {offsets = [0, 32], sizes = [8, 32], strides = [1, 1]} : vector<8x96xf32> to vector<8x32xf32>
    %166 = arith.addf %164, %165 : vector<8x32xf32>
    %167 = arith.negf %166 : vector<8x32xf32>
    %168 = math.exp %167 : vector<8x32xf32>
    %cst_50 = arith.constant 1.000000e+00 : f32
    %169 = vector.broadcast %cst_50 : f32 to vector<8x32xf32>
    %170 = arith.addf %169, %168 : vector<8x32xf32>
    %171 = arith.divf %169, %170 : vector<8x32xf32>
    %172 = vector.extract_strided_slice %153 {offsets = [0, 64], sizes = [8, 32], strides = [1, 1]} : vector<8x96xf32> to vector<8x32xf32>
    %173 = vector.extract_strided_slice %155 {offsets = [0, 64], sizes = [8, 32], strides = [1, 1]} : vector<8x96xf32> to vector<8x32xf32>
    %174 = arith.addf %173, %11 : vector<8x32xf32>
    %175 = arith.mulf %163, %174 : vector<8x32xf32>
    %176 = arith.addf %172, %175 : vector<8x32xf32>
    %177 = math.tanh %176 : vector<8x32xf32>
    %cst_51 = arith.constant 1.000000e+00 : f32
    %178 = vector.broadcast %cst_51 : f32 to vector<8x32xf32>
    %179 = arith.subf %178, %171 : vector<8x32xf32>
    %180 = arith.mulf %179, %177 : vector<8x32xf32>
    %181 = arith.mulf %171, %119 : vector<8x32xf32>
    %182 = arith.addf %180, %181 : vector<8x32xf32>
    %183 = arith.truncf %119 : vector<8x32xf32> to vector<8x32xbf16>
    %cst_52 = arith.constant dense<0.000000e+00> : vector<8x96xf32>
    %184 = tpu.matmul %183, %12, %cst_52 {dimension_numbers = #tpu.dot_dimension_numbers<[1], [0], [0], [1], [0, 0, 1, 1], [], []>} : vector<8x32xbf16>, vector<32x96xbf16>, vector<8x96xf32> -> vector<8x96xf32>
    %185 = vector.broadcast %14 : vector<1x96xf32> to vector<8x96xf32>
    %186 = arith.addf %184, %185 : vector<8x96xf32>
    %187 = arith.truncf %26 : vector<8x32xf32> to vector<8x32xbf16>
    %cst_53 = arith.constant dense<0.000000e+00> : vector<8x96xf32>
    %188 = tpu.matmul %187, %13, %cst_53 {dimension_numbers = #tpu.dot_dimension_numbers<[1], [0], [0], [1], [0, 0, 1, 1], [], []>} : vector<8x32xbf16>, vector<32x96xbf16>, vector<8x96xf32> -> vector<8x96xf32>
    %189 = vector.extract_strided_slice %186 {offsets = [0, 0], sizes = [8, 32], strides = [1, 1]} : vector<8x96xf32> to vector<8x32xf32>
    %190 = vector.extract_strided_slice %188 {offsets = [0, 0], sizes = [8, 32], strides = [1, 1]} : vector<8x96xf32> to vector<8x32xf32>
    %191 = arith.addf %189, %190 : vector<8x32xf32>
    %192 = arith.negf %191 : vector<8x32xf32>
    %193 = math.exp %192 : vector<8x32xf32>
    %cst_54 = arith.constant 1.000000e+00 : f32
    %194 = vector.broadcast %cst_54 : f32 to vector<8x32xf32>
    %195 = arith.addf %194, %193 : vector<8x32xf32>
    %196 = arith.divf %194, %195 : vector<8x32xf32>
    %197 = vector.extract_strided_slice %186 {offsets = [0, 32], sizes = [8, 32], strides = [1, 1]} : vector<8x96xf32> to vector<8x32xf32>
    %198 = vector.extract_strided_slice %188 {offsets = [0, 32], sizes = [8, 32], strides = [1, 1]} : vector<8x96xf32> to vector<8x32xf32>
    %199 = arith.addf %197, %198 : vector<8x32xf32>
    %200 = arith.negf %199 : vector<8x32xf32>
    %201 = math.exp %200 : vector<8x32xf32>
    %cst_55 = arith.constant 1.000000e+00 : f32
    %202 = vector.broadcast %cst_55 : f32 to vector<8x32xf32>
    %203 = arith.addf %202, %201 : vector<8x32xf32>
    %204 = arith.divf %202, %203 : vector<8x32xf32>
    %205 = vector.extract_strided_slice %186 {offsets = [0, 64], sizes = [8, 32], strides = [1, 1]} : vector<8x96xf32> to vector<8x32xf32>
    %206 = vector.extract_strided_slice %188 {offsets = [0, 64], sizes = [8, 32], strides = [1, 1]} : vector<8x96xf32> to vector<8x32xf32>
    %207 = arith.addf %206, %17 : vector<8x32xf32>
    %208 = arith.mulf %196, %207 : vector<8x32xf32>
    %209 = arith.addf %205, %208 : vector<8x32xf32>
    %210 = math.tanh %209 : vector<8x32xf32>
    %cst_56 = arith.constant 1.000000e+00 : f32
    %211 = vector.broadcast %cst_56 : f32 to vector<8x32xf32>
    %212 = arith.subf %211, %204 : vector<8x32xf32>
    %213 = arith.mulf %212, %210 : vector<8x32xf32>
    %214 = arith.mulf %204, %26 : vector<8x32xf32>
    %215 = arith.addf %213, %214 : vector<8x32xf32>
    %c0_i32 = arith.constant 0 : i32
    %216 = vector.broadcast %c0_i32 : i32 to vector<8x1xi32>
    %217 = arith.cmpi sgt, %23, %216 : vector<8x1xi32>
    %cst_57 = arith.constant 0.000000e+00 : f32
    %218 = vector.shape_cast %217 : vector<8x1xi1> to vector<8x1xi1>
    %219 = vector.broadcast %218 : vector<8x1xi1> to vector<8x32xi1>
    %220 = vector.broadcast %cst_57 : f32 to vector<8x32xf32>
    %221 = arith.select %219, %215, %220 : vector<8x32xi1>, vector<8x32xf32>
    %222 = vector.extract_strided_slice %22 {offsets = [24, 0], sizes = [8, 96], strides = [1, 1]} : vector<64x96xf32> to vector<8x96xf32>
    %223 = arith.truncf %149 : vector<8x32xf32> to vector<8x32xbf16>
    %cst_58 = arith.constant dense<0.000000e+00> : vector<8x96xf32>
    %224 = tpu.matmul %223, %1, %cst_58 {dimension_numbers = #tpu.dot_dimension_numbers<[1], [0], [0], [1], [0, 0, 1, 1], [], []>} : vector<8x32xbf16>, vector<32x96xbf16>, vector<8x96xf32> -> vector<8x96xf32>
    %225 = vector.extract_strided_slice %222 {offsets = [0, 0], sizes = [8, 32], strides = [1, 1]} : vector<8x96xf32> to vector<8x32xf32>
    %226 = vector.extract_strided_slice %224 {offsets = [0, 0], sizes = [8, 32], strides = [1, 1]} : vector<8x96xf32> to vector<8x32xf32>
    %227 = arith.addf %225, %226 : vector<8x32xf32>
    %228 = arith.negf %227 : vector<8x32xf32>
    %229 = math.exp %228 : vector<8x32xf32>
    %cst_59 = arith.constant 1.000000e+00 : f32
    %230 = vector.broadcast %cst_59 : f32 to vector<8x32xf32>
    %231 = arith.addf %230, %229 : vector<8x32xf32>
    %232 = arith.divf %230, %231 : vector<8x32xf32>
    %233 = vector.extract_strided_slice %222 {offsets = [0, 32], sizes = [8, 32], strides = [1, 1]} : vector<8x96xf32> to vector<8x32xf32>
    %234 = vector.extract_strided_slice %224 {offsets = [0, 32], sizes = [8, 32], strides = [1, 1]} : vector<8x96xf32> to vector<8x32xf32>
    %235 = arith.addf %233, %234 : vector<8x32xf32>
    %236 = arith.negf %235 : vector<8x32xf32>
    %237 = math.exp %236 : vector<8x32xf32>
    %cst_60 = arith.constant 1.000000e+00 : f32
    %238 = vector.broadcast %cst_60 : f32 to vector<8x32xf32>
    %239 = arith.addf %238, %237 : vector<8x32xf32>
    %240 = arith.divf %238, %239 : vector<8x32xf32>
    %241 = vector.extract_strided_slice %222 {offsets = [0, 64], sizes = [8, 32], strides = [1, 1]} : vector<8x96xf32> to vector<8x32xf32>
    %242 = vector.extract_strided_slice %224 {offsets = [0, 64], sizes = [8, 32], strides = [1, 1]} : vector<8x96xf32> to vector<8x32xf32>
    %243 = arith.addf %242, %5 : vector<8x32xf32>
    %244 = arith.mulf %232, %243 : vector<8x32xf32>
    %245 = arith.addf %241, %244 : vector<8x32xf32>
    %246 = math.tanh %245 : vector<8x32xf32>
    %cst_61 = arith.constant 1.000000e+00 : f32
    %247 = vector.broadcast %cst_61 : f32 to vector<8x32xf32>
    %248 = arith.subf %247, %240 : vector<8x32xf32>
    %249 = arith.mulf %248, %246 : vector<8x32xf32>
    %250 = arith.mulf %240, %149 : vector<8x32xf32>
    %251 = arith.addf %249, %250 : vector<8x32xf32>
    %252 = arith.truncf %149 : vector<8x32xf32> to vector<8x32xbf16>
    %cst_62 = arith.constant dense<0.000000e+00> : vector<8x96xf32>
    %253 = tpu.matmul %252, %6, %cst_62 {dimension_numbers = #tpu.dot_dimension_numbers<[1], [0], [0], [1], [0, 0, 1, 1], [], []>} : vector<8x32xbf16>, vector<32x96xbf16>, vector<8x96xf32> -> vector<8x96xf32>
    %254 = vector.broadcast %8 : vector<1x96xf32> to vector<8x96xf32>
    %255 = arith.addf %253, %254 : vector<8x96xf32>
    %256 = arith.truncf %182 : vector<8x32xf32> to vector<8x32xbf16>
    %cst_63 = arith.constant dense<0.000000e+00> : vector<8x96xf32>
    %257 = tpu.matmul %256, %7, %cst_63 {dimension_numbers = #tpu.dot_dimension_numbers<[1], [0], [0], [1], [0, 0, 1, 1], [], []>} : vector<8x32xbf16>, vector<32x96xbf16>, vector<8x96xf32> -> vector<8x96xf32>
    %258 = vector.extract_strided_slice %255 {offsets = [0, 0], sizes = [8, 32], strides = [1, 1]} : vector<8x96xf32> to vector<8x32xf32>
    %259 = vector.extract_strided_slice %257 {offsets = [0, 0], sizes = [8, 32], strides = [1, 1]} : vector<8x96xf32> to vector<8x32xf32>
    %260 = arith.addf %258, %259 : vector<8x32xf32>
    %261 = arith.negf %260 : vector<8x32xf32>
    %262 = math.exp %261 : vector<8x32xf32>
    %cst_64 = arith.constant 1.000000e+00 : f32
    %263 = vector.broadcast %cst_64 : f32 to vector<8x32xf32>
    %264 = arith.addf %263, %262 : vector<8x32xf32>
    %265 = arith.divf %263, %264 : vector<8x32xf32>
    %266 = vector.extract_strided_slice %255 {offsets = [0, 32], sizes = [8, 32], strides = [1, 1]} : vector<8x96xf32> to vector<8x32xf32>
    %267 = vector.extract_strided_slice %257 {offsets = [0, 32], sizes = [8, 32], strides = [1, 1]} : vector<8x96xf32> to vector<8x32xf32>
    %268 = arith.addf %266, %267 : vector<8x32xf32>
    %269 = arith.negf %268 : vector<8x32xf32>
    %270 = math.exp %269 : vector<8x32xf32>
    %cst_65 = arith.constant 1.000000e+00 : f32
    %271 = vector.broadcast %cst_65 : f32 to vector<8x32xf32>
    %272 = arith.addf %271, %270 : vector<8x32xf32>
    %273 = arith.divf %271, %272 : vector<8x32xf32>
    %274 = vector.extract_strided_slice %255 {offsets = [0, 64], sizes = [8, 32], strides = [1, 1]} : vector<8x96xf32> to vector<8x32xf32>
    %275 = vector.extract_strided_slice %257 {offsets = [0, 64], sizes = [8, 32], strides = [1, 1]} : vector<8x96xf32> to vector<8x32xf32>
    %276 = arith.addf %275, %11 : vector<8x32xf32>
    %277 = arith.mulf %265, %276 : vector<8x32xf32>
    %278 = arith.addf %274, %277 : vector<8x32xf32>
    %279 = math.tanh %278 : vector<8x32xf32>
    %cst_66 = arith.constant 1.000000e+00 : f32
    %280 = vector.broadcast %cst_66 : f32 to vector<8x32xf32>
    %281 = arith.subf %280, %273 : vector<8x32xf32>
    %282 = arith.mulf %281, %279 : vector<8x32xf32>
    %283 = arith.mulf %273, %182 : vector<8x32xf32>
    %284 = arith.addf %282, %283 : vector<8x32xf32>
    %285 = arith.truncf %182 : vector<8x32xf32> to vector<8x32xbf16>
    %cst_67 = arith.constant dense<0.000000e+00> : vector<8x96xf32>
    %286 = tpu.matmul %285, %12, %cst_67 {dimension_numbers = #tpu.dot_dimension_numbers<[1], [0], [0], [1], [0, 0, 1, 1], [], []>} : vector<8x32xbf16>, vector<32x96xbf16>, vector<8x96xf32> -> vector<8x96xf32>
    %287 = vector.broadcast %14 : vector<1x96xf32> to vector<8x96xf32>
    %288 = arith.addf %286, %287 : vector<8x96xf32>
    %289 = arith.truncf %215 : vector<8x32xf32> to vector<8x32xbf16>
    %cst_68 = arith.constant dense<0.000000e+00> : vector<8x96xf32>
    %290 = tpu.matmul %289, %13, %cst_68 {dimension_numbers = #tpu.dot_dimension_numbers<[1], [0], [0], [1], [0, 0, 1, 1], [], []>} : vector<8x32xbf16>, vector<32x96xbf16>, vector<8x96xf32> -> vector<8x96xf32>
    %291 = vector.extract_strided_slice %288 {offsets = [0, 0], sizes = [8, 32], strides = [1, 1]} : vector<8x96xf32> to vector<8x32xf32>
    %292 = vector.extract_strided_slice %290 {offsets = [0, 0], sizes = [8, 32], strides = [1, 1]} : vector<8x96xf32> to vector<8x32xf32>
    %293 = arith.addf %291, %292 : vector<8x32xf32>
    %294 = arith.negf %293 : vector<8x32xf32>
    %295 = math.exp %294 : vector<8x32xf32>
    %cst_69 = arith.constant 1.000000e+00 : f32
    %296 = vector.broadcast %cst_69 : f32 to vector<8x32xf32>
    %297 = arith.addf %296, %295 : vector<8x32xf32>
    %298 = arith.divf %296, %297 : vector<8x32xf32>
    %299 = vector.extract_strided_slice %288 {offsets = [0, 32], sizes = [8, 32], strides = [1, 1]} : vector<8x96xf32> to vector<8x32xf32>
    %300 = vector.extract_strided_slice %290 {offsets = [0, 32], sizes = [8, 32], strides = [1, 1]} : vector<8x96xf32> to vector<8x32xf32>
    %301 = arith.addf %299, %300 : vector<8x32xf32>
    %302 = arith.negf %301 : vector<8x32xf32>
    %303 = math.exp %302 : vector<8x32xf32>
    %cst_70 = arith.constant 1.000000e+00 : f32
    %304 = vector.broadcast %cst_70 : f32 to vector<8x32xf32>
    %305 = arith.addf %304, %303 : vector<8x32xf32>
    %306 = arith.divf %304, %305 : vector<8x32xf32>
    %307 = vector.extract_strided_slice %288 {offsets = [0, 64], sizes = [8, 32], strides = [1, 1]} : vector<8x96xf32> to vector<8x32xf32>
    %308 = vector.extract_strided_slice %290 {offsets = [0, 64], sizes = [8, 32], strides = [1, 1]} : vector<8x96xf32> to vector<8x32xf32>
    %309 = arith.addf %308, %17 : vector<8x32xf32>
    %310 = arith.mulf %298, %309 : vector<8x32xf32>
    %311 = arith.addf %307, %310 : vector<8x32xf32>
    %312 = math.tanh %311 : vector<8x32xf32>
    %cst_71 = arith.constant 1.000000e+00 : f32
    %313 = vector.broadcast %cst_71 : f32 to vector<8x32xf32>
    %314 = arith.subf %313, %306 : vector<8x32xf32>
    %315 = arith.mulf %314, %312 : vector<8x32xf32>
    %316 = arith.mulf %306, %215 : vector<8x32xf32>
    %317 = arith.addf %315, %316 : vector<8x32xf32>
    %c1_i32 = arith.constant 1 : i32
    %318 = vector.broadcast %c1_i32 : i32 to vector<8x1xi32>
    %319 = arith.cmpi sgt, %23, %318 : vector<8x1xi32>
    %cst_72 = arith.constant 0.000000e+00 : f32
    %320 = vector.shape_cast %319 : vector<8x1xi1> to vector<8x1xi1>
    %321 = vector.broadcast %320 : vector<8x1xi1> to vector<8x32xi1>
    %322 = vector.broadcast %cst_72 : f32 to vector<8x32xf32>
    %323 = arith.select %321, %317, %322 : vector<8x32xi1>, vector<8x32xf32>
    %324 = vector.extract_strided_slice %22 {offsets = [32, 0], sizes = [8, 96], strides = [1, 1]} : vector<64x96xf32> to vector<8x96xf32>
    %325 = arith.truncf %251 : vector<8x32xf32> to vector<8x32xbf16>
    %cst_73 = arith.constant dense<0.000000e+00> : vector<8x96xf32>
    %326 = tpu.matmul %325, %1, %cst_73 {dimension_numbers = #tpu.dot_dimension_numbers<[1], [0], [0], [1], [0, 0, 1, 1], [], []>} : vector<8x32xbf16>, vector<32x96xbf16>, vector<8x96xf32> -> vector<8x96xf32>
    %327 = vector.extract_strided_slice %324 {offsets = [0, 0], sizes = [8, 32], strides = [1, 1]} : vector<8x96xf32> to vector<8x32xf32>
    %328 = vector.extract_strided_slice %326 {offsets = [0, 0], sizes = [8, 32], strides = [1, 1]} : vector<8x96xf32> to vector<8x32xf32>
    %329 = arith.addf %327, %328 : vector<8x32xf32>
    %330 = arith.negf %329 : vector<8x32xf32>
    %331 = math.exp %330 : vector<8x32xf32>
    %cst_74 = arith.constant 1.000000e+00 : f32
    %332 = vector.broadcast %cst_74 : f32 to vector<8x32xf32>
    %333 = arith.addf %332, %331 : vector<8x32xf32>
    %334 = arith.divf %332, %333 : vector<8x32xf32>
    %335 = vector.extract_strided_slice %324 {offsets = [0, 32], sizes = [8, 32], strides = [1, 1]} : vector<8x96xf32> to vector<8x32xf32>
    %336 = vector.extract_strided_slice %326 {offsets = [0, 32], sizes = [8, 32], strides = [1, 1]} : vector<8x96xf32> to vector<8x32xf32>
    %337 = arith.addf %335, %336 : vector<8x32xf32>
    %338 = arith.negf %337 : vector<8x32xf32>
    %339 = math.exp %338 : vector<8x32xf32>
    %cst_75 = arith.constant 1.000000e+00 : f32
    %340 = vector.broadcast %cst_75 : f32 to vector<8x32xf32>
    %341 = arith.addf %340, %339 : vector<8x32xf32>
    %342 = arith.divf %340, %341 : vector<8x32xf32>
    %343 = vector.extract_strided_slice %324 {offsets = [0, 64], sizes = [8, 32], strides = [1, 1]} : vector<8x96xf32> to vector<8x32xf32>
    %344 = vector.extract_strided_slice %326 {offsets = [0, 64], sizes = [8, 32], strides = [1, 1]} : vector<8x96xf32> to vector<8x32xf32>
    %345 = arith.addf %344, %5 : vector<8x32xf32>
    %346 = arith.mulf %334, %345 : vector<8x32xf32>
    %347 = arith.addf %343, %346 : vector<8x32xf32>
    %348 = math.tanh %347 : vector<8x32xf32>
    %cst_76 = arith.constant 1.000000e+00 : f32
    %349 = vector.broadcast %cst_76 : f32 to vector<8x32xf32>
    %350 = arith.subf %349, %342 : vector<8x32xf32>
    %351 = arith.mulf %350, %348 : vector<8x32xf32>
    %352 = arith.mulf %342, %251 : vector<8x32xf32>
    %353 = arith.addf %351, %352 : vector<8x32xf32>
    %354 = arith.truncf %251 : vector<8x32xf32> to vector<8x32xbf16>
    %cst_77 = arith.constant dense<0.000000e+00> : vector<8x96xf32>
    %355 = tpu.matmul %354, %6, %cst_77 {dimension_numbers = #tpu.dot_dimension_numbers<[1], [0], [0], [1], [0, 0, 1, 1], [], []>} : vector<8x32xbf16>, vector<32x96xbf16>, vector<8x96xf32> -> vector<8x96xf32>
    %356 = vector.broadcast %8 : vector<1x96xf32> to vector<8x96xf32>
    %357 = arith.addf %355, %356 : vector<8x96xf32>
    %358 = arith.truncf %284 : vector<8x32xf32> to vector<8x32xbf16>
    %cst_78 = arith.constant dense<0.000000e+00> : vector<8x96xf32>
    %359 = tpu.matmul %358, %7, %cst_78 {dimension_numbers = #tpu.dot_dimension_numbers<[1], [0], [0], [1], [0, 0, 1, 1], [], []>} : vector<8x32xbf16>, vector<32x96xbf16>, vector<8x96xf32> -> vector<8x96xf32>
    %360 = vector.extract_strided_slice %357 {offsets = [0, 0], sizes = [8, 32], strides = [1, 1]} : vector<8x96xf32> to vector<8x32xf32>
    %361 = vector.extract_strided_slice %359 {offsets = [0, 0], sizes = [8, 32], strides = [1, 1]} : vector<8x96xf32> to vector<8x32xf32>
    %362 = arith.addf %360, %361 : vector<8x32xf32>
    %363 = arith.negf %362 : vector<8x32xf32>
    %364 = math.exp %363 : vector<8x32xf32>
    %cst_79 = arith.constant 1.000000e+00 : f32
    %365 = vector.broadcast %cst_79 : f32 to vector<8x32xf32>
    %366 = arith.addf %365, %364 : vector<8x32xf32>
    %367 = arith.divf %365, %366 : vector<8x32xf32>
    %368 = vector.extract_strided_slice %357 {offsets = [0, 32], sizes = [8, 32], strides = [1, 1]} : vector<8x96xf32> to vector<8x32xf32>
    %369 = vector.extract_strided_slice %359 {offsets = [0, 32], sizes = [8, 32], strides = [1, 1]} : vector<8x96xf32> to vector<8x32xf32>
    %370 = arith.addf %368, %369 : vector<8x32xf32>
    %371 = arith.negf %370 : vector<8x32xf32>
    %372 = math.exp %371 : vector<8x32xf32>
    %cst_80 = arith.constant 1.000000e+00 : f32
    %373 = vector.broadcast %cst_80 : f32 to vector<8x32xf32>
    %374 = arith.addf %373, %372 : vector<8x32xf32>
    %375 = arith.divf %373, %374 : vector<8x32xf32>
    %376 = vector.extract_strided_slice %357 {offsets = [0, 64], sizes = [8, 32], strides = [1, 1]} : vector<8x96xf32> to vector<8x32xf32>
    %377 = vector.extract_strided_slice %359 {offsets = [0, 64], sizes = [8, 32], strides = [1, 1]} : vector<8x96xf32> to vector<8x32xf32>
    %378 = arith.addf %377, %11 : vector<8x32xf32>
    %379 = arith.mulf %367, %378 : vector<8x32xf32>
    %380 = arith.addf %376, %379 : vector<8x32xf32>
    %381 = math.tanh %380 : vector<8x32xf32>
    %cst_81 = arith.constant 1.000000e+00 : f32
    %382 = vector.broadcast %cst_81 : f32 to vector<8x32xf32>
    %383 = arith.subf %382, %375 : vector<8x32xf32>
    %384 = arith.mulf %383, %381 : vector<8x32xf32>
    %385 = arith.mulf %375, %284 : vector<8x32xf32>
    %386 = arith.addf %384, %385 : vector<8x32xf32>
    %387 = arith.truncf %284 : vector<8x32xf32> to vector<8x32xbf16>
    %cst_82 = arith.constant dense<0.000000e+00> : vector<8x96xf32>
    %388 = tpu.matmul %387, %12, %cst_82 {dimension_numbers = #tpu.dot_dimension_numbers<[1], [0], [0], [1], [0, 0, 1, 1], [], []>} : vector<8x32xbf16>, vector<32x96xbf16>, vector<8x96xf32> -> vector<8x96xf32>
    %389 = vector.broadcast %14 : vector<1x96xf32> to vector<8x96xf32>
    %390 = arith.addf %388, %389 : vector<8x96xf32>
    %391 = arith.truncf %317 : vector<8x32xf32> to vector<8x32xbf16>
    %cst_83 = arith.constant dense<0.000000e+00> : vector<8x96xf32>
    %392 = tpu.matmul %391, %13, %cst_83 {dimension_numbers = #tpu.dot_dimension_numbers<[1], [0], [0], [1], [0, 0, 1, 1], [], []>} : vector<8x32xbf16>, vector<32x96xbf16>, vector<8x96xf32> -> vector<8x96xf32>
    %393 = vector.extract_strided_slice %390 {offsets = [0, 0], sizes = [8, 32], strides = [1, 1]} : vector<8x96xf32> to vector<8x32xf32>
    %394 = vector.extract_strided_slice %392 {offsets = [0, 0], sizes = [8, 32], strides = [1, 1]} : vector<8x96xf32> to vector<8x32xf32>
    %395 = arith.addf %393, %394 : vector<8x32xf32>
    %396 = arith.negf %395 : vector<8x32xf32>
    %397 = math.exp %396 : vector<8x32xf32>
    %cst_84 = arith.constant 1.000000e+00 : f32
    %398 = vector.broadcast %cst_84 : f32 to vector<8x32xf32>
    %399 = arith.addf %398, %397 : vector<8x32xf32>
    %400 = arith.divf %398, %399 : vector<8x32xf32>
    %401 = vector.extract_strided_slice %390 {offsets = [0, 32], sizes = [8, 32], strides = [1, 1]} : vector<8x96xf32> to vector<8x32xf32>
    %402 = vector.extract_strided_slice %392 {offsets = [0, 32], sizes = [8, 32], strides = [1, 1]} : vector<8x96xf32> to vector<8x32xf32>
    %403 = arith.addf %401, %402 : vector<8x32xf32>
    %404 = arith.negf %403 : vector<8x32xf32>
    %405 = math.exp %404 : vector<8x32xf32>
    %cst_85 = arith.constant 1.000000e+00 : f32
    %406 = vector.broadcast %cst_85 : f32 to vector<8x32xf32>
    %407 = arith.addf %406, %405 : vector<8x32xf32>
    %408 = arith.divf %406, %407 : vector<8x32xf32>
    %409 = vector.extract_strided_slice %390 {offsets = [0, 64], sizes = [8, 32], strides = [1, 1]} : vector<8x96xf32> to vector<8x32xf32>
    %410 = vector.extract_strided_slice %392 {offsets = [0, 64], sizes = [8, 32], strides = [1, 1]} : vector<8x96xf32> to vector<8x32xf32>
    %411 = arith.addf %410, %17 : vector<8x32xf32>
    %412 = arith.mulf %400, %411 : vector<8x32xf32>
    %413 = arith.addf %409, %412 : vector<8x32xf32>
    %414 = math.tanh %413 : vector<8x32xf32>
    %cst_86 = arith.constant 1.000000e+00 : f32
    %415 = vector.broadcast %cst_86 : f32 to vector<8x32xf32>
    %416 = arith.subf %415, %408 : vector<8x32xf32>
    %417 = arith.mulf %416, %414 : vector<8x32xf32>
    %418 = arith.mulf %408, %317 : vector<8x32xf32>
    %419 = arith.addf %417, %418 : vector<8x32xf32>
    %c2_i32 = arith.constant 2 : i32
    %420 = vector.broadcast %c2_i32 : i32 to vector<8x1xi32>
    %421 = arith.cmpi sgt, %23, %420 : vector<8x1xi32>
    %cst_87 = arith.constant 0.000000e+00 : f32
    %422 = vector.shape_cast %421 : vector<8x1xi1> to vector<8x1xi1>
    %423 = vector.broadcast %422 : vector<8x1xi1> to vector<8x32xi1>
    %424 = vector.broadcast %cst_87 : f32 to vector<8x32xf32>
    %425 = arith.select %423, %419, %424 : vector<8x32xi1>, vector<8x32xf32>
    %426 = vector.extract_strided_slice %22 {offsets = [40, 0], sizes = [8, 96], strides = [1, 1]} : vector<64x96xf32> to vector<8x96xf32>
    %427 = arith.truncf %353 : vector<8x32xf32> to vector<8x32xbf16>
    %cst_88 = arith.constant dense<0.000000e+00> : vector<8x96xf32>
    %428 = tpu.matmul %427, %1, %cst_88 {dimension_numbers = #tpu.dot_dimension_numbers<[1], [0], [0], [1], [0, 0, 1, 1], [], []>} : vector<8x32xbf16>, vector<32x96xbf16>, vector<8x96xf32> -> vector<8x96xf32>
    %429 = vector.extract_strided_slice %426 {offsets = [0, 0], sizes = [8, 32], strides = [1, 1]} : vector<8x96xf32> to vector<8x32xf32>
    %430 = vector.extract_strided_slice %428 {offsets = [0, 0], sizes = [8, 32], strides = [1, 1]} : vector<8x96xf32> to vector<8x32xf32>
    %431 = arith.addf %429, %430 : vector<8x32xf32>
    %432 = arith.negf %431 : vector<8x32xf32>
    %433 = math.exp %432 : vector<8x32xf32>
    %cst_89 = arith.constant 1.000000e+00 : f32
    %434 = vector.broadcast %cst_89 : f32 to vector<8x32xf32>
    %435 = arith.addf %434, %433 : vector<8x32xf32>
    %436 = arith.divf %434, %435 : vector<8x32xf32>
    %437 = vector.extract_strided_slice %426 {offsets = [0, 32], sizes = [8, 32], strides = [1, 1]} : vector<8x96xf32> to vector<8x32xf32>
    %438 = vector.extract_strided_slice %428 {offsets = [0, 32], sizes = [8, 32], strides = [1, 1]} : vector<8x96xf32> to vector<8x32xf32>
    %439 = arith.addf %437, %438 : vector<8x32xf32>
    %440 = arith.negf %439 : vector<8x32xf32>
    %441 = math.exp %440 : vector<8x32xf32>
    %cst_90 = arith.constant 1.000000e+00 : f32
    %442 = vector.broadcast %cst_90 : f32 to vector<8x32xf32>
    %443 = arith.addf %442, %441 : vector<8x32xf32>
    %444 = arith.divf %442, %443 : vector<8x32xf32>
    %445 = vector.extract_strided_slice %426 {offsets = [0, 64], sizes = [8, 32], strides = [1, 1]} : vector<8x96xf32> to vector<8x32xf32>
    %446 = vector.extract_strided_slice %428 {offsets = [0, 64], sizes = [8, 32], strides = [1, 1]} : vector<8x96xf32> to vector<8x32xf32>
    %447 = arith.addf %446, %5 : vector<8x32xf32>
    %448 = arith.mulf %436, %447 : vector<8x32xf32>
    %449 = arith.addf %445, %448 : vector<8x32xf32>
    %450 = math.tanh %449 : vector<8x32xf32>
    %cst_91 = arith.constant 1.000000e+00 : f32
    %451 = vector.broadcast %cst_91 : f32 to vector<8x32xf32>
    %452 = arith.subf %451, %444 : vector<8x32xf32>
    %453 = arith.mulf %452, %450 : vector<8x32xf32>
    %454 = arith.mulf %444, %353 : vector<8x32xf32>
    %455 = arith.addf %453, %454 : vector<8x32xf32>
    %456 = arith.truncf %353 : vector<8x32xf32> to vector<8x32xbf16>
    %cst_92 = arith.constant dense<0.000000e+00> : vector<8x96xf32>
    %457 = tpu.matmul %456, %6, %cst_92 {dimension_numbers = #tpu.dot_dimension_numbers<[1], [0], [0], [1], [0, 0, 1, 1], [], []>} : vector<8x32xbf16>, vector<32x96xbf16>, vector<8x96xf32> -> vector<8x96xf32>
    %458 = vector.broadcast %8 : vector<1x96xf32> to vector<8x96xf32>
    %459 = arith.addf %457, %458 : vector<8x96xf32>
    %460 = arith.truncf %386 : vector<8x32xf32> to vector<8x32xbf16>
    %cst_93 = arith.constant dense<0.000000e+00> : vector<8x96xf32>
    %461 = tpu.matmul %460, %7, %cst_93 {dimension_numbers = #tpu.dot_dimension_numbers<[1], [0], [0], [1], [0, 0, 1, 1], [], []>} : vector<8x32xbf16>, vector<32x96xbf16>, vector<8x96xf32> -> vector<8x96xf32>
    %462 = vector.extract_strided_slice %459 {offsets = [0, 0], sizes = [8, 32], strides = [1, 1]} : vector<8x96xf32> to vector<8x32xf32>
    %463 = vector.extract_strided_slice %461 {offsets = [0, 0], sizes = [8, 32], strides = [1, 1]} : vector<8x96xf32> to vector<8x32xf32>
    %464 = arith.addf %462, %463 : vector<8x32xf32>
    %465 = arith.negf %464 : vector<8x32xf32>
    %466 = math.exp %465 : vector<8x32xf32>
    %cst_94 = arith.constant 1.000000e+00 : f32
    %467 = vector.broadcast %cst_94 : f32 to vector<8x32xf32>
    %468 = arith.addf %467, %466 : vector<8x32xf32>
    %469 = arith.divf %467, %468 : vector<8x32xf32>
    %470 = vector.extract_strided_slice %459 {offsets = [0, 32], sizes = [8, 32], strides = [1, 1]} : vector<8x96xf32> to vector<8x32xf32>
    %471 = vector.extract_strided_slice %461 {offsets = [0, 32], sizes = [8, 32], strides = [1, 1]} : vector<8x96xf32> to vector<8x32xf32>
    %472 = arith.addf %470, %471 : vector<8x32xf32>
    %473 = arith.negf %472 : vector<8x32xf32>
    %474 = math.exp %473 : vector<8x32xf32>
    %cst_95 = arith.constant 1.000000e+00 : f32
    %475 = vector.broadcast %cst_95 : f32 to vector<8x32xf32>
    %476 = arith.addf %475, %474 : vector<8x32xf32>
    %477 = arith.divf %475, %476 : vector<8x32xf32>
    %478 = vector.extract_strided_slice %459 {offsets = [0, 64], sizes = [8, 32], strides = [1, 1]} : vector<8x96xf32> to vector<8x32xf32>
    %479 = vector.extract_strided_slice %461 {offsets = [0, 64], sizes = [8, 32], strides = [1, 1]} : vector<8x96xf32> to vector<8x32xf32>
    %480 = arith.addf %479, %11 : vector<8x32xf32>
    %481 = arith.mulf %469, %480 : vector<8x32xf32>
    %482 = arith.addf %478, %481 : vector<8x32xf32>
    %483 = math.tanh %482 : vector<8x32xf32>
    %cst_96 = arith.constant 1.000000e+00 : f32
    %484 = vector.broadcast %cst_96 : f32 to vector<8x32xf32>
    %485 = arith.subf %484, %477 : vector<8x32xf32>
    %486 = arith.mulf %485, %483 : vector<8x32xf32>
    %487 = arith.mulf %477, %386 : vector<8x32xf32>
    %488 = arith.addf %486, %487 : vector<8x32xf32>
    %489 = arith.truncf %386 : vector<8x32xf32> to vector<8x32xbf16>
    %cst_97 = arith.constant dense<0.000000e+00> : vector<8x96xf32>
    %490 = tpu.matmul %489, %12, %cst_97 {dimension_numbers = #tpu.dot_dimension_numbers<[1], [0], [0], [1], [0, 0, 1, 1], [], []>} : vector<8x32xbf16>, vector<32x96xbf16>, vector<8x96xf32> -> vector<8x96xf32>
    %491 = vector.broadcast %14 : vector<1x96xf32> to vector<8x96xf32>
    %492 = arith.addf %490, %491 : vector<8x96xf32>
    %493 = arith.truncf %419 : vector<8x32xf32> to vector<8x32xbf16>
    %cst_98 = arith.constant dense<0.000000e+00> : vector<8x96xf32>
    %494 = tpu.matmul %493, %13, %cst_98 {dimension_numbers = #tpu.dot_dimension_numbers<[1], [0], [0], [1], [0, 0, 1, 1], [], []>} : vector<8x32xbf16>, vector<32x96xbf16>, vector<8x96xf32> -> vector<8x96xf32>
    %495 = vector.extract_strided_slice %492 {offsets = [0, 0], sizes = [8, 32], strides = [1, 1]} : vector<8x96xf32> to vector<8x32xf32>
    %496 = vector.extract_strided_slice %494 {offsets = [0, 0], sizes = [8, 32], strides = [1, 1]} : vector<8x96xf32> to vector<8x32xf32>
    %497 = arith.addf %495, %496 : vector<8x32xf32>
    %498 = arith.negf %497 : vector<8x32xf32>
    %499 = math.exp %498 : vector<8x32xf32>
    %cst_99 = arith.constant 1.000000e+00 : f32
    %500 = vector.broadcast %cst_99 : f32 to vector<8x32xf32>
    %501 = arith.addf %500, %499 : vector<8x32xf32>
    %502 = arith.divf %500, %501 : vector<8x32xf32>
    %503 = vector.extract_strided_slice %492 {offsets = [0, 32], sizes = [8, 32], strides = [1, 1]} : vector<8x96xf32> to vector<8x32xf32>
    %504 = vector.extract_strided_slice %494 {offsets = [0, 32], sizes = [8, 32], strides = [1, 1]} : vector<8x96xf32> to vector<8x32xf32>
    %505 = arith.addf %503, %504 : vector<8x32xf32>
    %506 = arith.negf %505 : vector<8x32xf32>
    %507 = math.exp %506 : vector<8x32xf32>
    %cst_100 = arith.constant 1.000000e+00 : f32
    %508 = vector.broadcast %cst_100 : f32 to vector<8x32xf32>
    %509 = arith.addf %508, %507 : vector<8x32xf32>
    %510 = arith.divf %508, %509 : vector<8x32xf32>
    %511 = vector.extract_strided_slice %492 {offsets = [0, 64], sizes = [8, 32], strides = [1, 1]} : vector<8x96xf32> to vector<8x32xf32>
    %512 = vector.extract_strided_slice %494 {offsets = [0, 64], sizes = [8, 32], strides = [1, 1]} : vector<8x96xf32> to vector<8x32xf32>
    %513 = arith.addf %512, %17 : vector<8x32xf32>
    %514 = arith.mulf %502, %513 : vector<8x32xf32>
    %515 = arith.addf %511, %514 : vector<8x32xf32>
    %516 = math.tanh %515 : vector<8x32xf32>
    %cst_101 = arith.constant 1.000000e+00 : f32
    %517 = vector.broadcast %cst_101 : f32 to vector<8x32xf32>
    %518 = arith.subf %517, %510 : vector<8x32xf32>
    %519 = arith.mulf %518, %516 : vector<8x32xf32>
    %520 = arith.mulf %510, %419 : vector<8x32xf32>
    %521 = arith.addf %519, %520 : vector<8x32xf32>
    %c3_i32 = arith.constant 3 : i32
    %522 = vector.broadcast %c3_i32 : i32 to vector<8x1xi32>
    %523 = arith.cmpi sgt, %23, %522 : vector<8x1xi32>
    %cst_102 = arith.constant 0.000000e+00 : f32
    %524 = vector.shape_cast %523 : vector<8x1xi1> to vector<8x1xi1>
    %525 = vector.broadcast %524 : vector<8x1xi1> to vector<8x32xi1>
    %526 = vector.broadcast %cst_102 : f32 to vector<8x32xf32>
    %527 = arith.select %525, %521, %526 : vector<8x32xi1>, vector<8x32xf32>
    %528 = vector.extract_strided_slice %22 {offsets = [48, 0], sizes = [8, 96], strides = [1, 1]} : vector<64x96xf32> to vector<8x96xf32>
    %529 = arith.truncf %455 : vector<8x32xf32> to vector<8x32xbf16>
    %cst_103 = arith.constant dense<0.000000e+00> : vector<8x96xf32>
    %530 = tpu.matmul %529, %1, %cst_103 {dimension_numbers = #tpu.dot_dimension_numbers<[1], [0], [0], [1], [0, 0, 1, 1], [], []>} : vector<8x32xbf16>, vector<32x96xbf16>, vector<8x96xf32> -> vector<8x96xf32>
    %531 = vector.extract_strided_slice %528 {offsets = [0, 0], sizes = [8, 32], strides = [1, 1]} : vector<8x96xf32> to vector<8x32xf32>
    %532 = vector.extract_strided_slice %530 {offsets = [0, 0], sizes = [8, 32], strides = [1, 1]} : vector<8x96xf32> to vector<8x32xf32>
    %533 = arith.addf %531, %532 : vector<8x32xf32>
    %534 = arith.negf %533 : vector<8x32xf32>
    %535 = math.exp %534 : vector<8x32xf32>
    %cst_104 = arith.constant 1.000000e+00 : f32
    %536 = vector.broadcast %cst_104 : f32 to vector<8x32xf32>
    %537 = arith.addf %536, %535 : vector<8x32xf32>
    %538 = arith.divf %536, %537 : vector<8x32xf32>
    %539 = vector.extract_strided_slice %528 {offsets = [0, 32], sizes = [8, 32], strides = [1, 1]} : vector<8x96xf32> to vector<8x32xf32>
    %540 = vector.extract_strided_slice %530 {offsets = [0, 32], sizes = [8, 32], strides = [1, 1]} : vector<8x96xf32> to vector<8x32xf32>
    %541 = arith.addf %539, %540 : vector<8x32xf32>
    %542 = arith.negf %541 : vector<8x32xf32>
    %543 = math.exp %542 : vector<8x32xf32>
    %cst_105 = arith.constant 1.000000e+00 : f32
    %544 = vector.broadcast %cst_105 : f32 to vector<8x32xf32>
    %545 = arith.addf %544, %543 : vector<8x32xf32>
    %546 = arith.divf %544, %545 : vector<8x32xf32>
    %547 = vector.extract_strided_slice %528 {offsets = [0, 64], sizes = [8, 32], strides = [1, 1]} : vector<8x96xf32> to vector<8x32xf32>
    %548 = vector.extract_strided_slice %530 {offsets = [0, 64], sizes = [8, 32], strides = [1, 1]} : vector<8x96xf32> to vector<8x32xf32>
    %549 = arith.addf %548, %5 : vector<8x32xf32>
    %550 = arith.mulf %538, %549 : vector<8x32xf32>
    %551 = arith.addf %547, %550 : vector<8x32xf32>
    %552 = math.tanh %551 : vector<8x32xf32>
    %cst_106 = arith.constant 1.000000e+00 : f32
    %553 = vector.broadcast %cst_106 : f32 to vector<8x32xf32>
    %554 = arith.subf %553, %546 : vector<8x32xf32>
    %555 = arith.mulf %554, %552 : vector<8x32xf32>
    %556 = arith.mulf %546, %455 : vector<8x32xf32>
    %557 = arith.addf %555, %556 : vector<8x32xf32>
    %558 = arith.truncf %455 : vector<8x32xf32> to vector<8x32xbf16>
    %cst_107 = arith.constant dense<0.000000e+00> : vector<8x96xf32>
    %559 = tpu.matmul %558, %6, %cst_107 {dimension_numbers = #tpu.dot_dimension_numbers<[1], [0], [0], [1], [0, 0, 1, 1], [], []>} : vector<8x32xbf16>, vector<32x96xbf16>, vector<8x96xf32> -> vector<8x96xf32>
    %560 = vector.broadcast %8 : vector<1x96xf32> to vector<8x96xf32>
    %561 = arith.addf %559, %560 : vector<8x96xf32>
    %562 = arith.truncf %488 : vector<8x32xf32> to vector<8x32xbf16>
    %cst_108 = arith.constant dense<0.000000e+00> : vector<8x96xf32>
    %563 = tpu.matmul %562, %7, %cst_108 {dimension_numbers = #tpu.dot_dimension_numbers<[1], [0], [0], [1], [0, 0, 1, 1], [], []>} : vector<8x32xbf16>, vector<32x96xbf16>, vector<8x96xf32> -> vector<8x96xf32>
    %564 = vector.extract_strided_slice %561 {offsets = [0, 0], sizes = [8, 32], strides = [1, 1]} : vector<8x96xf32> to vector<8x32xf32>
    %565 = vector.extract_strided_slice %563 {offsets = [0, 0], sizes = [8, 32], strides = [1, 1]} : vector<8x96xf32> to vector<8x32xf32>
    %566 = arith.addf %564, %565 : vector<8x32xf32>
    %567 = arith.negf %566 : vector<8x32xf32>
    %568 = math.exp %567 : vector<8x32xf32>
    %cst_109 = arith.constant 1.000000e+00 : f32
    %569 = vector.broadcast %cst_109 : f32 to vector<8x32xf32>
    %570 = arith.addf %569, %568 : vector<8x32xf32>
    %571 = arith.divf %569, %570 : vector<8x32xf32>
    %572 = vector.extract_strided_slice %561 {offsets = [0, 32], sizes = [8, 32], strides = [1, 1]} : vector<8x96xf32> to vector<8x32xf32>
    %573 = vector.extract_strided_slice %563 {offsets = [0, 32], sizes = [8, 32], strides = [1, 1]} : vector<8x96xf32> to vector<8x32xf32>
    %574 = arith.addf %572, %573 : vector<8x32xf32>
    %575 = arith.negf %574 : vector<8x32xf32>
    %576 = math.exp %575 : vector<8x32xf32>
    %cst_110 = arith.constant 1.000000e+00 : f32
    %577 = vector.broadcast %cst_110 : f32 to vector<8x32xf32>
    %578 = arith.addf %577, %576 : vector<8x32xf32>
    %579 = arith.divf %577, %578 : vector<8x32xf32>
    %580 = vector.extract_strided_slice %561 {offsets = [0, 64], sizes = [8, 32], strides = [1, 1]} : vector<8x96xf32> to vector<8x32xf32>
    %581 = vector.extract_strided_slice %563 {offsets = [0, 64], sizes = [8, 32], strides = [1, 1]} : vector<8x96xf32> to vector<8x32xf32>
    %582 = arith.addf %581, %11 : vector<8x32xf32>
    %583 = arith.mulf %571, %582 : vector<8x32xf32>
    %584 = arith.addf %580, %583 : vector<8x32xf32>
    %585 = math.tanh %584 : vector<8x32xf32>
    %cst_111 = arith.constant 1.000000e+00 : f32
    %586 = vector.broadcast %cst_111 : f32 to vector<8x32xf32>
    %587 = arith.subf %586, %579 : vector<8x32xf32>
    %588 = arith.mulf %587, %585 : vector<8x32xf32>
    %589 = arith.mulf %579, %488 : vector<8x32xf32>
    %590 = arith.addf %588, %589 : vector<8x32xf32>
    %591 = arith.truncf %488 : vector<8x32xf32> to vector<8x32xbf16>
    %cst_112 = arith.constant dense<0.000000e+00> : vector<8x96xf32>
    %592 = tpu.matmul %591, %12, %cst_112 {dimension_numbers = #tpu.dot_dimension_numbers<[1], [0], [0], [1], [0, 0, 1, 1], [], []>} : vector<8x32xbf16>, vector<32x96xbf16>, vector<8x96xf32> -> vector<8x96xf32>
    %593 = vector.broadcast %14 : vector<1x96xf32> to vector<8x96xf32>
    %594 = arith.addf %592, %593 : vector<8x96xf32>
    %595 = arith.truncf %521 : vector<8x32xf32> to vector<8x32xbf16>
    %cst_113 = arith.constant dense<0.000000e+00> : vector<8x96xf32>
    %596 = tpu.matmul %595, %13, %cst_113 {dimension_numbers = #tpu.dot_dimension_numbers<[1], [0], [0], [1], [0, 0, 1, 1], [], []>} : vector<8x32xbf16>, vector<32x96xbf16>, vector<8x96xf32> -> vector<8x96xf32>
    %597 = vector.extract_strided_slice %594 {offsets = [0, 0], sizes = [8, 32], strides = [1, 1]} : vector<8x96xf32> to vector<8x32xf32>
    %598 = vector.extract_strided_slice %596 {offsets = [0, 0], sizes = [8, 32], strides = [1, 1]} : vector<8x96xf32> to vector<8x32xf32>
    %599 = arith.addf %597, %598 : vector<8x32xf32>
    %600 = arith.negf %599 : vector<8x32xf32>
    %601 = math.exp %600 : vector<8x32xf32>
    %cst_114 = arith.constant 1.000000e+00 : f32
    %602 = vector.broadcast %cst_114 : f32 to vector<8x32xf32>
    %603 = arith.addf %602, %601 : vector<8x32xf32>
    %604 = arith.divf %602, %603 : vector<8x32xf32>
    %605 = vector.extract_strided_slice %594 {offsets = [0, 32], sizes = [8, 32], strides = [1, 1]} : vector<8x96xf32> to vector<8x32xf32>
    %606 = vector.extract_strided_slice %596 {offsets = [0, 32], sizes = [8, 32], strides = [1, 1]} : vector<8x96xf32> to vector<8x32xf32>
    %607 = arith.addf %605, %606 : vector<8x32xf32>
    %608 = arith.negf %607 : vector<8x32xf32>
    %609 = math.exp %608 : vector<8x32xf32>
    %cst_115 = arith.constant 1.000000e+00 : f32
    %610 = vector.broadcast %cst_115 : f32 to vector<8x32xf32>
    %611 = arith.addf %610, %609 : vector<8x32xf32>
    %612 = arith.divf %610, %611 : vector<8x32xf32>
    %613 = vector.extract_strided_slice %594 {offsets = [0, 64], sizes = [8, 32], strides = [1, 1]} : vector<8x96xf32> to vector<8x32xf32>
    %614 = vector.extract_strided_slice %596 {offsets = [0, 64], sizes = [8, 32], strides = [1, 1]} : vector<8x96xf32> to vector<8x32xf32>
    %615 = arith.addf %614, %17 : vector<8x32xf32>
    %616 = arith.mulf %604, %615 : vector<8x32xf32>
    %617 = arith.addf %613, %616 : vector<8x32xf32>
    %618 = math.tanh %617 : vector<8x32xf32>
    %cst_116 = arith.constant 1.000000e+00 : f32
    %619 = vector.broadcast %cst_116 : f32 to vector<8x32xf32>
    %620 = arith.subf %619, %612 : vector<8x32xf32>
    %621 = arith.mulf %620, %618 : vector<8x32xf32>
    %622 = arith.mulf %612, %521 : vector<8x32xf32>
    %623 = arith.addf %621, %622 : vector<8x32xf32>
    %c4_i32 = arith.constant 4 : i32
    %624 = vector.broadcast %c4_i32 : i32 to vector<8x1xi32>
    %625 = arith.cmpi sgt, %23, %624 : vector<8x1xi32>
    %cst_117 = arith.constant 0.000000e+00 : f32
    %626 = vector.shape_cast %625 : vector<8x1xi1> to vector<8x1xi1>
    %627 = vector.broadcast %626 : vector<8x1xi1> to vector<8x32xi1>
    %628 = vector.broadcast %cst_117 : f32 to vector<8x32xf32>
    %629 = arith.select %627, %623, %628 : vector<8x32xi1>, vector<8x32xf32>
    %630 = vector.extract_strided_slice %22 {offsets = [56, 0], sizes = [8, 96], strides = [1, 1]} : vector<64x96xf32> to vector<8x96xf32>
    %631 = arith.truncf %557 : vector<8x32xf32> to vector<8x32xbf16>
    %cst_118 = arith.constant dense<0.000000e+00> : vector<8x96xf32>
    %632 = tpu.matmul %631, %1, %cst_118 {dimension_numbers = #tpu.dot_dimension_numbers<[1], [0], [0], [1], [0, 0, 1, 1], [], []>} : vector<8x32xbf16>, vector<32x96xbf16>, vector<8x96xf32> -> vector<8x96xf32>
    %633 = vector.extract_strided_slice %630 {offsets = [0, 0], sizes = [8, 32], strides = [1, 1]} : vector<8x96xf32> to vector<8x32xf32>
    %634 = vector.extract_strided_slice %632 {offsets = [0, 0], sizes = [8, 32], strides = [1, 1]} : vector<8x96xf32> to vector<8x32xf32>
    %635 = arith.addf %633, %634 : vector<8x32xf32>
    %636 = arith.negf %635 : vector<8x32xf32>
    %637 = math.exp %636 : vector<8x32xf32>
    %cst_119 = arith.constant 1.000000e+00 : f32
    %638 = vector.broadcast %cst_119 : f32 to vector<8x32xf32>
    %639 = arith.addf %638, %637 : vector<8x32xf32>
    %640 = arith.divf %638, %639 : vector<8x32xf32>
    %641 = vector.extract_strided_slice %630 {offsets = [0, 32], sizes = [8, 32], strides = [1, 1]} : vector<8x96xf32> to vector<8x32xf32>
    %642 = vector.extract_strided_slice %632 {offsets = [0, 32], sizes = [8, 32], strides = [1, 1]} : vector<8x96xf32> to vector<8x32xf32>
    %643 = arith.addf %641, %642 : vector<8x32xf32>
    %644 = arith.negf %643 : vector<8x32xf32>
    %645 = math.exp %644 : vector<8x32xf32>
    %cst_120 = arith.constant 1.000000e+00 : f32
    %646 = vector.broadcast %cst_120 : f32 to vector<8x32xf32>
    %647 = arith.addf %646, %645 : vector<8x32xf32>
    %648 = arith.divf %646, %647 : vector<8x32xf32>
    %649 = vector.extract_strided_slice %630 {offsets = [0, 64], sizes = [8, 32], strides = [1, 1]} : vector<8x96xf32> to vector<8x32xf32>
    %650 = vector.extract_strided_slice %632 {offsets = [0, 64], sizes = [8, 32], strides = [1, 1]} : vector<8x96xf32> to vector<8x32xf32>
    %651 = arith.addf %650, %5 : vector<8x32xf32>
    %652 = arith.mulf %640, %651 : vector<8x32xf32>
    %653 = arith.addf %649, %652 : vector<8x32xf32>
    %654 = math.tanh %653 : vector<8x32xf32>
    %cst_121 = arith.constant 1.000000e+00 : f32
    %655 = vector.broadcast %cst_121 : f32 to vector<8x32xf32>
    %656 = arith.subf %655, %648 : vector<8x32xf32>
    %657 = arith.mulf %656, %654 : vector<8x32xf32>
    %658 = arith.mulf %648, %557 : vector<8x32xf32>
    %659 = arith.addf %657, %658 : vector<8x32xf32>
    %660 = arith.truncf %557 : vector<8x32xf32> to vector<8x32xbf16>
    %cst_122 = arith.constant dense<0.000000e+00> : vector<8x96xf32>
    %661 = tpu.matmul %660, %6, %cst_122 {dimension_numbers = #tpu.dot_dimension_numbers<[1], [0], [0], [1], [0, 0, 1, 1], [], []>} : vector<8x32xbf16>, vector<32x96xbf16>, vector<8x96xf32> -> vector<8x96xf32>
    %662 = vector.broadcast %8 : vector<1x96xf32> to vector<8x96xf32>
    %663 = arith.addf %661, %662 : vector<8x96xf32>
    %664 = arith.truncf %590 : vector<8x32xf32> to vector<8x32xbf16>
    %cst_123 = arith.constant dense<0.000000e+00> : vector<8x96xf32>
    %665 = tpu.matmul %664, %7, %cst_123 {dimension_numbers = #tpu.dot_dimension_numbers<[1], [0], [0], [1], [0, 0, 1, 1], [], []>} : vector<8x32xbf16>, vector<32x96xbf16>, vector<8x96xf32> -> vector<8x96xf32>
    %666 = vector.extract_strided_slice %663 {offsets = [0, 0], sizes = [8, 32], strides = [1, 1]} : vector<8x96xf32> to vector<8x32xf32>
    %667 = vector.extract_strided_slice %665 {offsets = [0, 0], sizes = [8, 32], strides = [1, 1]} : vector<8x96xf32> to vector<8x32xf32>
    %668 = arith.addf %666, %667 : vector<8x32xf32>
    %669 = arith.negf %668 : vector<8x32xf32>
    %670 = math.exp %669 : vector<8x32xf32>
    %cst_124 = arith.constant 1.000000e+00 : f32
    %671 = vector.broadcast %cst_124 : f32 to vector<8x32xf32>
    %672 = arith.addf %671, %670 : vector<8x32xf32>
    %673 = arith.divf %671, %672 : vector<8x32xf32>
    %674 = vector.extract_strided_slice %663 {offsets = [0, 32], sizes = [8, 32], strides = [1, 1]} : vector<8x96xf32> to vector<8x32xf32>
    %675 = vector.extract_strided_slice %665 {offsets = [0, 32], sizes = [8, 32], strides = [1, 1]} : vector<8x96xf32> to vector<8x32xf32>
    %676 = arith.addf %674, %675 : vector<8x32xf32>
    %677 = arith.negf %676 : vector<8x32xf32>
    %678 = math.exp %677 : vector<8x32xf32>
    %cst_125 = arith.constant 1.000000e+00 : f32
    %679 = vector.broadcast %cst_125 : f32 to vector<8x32xf32>
    %680 = arith.addf %679, %678 : vector<8x32xf32>
    %681 = arith.divf %679, %680 : vector<8x32xf32>
    %682 = vector.extract_strided_slice %663 {offsets = [0, 64], sizes = [8, 32], strides = [1, 1]} : vector<8x96xf32> to vector<8x32xf32>
    %683 = vector.extract_strided_slice %665 {offsets = [0, 64], sizes = [8, 32], strides = [1, 1]} : vector<8x96xf32> to vector<8x32xf32>
    %684 = arith.addf %683, %11 : vector<8x32xf32>
    %685 = arith.mulf %673, %684 : vector<8x32xf32>
    %686 = arith.addf %682, %685 : vector<8x32xf32>
    %687 = math.tanh %686 : vector<8x32xf32>
    %cst_126 = arith.constant 1.000000e+00 : f32
    %688 = vector.broadcast %cst_126 : f32 to vector<8x32xf32>
    %689 = arith.subf %688, %681 : vector<8x32xf32>
    %690 = arith.mulf %689, %687 : vector<8x32xf32>
    %691 = arith.mulf %681, %590 : vector<8x32xf32>
    %692 = arith.addf %690, %691 : vector<8x32xf32>
    %693 = arith.truncf %590 : vector<8x32xf32> to vector<8x32xbf16>
    %cst_127 = arith.constant dense<0.000000e+00> : vector<8x96xf32>
    %694 = tpu.matmul %693, %12, %cst_127 {dimension_numbers = #tpu.dot_dimension_numbers<[1], [0], [0], [1], [0, 0, 1, 1], [], []>} : vector<8x32xbf16>, vector<32x96xbf16>, vector<8x96xf32> -> vector<8x96xf32>
    %695 = vector.broadcast %14 : vector<1x96xf32> to vector<8x96xf32>
    %696 = arith.addf %694, %695 : vector<8x96xf32>
    %697 = arith.truncf %623 : vector<8x32xf32> to vector<8x32xbf16>
    %cst_128 = arith.constant dense<0.000000e+00> : vector<8x96xf32>
    %698 = tpu.matmul %697, %13, %cst_128 {dimension_numbers = #tpu.dot_dimension_numbers<[1], [0], [0], [1], [0, 0, 1, 1], [], []>} : vector<8x32xbf16>, vector<32x96xbf16>, vector<8x96xf32> -> vector<8x96xf32>
    %699 = vector.extract_strided_slice %696 {offsets = [0, 0], sizes = [8, 32], strides = [1, 1]} : vector<8x96xf32> to vector<8x32xf32>
    %700 = vector.extract_strided_slice %698 {offsets = [0, 0], sizes = [8, 32], strides = [1, 1]} : vector<8x96xf32> to vector<8x32xf32>
    %701 = arith.addf %699, %700 : vector<8x32xf32>
    %702 = arith.negf %701 : vector<8x32xf32>
    %703 = math.exp %702 : vector<8x32xf32>
    %cst_129 = arith.constant 1.000000e+00 : f32
    %704 = vector.broadcast %cst_129 : f32 to vector<8x32xf32>
    %705 = arith.addf %704, %703 : vector<8x32xf32>
    %706 = arith.divf %704, %705 : vector<8x32xf32>
    %707 = vector.extract_strided_slice %696 {offsets = [0, 32], sizes = [8, 32], strides = [1, 1]} : vector<8x96xf32> to vector<8x32xf32>
    %708 = vector.extract_strided_slice %698 {offsets = [0, 32], sizes = [8, 32], strides = [1, 1]} : vector<8x96xf32> to vector<8x32xf32>
    %709 = arith.addf %707, %708 : vector<8x32xf32>
    %710 = arith.negf %709 : vector<8x32xf32>
    %711 = math.exp %710 : vector<8x32xf32>
    %cst_130 = arith.constant 1.000000e+00 : f32
    %712 = vector.broadcast %cst_130 : f32 to vector<8x32xf32>
    %713 = arith.addf %712, %711 : vector<8x32xf32>
    %714 = arith.divf %712, %713 : vector<8x32xf32>
    %715 = vector.extract_strided_slice %696 {offsets = [0, 64], sizes = [8, 32], strides = [1, 1]} : vector<8x96xf32> to vector<8x32xf32>
    %716 = vector.extract_strided_slice %698 {offsets = [0, 64], sizes = [8, 32], strides = [1, 1]} : vector<8x96xf32> to vector<8x32xf32>
    %717 = arith.addf %716, %17 : vector<8x32xf32>
    %718 = arith.mulf %706, %717 : vector<8x32xf32>
    %719 = arith.addf %715, %718 : vector<8x32xf32>
    %720 = math.tanh %719 : vector<8x32xf32>
    %cst_131 = arith.constant 1.000000e+00 : f32
    %721 = vector.broadcast %cst_131 : f32 to vector<8x32xf32>
    %722 = arith.subf %721, %714 : vector<8x32xf32>
    %723 = arith.mulf %722, %720 : vector<8x32xf32>
    %724 = arith.mulf %714, %623 : vector<8x32xf32>
    %725 = arith.addf %723, %724 : vector<8x32xf32>
    %c5_i32 = arith.constant 5 : i32
    %726 = vector.broadcast %c5_i32 : i32 to vector<8x1xi32>
    %727 = arith.cmpi sgt, %23, %726 : vector<8x1xi32>
    %cst_132 = arith.constant 0.000000e+00 : f32
    %728 = vector.shape_cast %727 : vector<8x1xi1> to vector<8x1xi1>
    %729 = vector.broadcast %728 : vector<8x1xi1> to vector<8x32xi1>
    %730 = vector.broadcast %cst_132 : f32 to vector<8x32xf32>
    %731 = arith.select %729, %725, %730 : vector<8x32xi1>, vector<8x32xf32>
    %732 = arith.truncf %659 : vector<8x32xf32> to vector<8x32xbf16>
    %cst_133 = arith.constant dense<0.000000e+00> : vector<8x96xf32>
    %733 = tpu.matmul %732, %6, %cst_133 {dimension_numbers = #tpu.dot_dimension_numbers<[1], [0], [0], [1], [0, 0, 1, 1], [], []>} : vector<8x32xbf16>, vector<32x96xbf16>, vector<8x96xf32> -> vector<8x96xf32>
    %734 = vector.broadcast %8 : vector<1x96xf32> to vector<8x96xf32>
    %735 = arith.addf %733, %734 : vector<8x96xf32>
    %736 = arith.truncf %692 : vector<8x32xf32> to vector<8x32xbf16>
    %cst_134 = arith.constant dense<0.000000e+00> : vector<8x96xf32>
    %737 = tpu.matmul %736, %7, %cst_134 {dimension_numbers = #tpu.dot_dimension_numbers<[1], [0], [0], [1], [0, 0, 1, 1], [], []>} : vector<8x32xbf16>, vector<32x96xbf16>, vector<8x96xf32> -> vector<8x96xf32>
    %738 = vector.extract_strided_slice %735 {offsets = [0, 0], sizes = [8, 32], strides = [1, 1]} : vector<8x96xf32> to vector<8x32xf32>
    %739 = vector.extract_strided_slice %737 {offsets = [0, 0], sizes = [8, 32], strides = [1, 1]} : vector<8x96xf32> to vector<8x32xf32>
    %740 = arith.addf %738, %739 : vector<8x32xf32>
    %741 = arith.negf %740 : vector<8x32xf32>
    %742 = math.exp %741 : vector<8x32xf32>
    %cst_135 = arith.constant 1.000000e+00 : f32
    %743 = vector.broadcast %cst_135 : f32 to vector<8x32xf32>
    %744 = arith.addf %743, %742 : vector<8x32xf32>
    %745 = arith.divf %743, %744 : vector<8x32xf32>
    %746 = vector.extract_strided_slice %735 {offsets = [0, 32], sizes = [8, 32], strides = [1, 1]} : vector<8x96xf32> to vector<8x32xf32>
    %747 = vector.extract_strided_slice %737 {offsets = [0, 32], sizes = [8, 32], strides = [1, 1]} : vector<8x96xf32> to vector<8x32xf32>
    %748 = arith.addf %746, %747 : vector<8x32xf32>
    %749 = arith.negf %748 : vector<8x32xf32>
    %750 = math.exp %749 : vector<8x32xf32>
    %cst_136 = arith.constant 1.000000e+00 : f32
    %751 = vector.broadcast %cst_136 : f32 to vector<8x32xf32>
    %752 = arith.addf %751, %750 : vector<8x32xf32>
    %753 = arith.divf %751, %752 : vector<8x32xf32>
    %754 = vector.extract_strided_slice %735 {offsets = [0, 64], sizes = [8, 32], strides = [1, 1]} : vector<8x96xf32> to vector<8x32xf32>
    %755 = vector.extract_strided_slice %737 {offsets = [0, 64], sizes = [8, 32], strides = [1, 1]} : vector<8x96xf32> to vector<8x32xf32>
    %756 = arith.addf %755, %11 : vector<8x32xf32>
    %757 = arith.mulf %745, %756 : vector<8x32xf32>
    %758 = arith.addf %754, %757 : vector<8x32xf32>
    %759 = math.tanh %758 : vector<8x32xf32>
    %cst_137 = arith.constant 1.000000e+00 : f32
    %760 = vector.broadcast %cst_137 : f32 to vector<8x32xf32>
    %761 = arith.subf %760, %753 : vector<8x32xf32>
    %762 = arith.mulf %761, %759 : vector<8x32xf32>
    %763 = arith.mulf %753, %692 : vector<8x32xf32>
    %764 = arith.addf %762, %763 : vector<8x32xf32>
    %765 = arith.truncf %692 : vector<8x32xf32> to vector<8x32xbf16>
    %cst_138 = arith.constant dense<0.000000e+00> : vector<8x96xf32>
    %766 = tpu.matmul %765, %12, %cst_138 {dimension_numbers = #tpu.dot_dimension_numbers<[1], [0], [0], [1], [0, 0, 1, 1], [], []>} : vector<8x32xbf16>, vector<32x96xbf16>, vector<8x96xf32> -> vector<8x96xf32>
    %767 = vector.broadcast %14 : vector<1x96xf32> to vector<8x96xf32>
    %768 = arith.addf %766, %767 : vector<8x96xf32>
    %769 = arith.truncf %725 : vector<8x32xf32> to vector<8x32xbf16>
    %cst_139 = arith.constant dense<0.000000e+00> : vector<8x96xf32>
    %770 = tpu.matmul %769, %13, %cst_139 {dimension_numbers = #tpu.dot_dimension_numbers<[1], [0], [0], [1], [0, 0, 1, 1], [], []>} : vector<8x32xbf16>, vector<32x96xbf16>, vector<8x96xf32> -> vector<8x96xf32>
    %771 = vector.extract_strided_slice %768 {offsets = [0, 0], sizes = [8, 32], strides = [1, 1]} : vector<8x96xf32> to vector<8x32xf32>
    %772 = vector.extract_strided_slice %770 {offsets = [0, 0], sizes = [8, 32], strides = [1, 1]} : vector<8x96xf32> to vector<8x32xf32>
    %773 = arith.addf %771, %772 : vector<8x32xf32>
    %774 = arith.negf %773 : vector<8x32xf32>
    %775 = math.exp %774 : vector<8x32xf32>
    %cst_140 = arith.constant 1.000000e+00 : f32
    %776 = vector.broadcast %cst_140 : f32 to vector<8x32xf32>
    %777 = arith.addf %776, %775 : vector<8x32xf32>
    %778 = arith.divf %776, %777 : vector<8x32xf32>
    %779 = vector.extract_strided_slice %768 {offsets = [0, 32], sizes = [8, 32], strides = [1, 1]} : vector<8x96xf32> to vector<8x32xf32>
    %780 = vector.extract_strided_slice %770 {offsets = [0, 32], sizes = [8, 32], strides = [1, 1]} : vector<8x96xf32> to vector<8x32xf32>
    %781 = arith.addf %779, %780 : vector<8x32xf32>
    %782 = arith.negf %781 : vector<8x32xf32>
    %783 = math.exp %782 : vector<8x32xf32>
    %cst_141 = arith.constant 1.000000e+00 : f32
    %784 = vector.broadcast %cst_141 : f32 to vector<8x32xf32>
    %785 = arith.addf %784, %783 : vector<8x32xf32>
    %786 = arith.divf %784, %785 : vector<8x32xf32>
    %787 = vector.extract_strided_slice %768 {offsets = [0, 64], sizes = [8, 32], strides = [1, 1]} : vector<8x96xf32> to vector<8x32xf32>
    %788 = vector.extract_strided_slice %770 {offsets = [0, 64], sizes = [8, 32], strides = [1, 1]} : vector<8x96xf32> to vector<8x32xf32>
    %789 = arith.addf %788, %17 : vector<8x32xf32>
    %790 = arith.mulf %778, %789 : vector<8x32xf32>
    %791 = arith.addf %787, %790 : vector<8x32xf32>
    %792 = math.tanh %791 : vector<8x32xf32>
    %cst_142 = arith.constant 1.000000e+00 : f32
    %793 = vector.broadcast %cst_142 : f32 to vector<8x32xf32>
    %794 = arith.subf %793, %786 : vector<8x32xf32>
    %795 = arith.mulf %794, %792 : vector<8x32xf32>
    %796 = arith.mulf %786, %725 : vector<8x32xf32>
    %797 = arith.addf %795, %796 : vector<8x32xf32>
    %c6_i32 = arith.constant 6 : i32
    %798 = vector.broadcast %c6_i32 : i32 to vector<8x1xi32>
    %799 = arith.cmpi sgt, %23, %798 : vector<8x1xi32>
    %cst_143 = arith.constant 0.000000e+00 : f32
    %800 = vector.shape_cast %799 : vector<8x1xi1> to vector<8x1xi1>
    %801 = vector.broadcast %800 : vector<8x1xi1> to vector<8x32xi1>
    %802 = vector.broadcast %cst_143 : f32 to vector<8x32xf32>
    %803 = arith.select %801, %797, %802 : vector<8x32xi1>, vector<8x32xf32>
    %804 = arith.truncf %764 : vector<8x32xf32> to vector<8x32xbf16>
    %cst_144 = arith.constant dense<0.000000e+00> : vector<8x96xf32>
    %805 = tpu.matmul %804, %12, %cst_144 {dimension_numbers = #tpu.dot_dimension_numbers<[1], [0], [0], [1], [0, 0, 1, 1], [], []>} : vector<8x32xbf16>, vector<32x96xbf16>, vector<8x96xf32> -> vector<8x96xf32>
    %806 = vector.broadcast %14 : vector<1x96xf32> to vector<8x96xf32>
    %807 = arith.addf %805, %806 : vector<8x96xf32>
    %808 = arith.truncf %797 : vector<8x32xf32> to vector<8x32xbf16>
    %cst_145 = arith.constant dense<0.000000e+00> : vector<8x96xf32>
    %809 = tpu.matmul %808, %13, %cst_145 {dimension_numbers = #tpu.dot_dimension_numbers<[1], [0], [0], [1], [0, 0, 1, 1], [], []>} : vector<8x32xbf16>, vector<32x96xbf16>, vector<8x96xf32> -> vector<8x96xf32>
    %810 = vector.extract_strided_slice %807 {offsets = [0, 0], sizes = [8, 32], strides = [1, 1]} : vector<8x96xf32> to vector<8x32xf32>
    %811 = vector.extract_strided_slice %809 {offsets = [0, 0], sizes = [8, 32], strides = [1, 1]} : vector<8x96xf32> to vector<8x32xf32>
    %812 = arith.addf %810, %811 : vector<8x32xf32>
    %813 = arith.negf %812 : vector<8x32xf32>
    %814 = math.exp %813 : vector<8x32xf32>
    %cst_146 = arith.constant 1.000000e+00 : f32
    %815 = vector.broadcast %cst_146 : f32 to vector<8x32xf32>
    %816 = arith.addf %815, %814 : vector<8x32xf32>
    %817 = arith.divf %815, %816 : vector<8x32xf32>
    %818 = vector.extract_strided_slice %807 {offsets = [0, 32], sizes = [8, 32], strides = [1, 1]} : vector<8x96xf32> to vector<8x32xf32>
    %819 = vector.extract_strided_slice %809 {offsets = [0, 32], sizes = [8, 32], strides = [1, 1]} : vector<8x96xf32> to vector<8x32xf32>
    %820 = arith.addf %818, %819 : vector<8x32xf32>
    %821 = arith.negf %820 : vector<8x32xf32>
    %822 = math.exp %821 : vector<8x32xf32>
    %cst_147 = arith.constant 1.000000e+00 : f32
    %823 = vector.broadcast %cst_147 : f32 to vector<8x32xf32>
    %824 = arith.addf %823, %822 : vector<8x32xf32>
    %825 = arith.divf %823, %824 : vector<8x32xf32>
    %826 = vector.extract_strided_slice %807 {offsets = [0, 64], sizes = [8, 32], strides = [1, 1]} : vector<8x96xf32> to vector<8x32xf32>
    %827 = vector.extract_strided_slice %809 {offsets = [0, 64], sizes = [8, 32], strides = [1, 1]} : vector<8x96xf32> to vector<8x32xf32>
    %828 = arith.addf %827, %17 : vector<8x32xf32>
    %829 = arith.mulf %817, %828 : vector<8x32xf32>
    %830 = arith.addf %826, %829 : vector<8x32xf32>
    %831 = math.tanh %830 : vector<8x32xf32>
    %cst_148 = arith.constant 1.000000e+00 : f32
    %832 = vector.broadcast %cst_148 : f32 to vector<8x32xf32>
    %833 = arith.subf %832, %825 : vector<8x32xf32>
    %834 = arith.mulf %833, %831 : vector<8x32xf32>
    %835 = arith.mulf %825, %797 : vector<8x32xf32>
    %836 = arith.addf %834, %835 : vector<8x32xf32>
    %c7_i32 = arith.constant 7 : i32
    %837 = vector.broadcast %c7_i32 : i32 to vector<8x1xi32>
    %838 = arith.cmpi sgt, %23, %837 : vector<8x1xi32>
    %cst_149 = arith.constant 0.000000e+00 : f32
    %839 = vector.shape_cast %838 : vector<8x1xi1> to vector<8x1xi1>
    %840 = vector.broadcast %839 : vector<8x1xi1> to vector<8x32xi1>
    %841 = vector.broadcast %cst_149 : f32 to vector<8x32xf32>
    %842 = arith.select %840, %836, %841 : vector<8x32xi1>, vector<8x32xf32>
    %843 = tpu.concatenate %221, %323, %425, %527, %629, %731, %803, %842 in 0 : vector<8x32xf32>, vector<8x32xf32>, vector<8x32xf32>, vector<8x32xf32>, vector<8x32xf32>, vector<8x32xf32>, vector<8x32xf32>, vector<8x32xf32> -> vector<64x32xf32>
    %c0_150 = arith.constant 0 : index
    %c0_151 = arith.constant 0 : index
    %844 = vector.load %arg14[%c0_150, %c0_151] : memref<32x128xf32, #tpu.memory_space<vmem>>, vector<32x128xf32>
    %cst_152 = arith.constant dense<0.000000e+00> : vector<64x128xf32>
    %845 = tpu.matmul %843, %844, %cst_152 {dimension_numbers = #tpu.dot_dimension_numbers<[1], [0], [0], [1], [0, 0, 1, 1], [], []>} : vector<64x32xf32>, vector<32x128xf32>, vector<64x128xf32> -> vector<64x128xf32>
    %c0_153 = arith.constant 0 : index
    %c0_154 = arith.constant 0 : index
    %846 = vector.load %arg15[%c0_153, %c0_154] : memref<1x128xf32, #tpu.memory_space<vmem>>, vector<1x128xf32>
    %847 = vector.broadcast %846 : vector<1x128xf32> to vector<64x128xf32>
    %848 = arith.addf %845, %847 : vector<64x128xf32>
    %cst_155 = arith.constant 0.000000e+00 : f32
    %849 = vector.broadcast %cst_155 : f32 to vector<64x128xf32>
    %850 = arith.maximumf %848, %849 : vector<64x128xf32>
    %c0_156 = arith.constant 0 : index
    %c0_157 = arith.constant 0 : index
    %851 = vector.load %arg16[%c0_156, %c0_157] : memref<128x128xf32, #tpu.memory_space<vmem>>, vector<128x128xf32>
    %cst_158 = arith.constant dense<0.000000e+00> : vector<64x128xf32>
    %852 = tpu.matmul %850, %851, %cst_158 {dimension_numbers = #tpu.dot_dimension_numbers<[1], [0], [0], [1], [0, 0, 1, 1], [], []>} : vector<64x128xf32>, vector<128x128xf32>, vector<64x128xf32> -> vector<64x128xf32>
    %c0_159 = arith.constant 0 : index
    %c0_160 = arith.constant 0 : index
    %853 = vector.load %arg17[%c0_159, %c0_160] : memref<1x128xf32, #tpu.memory_space<vmem>>, vector<1x128xf32>
    %854 = vector.broadcast %853 : vector<1x128xf32> to vector<64x128xf32>
    %855 = arith.addf %852, %854 : vector<64x128xf32>
    %856 = vector.extract_strided_slice %855 {offsets = [0, 0], sizes = [8, 128], strides = [1, 1]} : vector<64x128xf32> to vector<8x128xf32>
    %c0_161 = arith.constant 0 : index
    %c0_162 = arith.constant 0 : index
    %857 = vector.load %arg18[%c0_161, %c0_162] : memref<8x1024xf32, #tpu.memory_space<vmem>>, vector<8x128xf32>
    tpu.vector_store %arg18[%c0_161, %c0_162], %856 {strides = array<i32>} : memref<8x1024xf32, #tpu.memory_space<vmem>>, vector<8x128xf32>,
    %858 = vector.extract_strided_slice %855 {offsets = [8, 0], sizes = [8, 128], strides = [1, 1]} : vector<64x128xf32> to vector<8x128xf32>
    %c0_163 = arith.constant 0 : index
    %c128 = arith.constant 128 : index
    %859 = vector.load %arg18[%c0_163, %c128] : memref<8x1024xf32, #tpu.memory_space<vmem>>, vector<8x128xf32>
    tpu.vector_store %arg18[%c0_163, %c128], %858 {strides = array<i32>} : memref<8x1024xf32, #tpu.memory_space<vmem>>, vector<8x128xf32>,
    %860 = vector.extract_strided_slice %855 {offsets = [16, 0], sizes = [8, 128], strides = [1, 1]} : vector<64x128xf32> to vector<8x128xf32>
    %c0_164 = arith.constant 0 : index
    %c256 = arith.constant 256 : index
    %861 = vector.load %arg18[%c0_164, %c256] : memref<8x1024xf32, #tpu.memory_space<vmem>>, vector<8x128xf32>
    tpu.vector_store %arg18[%c0_164, %c256], %860 {strides = array<i32>} : memref<8x1024xf32, #tpu.memory_space<vmem>>, vector<8x128xf32>,
    %862 = vector.extract_strided_slice %855 {offsets = [24, 0], sizes = [8, 128], strides = [1, 1]} : vector<64x128xf32> to vector<8x128xf32>
    %c0_165 = arith.constant 0 : index
    %c384 = arith.constant 384 : index
    %863 = vector.load %arg18[%c0_165, %c384] : memref<8x1024xf32, #tpu.memory_space<vmem>>, vector<8x128xf32>
    tpu.vector_store %arg18[%c0_165, %c384], %862 {strides = array<i32>} : memref<8x1024xf32, #tpu.memory_space<vmem>>, vector<8x128xf32>,
    %864 = vector.extract_strided_slice %855 {offsets = [32, 0], sizes = [8, 128], strides = [1, 1]} : vector<64x128xf32> to vector<8x128xf32>
    %c0_166 = arith.constant 0 : index
    %c512 = arith.constant 512 : index
    %865 = vector.load %arg18[%c0_166, %c512] : memref<8x1024xf32, #tpu.memory_space<vmem>>, vector<8x128xf32>
    tpu.vector_store %arg18[%c0_166, %c512], %864 {strides = array<i32>} : memref<8x1024xf32, #tpu.memory_space<vmem>>, vector<8x128xf32>,
    %866 = vector.extract_strided_slice %855 {offsets = [40, 0], sizes = [8, 128], strides = [1, 1]} : vector<64x128xf32> to vector<8x128xf32>
    %c0_167 = arith.constant 0 : index
    %c640 = arith.constant 640 : index
    %867 = vector.load %arg18[%c0_167, %c640] : memref<8x1024xf32, #tpu.memory_space<vmem>>, vector<8x128xf32>
    tpu.vector_store %arg18[%c0_167, %c640], %866 {strides = array<i32>} : memref<8x1024xf32, #tpu.memory_space<vmem>>, vector<8x128xf32>,
    %868 = vector.extract_strided_slice %855 {offsets = [48, 0], sizes = [8, 128], strides = [1, 1]} : vector<64x128xf32> to vector<8x128xf32>
    %c0_168 = arith.constant 0 : index
    %c768 = arith.constant 768 : index
    %869 = vector.load %arg18[%c0_168, %c768] : memref<8x1024xf32, #tpu.memory_space<vmem>>, vector<8x128xf32>
    tpu.vector_store %arg18[%c0_168, %c768], %868 {strides = array<i32>} : memref<8x1024xf32, #tpu.memory_space<vmem>>, vector<8x128xf32>,
    %870 = vector.extract_strided_slice %855 {offsets = [56, 0], sizes = [8, 128], strides = [1, 1]} : vector<64x128xf32> to vector<8x128xf32>
    %c0_169 = arith.constant 0 : index
    %c896 = arith.constant 896 : index
    %871 = vector.load %arg18[%c0_169, %c896] : memref<8x1024xf32, #tpu.memory_space<vmem>>, vector<8x128xf32>
    tpu.vector_store %arg18[%c0_169, %c896], %870 {strides = array<i32>} : memref<8x1024xf32, #tpu.memory_space<vmem>>, vector<8x128xf32>,
    return
  }
}

</mosaic_0001>

<llo_original>
// kernel: imu_to_trajectory_forward.1
$region0: #{imu_to_trajectory_forward.1}
  #allocation0 [shape = 'u32[]', space=smem, size = 0x4, offset = 0x4, fixed_abs, tag = 'smem constant byte address 0x4 - core index']
  #allocation1 [shape = 'u32[144,128]{1,0:T(1,128)}', space=vmem, size = 0x12000, scoped, tag = 'internal scratch']
  %s0 = inlined_call_operand.vmem [shape: f32[64,6], index: 0, kind: input, shape index: {}]
  %s1 = inlined_call_operand.vmem [shape: s32[8,1], index: 1, kind: input, shape index: {}]
  %s2 = inlined_call_operand.hbm [shape: bf16[6,96], index: 2, kind: input, shape index: {}]
  %s3 = inlined_call_operand.vmem [shape: bf16[32,96], index: 3, kind: input, shape index: {}]
  %s4 = inlined_call_operand.vmem [shape: f32[1,96], index: 4, kind: input, shape index: {}]
  %s5 = inlined_call_operand.hbm [shape: f32[1,32], index: 5, kind: input, shape index: {}]
  %s6 = inlined_call_operand.vmem [shape: bf16[32,96], index: 6, kind: input, shape index: {}]
  %s7 = inlined_call_operand.vmem [shape: bf16[32,96], index: 7, kind: input, shape index: {}]
  %s8 = inlined_call_operand.hbm [shape: f32[1,96], index: 8, kind: input, shape index: {}]
  %s9 = inlined_call_operand.hbm [shape: f32[1,32], index: 9, kind: input, shape index: {}]
  %s10 = inlined_call_operand.vmem [shape: bf16[32,96], index: 10, kind: input, shape index: {}]
  %s11 = inlined_call_operand.hbm [shape: bf16[32,96], index: 11, kind: input, shape index: {}]
  %s12 = inlined_call_operand.vmem [shape: f32[1,96], index: 12, kind: input, shape index: {}]
  %s13 = inlined_call_operand.vmem [shape: f32[1,32], index: 13, kind: input, shape index: {}]
  %s14 = inlined_call_operand.vmem [shape: f32[32,128], index: 14, kind: input, shape index: {}]
  %s15 = inlined_call_operand.hbm [shape: f32[1,128], index: 15, kind: input, shape index: {}]
  %s16 = inlined_call_operand.vmem [shape: f32[128,128], index: 16, kind: input, shape index: {}]
  %s17 = inlined_call_operand.hbm [shape: f32[1,128], index: 17, kind: input, shape index: {}]
  %s18 = inlined_call_operand.vmem [shape: f32[8,1024], index: 18, kind: output, shape index: {}]
  %s19 = sld [smem:[#allocation0]]
  $region110: #{imu_to_trajectory_forward.1} parent=0
    _
  %s21 = ssub.s32 1, %s19
  %s22 = scalar_select 0, %s21, %s19
  $region1: #{imu_to_trajectory_forward.1} parent=0
    #allocation2 [shape = 'u8[2048]{0}', space=vmem, size = 0x800, scoped, tag = 'input window, operand 2, single buffered']
    #allocation3 [shape = 's32[1]{0}', space=sflag, size = 0x4, scoped, tag = 'scoped memory for imu_to_trajectory_forward.1']
    #allocation4 [shape = 'u8[512]{0}', space=vmem, size = 0x400, scoped, tag = 'input window, operand 5, single buffered']
    #allocation5 [shape = 's32[1]{0}', space=sflag, size = 0x4, scoped, tag = 'scoped memory for imu_to_trajectory_forward.1']
    #allocation6 [shape = 'u8[512]{0}', space=vmem, size = 0x400, scoped, tag = 'input window, operand 8, single buffered']
    #allocation7 [shape = 'u8[512]{0}', space=vmem, size = 0x400, scoped, tag = 'input window, operand 9, single buffered']
    #allocation8 [shape = 's32[1]{0}', space=sflag, size = 0x4, scoped, tag = 'scoped memory for imu_to_trajectory_forward.1']
    #allocation9 [shape = 'u8[8192]{0}', space=vmem, size = 0x2000, scoped, tag = 'input window, operand 11, single buffered']
    #allocation10 [shape = 'u8[512]{0}', space=vmem, size = 0x400, scoped, tag = 'input window, operand 15, single buffered']
    #allocation11 [shape = 's32[1]{0}', space=sflag, size = 0x4, scoped, tag = 'scoped memory for imu_to_trajectory_forward.1']
    #allocation12 [shape = 'u8[512]{0}', space=vmem, size = 0x400, scoped, tag = 'input window, operand 17, single buffered']
    %23 = vsyncpa [#allocation3], 0
    %24 = vsyncpa [#allocation5], 0
    %25 = vsyncpa [#allocation8], 0
    %26 = vsyncpa [#allocation11], 0
    // Predicated region
    $region2: #{imu_to_trajectory_forward.1} parent=1 // pred_check
      _
    $region3: #{imu_to_trajectory_forward.1} parent=1 // pred_check_branch
      %28 = sbr.rel (0) target = $region5
    $region4: #{imu_to_trajectory_forward.1} parent=1 // pred_region
      _
    $region5: #{imu_to_trajectory_forward.1} parent=1 // pred_fallthru
      _
    // Predicated region
    $region6: #{imu_to_trajectory_forward.1} parent=1 // pred_check
      _
    $region7: #{imu_to_trajectory_forward.1} parent=1 // pred_check_branch
      %30 = sbr.rel (0) target = $region9
    $region8: #{imu_to_trajectory_forward.1} parent=1 // pred_region
      _
    $region9: #{imu_to_trajectory_forward.1} parent=1 // pred_fallthru
      _
    // Predicated region
    $region10: #{imu_to_trajectory_forward.1} parent=1 // pred_check
      _
    $region11: #{imu_to_trajectory_forward.1} parent=1 // pred_check_branch
      %32 = sbr.rel (0) target = $region13
    $region12: #{imu_to_trajectory_forward.1} parent=1 // pred_region
      %s34 = ssub.s32 64, 64
      %35 = vsyncadd [#allocation3], %s34
      %s37 = sshll.u32 [#allocation2], 4
      %s38 = int_to_ptr.vmem [resolvable:$true] %s37
      %40 = dma.hbm_to_vmem [thread:$0]  %s2, 64, %s38, [#allocation3]
    $region13: #{imu_to_trajectory_forward.1} parent=1 // pred_fallthru
      _
    // Predicated region
    $region14: #{imu_to_trajectory_forward.1} parent=1 // pred_check
      _
    $region15: #{imu_to_trajectory_forward.1} parent=1 // pred_check_branch
      %42 = sbr.rel (0) target = $region17
    $region16: #{imu_to_trajectory_forward.1} parent=1 // pred_region
      _
    $region17: #{imu_to_trajectory_forward.1} parent=1 // pred_fallthru
      _
    // Predicated region
    $region18: #{imu_to_trajectory_forward.1} parent=1 // pred_check
      _
    $region19: #{imu_to_trajectory_forward.1} parent=1 // pred_check_branch
      %44 = sbr.rel (0) target = $region21
    $region20: #{imu_to_trajectory_forward.1} parent=1 // pred_region
      _
    $region21: #{imu_to_trajectory_forward.1} parent=1 // pred_fallthru
      _
    // Predicated region
    $region22: #{imu_to_trajectory_forward.1} parent=1 // pred_check
      _
    $region23: #{imu_to_trajectory_forward.1} parent=1 // pred_check_branch
      %46 = sbr.rel (0) target = $region25
    $region24: #{imu_to_trajectory_forward.1} parent=1 // pred_region
      %s48 = ssub.s32 16, 16
      %49 = vsyncadd [#allocation5], %s48
      %s51 = sshll.u32 [#allocation4], 4
      %s52 = int_to_ptr.vmem [resolvable:$true] %s51
      %54 = dma.hbm_to_vmem [thread:$0]  %s5, 16, %s52, [#allocation5]
    $region25: #{imu_to_trajectory_forward.1} parent=1 // pred_fallthru
      _
    // Predicated region
    $region26: #{imu_to_trajectory_forward.1} parent=1 // pred_check
      _
    $region27: #{imu_to_trajectory_forward.1} parent=1 // pred_check_branch
      %56 = sbr.rel (0) target = $region29
    $region28: #{imu_to_trajectory_forward.1} parent=1 // pred_region
      _
    $region29: #{imu_to_trajectory_forward.1} parent=1 // pred_fallthru
      _
    // Predicated region
    $region30: #{imu_to_trajectory_forward.1} parent=1 // pred_check
      _
    $region31: #{imu_to_trajectory_forward.1} parent=1 // pred_check_branch
      %58 = sbr.rel (0) target = $region33
    $region32: #{imu_to_trajectory_forward.1} parent=1 // pred_region
      _
    $region33: #{imu_to_trajectory_forward.1} parent=1 // pred_fallthru
      _
    // Predicated region
    $region34: #{imu_to_trajectory_forward.1} parent=1 // pred_check
      _
    $region35: #{imu_to_trajectory_forward.1} parent=1 // pred_check_branch
      %60 = sbr.rel (0) target = $region37
    $region36: #{imu_to_trajectory_forward.1} parent=1 // pred_region
      %s62 = ssub.s32 16, 16
      %63 = vsyncadd [#allocation5], %s62
      %s65 = sshll.u32 [#allocation6], 4
      %s66 = int_to_ptr.vmem [resolvable:$true] %s65
      %68 = dma.hbm_to_vmem [thread:$0]  %s8, 16, %s66, [#allocation5]
    $region37: #{imu_to_trajectory_forward.1} parent=1 // pred_fallthru
      _
    // Predicated region
    $region38: #{imu_to_trajectory_forward.1} parent=1 // pred_check
      _
    $region39: #{imu_to_trajectory_forward.1} parent=1 // pred_check_branch
      %70 = sbr.rel (0) target = $region41
    $region40: #{imu_to_trajectory_forward.1} parent=1 // pred_region
      %s72 = ssub.s32 16, 16
      %73 = vsyncadd [#allocation8], %s72
      %s75 = sshll.u32 [#allocation7], 4
      %s76 = int_to_ptr.vmem [resolvable:$true] %s75
      %78 = dma.hbm_to_vmem [thread:$0]  %s9, 16, %s76, [#allocation8]
    $region41: #{imu_to_trajectory_forward.1} parent=1 // pred_fallthru
      _
    // Predicated region
    $region42: #{imu_to_trajectory_forward.1} parent=1 // pred_check
      _
    $region43: #{imu_to_trajectory_forward.1} parent=1 // pred_check_branch
      %80 = sbr.rel (0) target = $region45
    $region44: #{imu_to_trajectory_forward.1} parent=1 // pred_region
      _
    $region45: #{imu_to_trajectory_forward.1} parent=1 // pred_fallthru
      _
    // Predicated region
    $region46: #{imu_to_trajectory_forward.1} parent=1 // pred_check
      _
    $region47: #{imu_to_trajectory_forward.1} parent=1 // pred_check_branch
      %82 = sbr.rel (0) target = $region49
    $region48: #{imu_to_trajectory_forward.1} parent=1 // pred_region
      %s84 = ssub.s32 256, 256
      %85 = vsyncadd [#allocation8], %s84
      %s86 = sshll.u32 [#allocation9], 4
      %s87 = int_to_ptr.vmem [resolvable:$true] %s86
      %92 = dma.hbm_to_vmem [thread:$0]  %s11, 256, %s87, [#allocation8], 64, 64, 4
    $region49: #{imu_to_trajectory_forward.1} parent=1 // pred_fallthru
      _
    // Predicated region
    $region50: #{imu_to_trajectory_forward.1} parent=1 // pred_check
      _
    $region51: #{imu_to_trajectory_forward.1} parent=1 // pred_check_branch
      %94 = sbr.rel (0) target = $region53
    $region52: #{imu_to_trajectory_forward.1} parent=1 // pred_region
      _
    $region53: #{imu_to_trajectory_forward.1} parent=1 // pred_fallthru
      _
    // Predicated region
    $region54: #{imu_to_trajectory_forward.1} parent=1 // pred_check
      _
    $region55: #{imu_to_trajectory_forward.1} parent=1 // pred_check_branch
      %96 = sbr.rel (0) target = $region57
    $region56: #{imu_to_trajectory_forward.1} parent=1 // pred_region
      _
    $region57: #{imu_to_trajectory_forward.1} parent=1 // pred_fallthru
      _
    // Predicated region
    $region58: #{imu_to_trajectory_forward.1} parent=1 // pred_check
      _
    $region59: #{imu_to_trajectory_forward.1} parent=1 // pred_check_branch
      %98 = sbr.rel (0) target = $region61
    $region60: #{imu_to_trajectory_forward.1} parent=1 // pred_region
      _
    $region61: #{imu_to_trajectory_forward.1} parent=1 // pred_fallthru
      _
    // Predicated region
    $region62: #{imu_to_trajectory_forward.1} parent=1 // pred_check
      _
    $region63: #{imu_to_trajectory_forward.1} parent=1 // pred_check_branch
      %100 = sbr.rel (0) target = $region65
    $region64: #{imu_to_trajectory_forward.1} parent=1 // pred_region
      %s102 = ssub.s32 16, 16
      %103 = vsyncadd [#allocation11], %s102
      %s105 = sshll.u32 [#allocation10], 4
      %s106 = int_to_ptr.vmem [resolvable:$true] %s105
      %108 = dma.hbm_to_vmem [thread:$0]  %s15, 16, %s106, [#allocation11]
    $region65: #{imu_to_trajectory_forward.1} parent=1 // pred_fallthru
      _
    // Predicated region
    $region66: #{imu_to_trajectory_forward.1} parent=1 // pred_check
      _
    $region67: #{imu_to_trajectory_forward.1} parent=1 // pred_check_branch
      %110 = sbr.rel (0) target = $region69
    $region68: #{imu_to_trajectory_forward.1} parent=1 // pred_region
      _
    $region69: #{imu_to_trajectory_forward.1} parent=1 // pred_fallthru
      _
    // Predicated region
    $region70: #{imu_to_trajectory_forward.1} parent=1 // pred_check
      _
    $region71: #{imu_to_trajectory_forward.1} parent=1 // pred_check_branch
      %112 = sbr.rel (0) target = $region73
    $region72: #{imu_to_trajectory_forward.1} parent=1 // pred_region
      %s114 = ssub.s32 16, 16
      %115 = vsyncadd [#allocation11], %s114
      %s117 = sshll.u32 [#allocation12], 4
      %s118 = int_to_ptr.vmem [resolvable:$true] %s117
      %120 = dma.hbm_to_vmem [thread:$0]  %s17, 16, %s118, [#allocation11]
    $region73: #{imu_to_trajectory_forward.1} parent=1 // pred_fallthru
      _
    // Predicated region
    $region74: #{imu_to_trajectory_forward.1} parent=1 // pred_check
      _
    $region75: #{imu_to_trajectory_forward.1} parent=1 // pred_check_branch
      %122 = sbr.rel (0) target = $region77
    $region76: #{imu_to_trajectory_forward.1} parent=1 // pred_region
      %123 = dma.done [#allocation3], 64
    $region77: #{imu_to_trajectory_forward.1} parent=1 // pred_fallthru
      _
    // Predicated region
    $region78: #{imu_to_trajectory_forward.1} parent=1 // pred_check
      _
    $region79: #{imu_to_trajectory_forward.1} parent=1 // pred_check_branch
      %125 = sbr.rel (0) target = $region81
    $region80: #{imu_to_trajectory_forward.1} parent=1 // pred_region
      %126 = dma.done [#allocation5], 16
    $region81: #{imu_to_trajectory_forward.1} parent=1 // pred_fallthru
      _
    // Predicated region
    $region82: #{imu_to_trajectory_forward.1} parent=1 // pred_check
      _
    $region83: #{imu_to_trajectory_forward.1} parent=1 // pred_check_branch
      %128 = sbr.rel (0) target = $region85
    $region84: #{imu_to_trajectory_forward.1} parent=1 // pred_region
      %129 = dma.done [#allocation5], 16
    $region85: #{imu_to_trajectory_forward.1} parent=1 // pred_fallthru
      _
    // Predicated region
    $region86: #{imu_to_trajectory_forward.1} parent=1 // pred_check
      _
    $region87: #{imu_to_trajectory_forward.1} parent=1 // pred_check_branch
      %131 = sbr.rel (0) target = $region89
    $region88: #{imu_to_trajectory_forward.1} parent=1 // pred_region
      %132 = dma.done [#allocation8], 16
    $region89: #{imu_to_trajectory_forward.1} parent=1 // pred_fallthru
      _
    // Predicated region
    $region90: #{imu_to_trajectory_forward.1} parent=1 // pred_check
      _
    $region91: #{imu_to_trajectory_forward.1} parent=1 // pred_check_branch
      %134 = sbr.rel (0) target = $region93
    $region92: #{imu_to_trajectory_forward.1} parent=1 // pred_region
      %135 = dma.done [#allocation8], 256
    $region93: #{imu_to_trajectory_forward.1} parent=1 // pred_fallthru
      _
    // Predicated region
    $region94: #{imu_to_trajectory_forward.1} parent=1 // pred_check
      _
    $region95: #{imu_to_trajectory_forward.1} parent=1 // pred_check_branch
      %137 = sbr.rel (0) target = $region97
    $region96: #{imu_to_trajectory_forward.1} parent=1 // pred_region
      %138 = dma.done [#allocation11], 16
    $region97: #{imu_to_trajectory_forward.1} parent=1 // pred_fallthru
      _
    // Predicated region
    $region98: #{imu_to_trajectory_forward.1} parent=1 // pred_check
      _
    $region99: #{imu_to_trajectory_forward.1} parent=1 // pred_check_branch
      %140 = sbr.rel (0) target = $region101
    $region100: #{imu_to_trajectory_forward.1} parent=1 // pred_region
      %141 = dma.done [#allocation11], 16
    $region101: #{imu_to_trajectory_forward.1} parent=1 // pred_fallthru
      _
    %v143 = vld [vmem:[#allocation2] sm:$0x7]
    %v144 = vld [vmem:[%s3] sm:$0xf]
    %v145 = vld [vmem:[%s3 + $0x4] sm:$0xf]
    %v146 = vld [vmem:[%s3 + $0x8] sm:$0xf]
    %v147 = vld [vmem:[%s3 + $0xc] sm:$0xf]
    %v148 = vld [vmem:[%s4] sm:$0x1]
    %v149 = vld [vmem:[#allocation4] sm:$0x1]
    %v151 = vlaneseq
    %v152 = vshrl.u32 %v151, 7
    %v153 = vsub.s32 0, %v152
    %v154 = vrot.slane %v149, %v153
    %v155 = vld [vmem:[%s6] sm:$0xf]
    %v156 = vld [vmem:[%s6 + $0x4] sm:$0xf]
    %v157 = vld [vmem:[%s6 + $0x8] sm:$0xf]
    %v158 = vld [vmem:[%s6 + $0xc] sm:$0xf]
    %v159 = vld [vmem:[%s7] sm:$0xf]
    %v160 = vld [vmem:[%s7 + $0x4] sm:$0xf]
    %v161 = vld [vmem:[%s7 + $0x8] sm:$0xf]
    %v162 = vld [vmem:[%s7 + $0xc] sm:$0xf]
    %v163 = vld [vmem:[#allocation6] sm:$0x1]
    %v164 = vld [vmem:[#allocation7] sm:$0x1]
    %v166 = vlaneseq
    %v167 = vshrl.u32 %v166, 7
    %v168 = vsub.s32 0, %v167
    %v169 = vrot.slane %v164, %v168
    %v170 = vld [vmem:[%s10] sm:$0xf]
    %v171 = vld [vmem:[%s10 + $0x4] sm:$0xf]
    %v172 = vld [vmem:[%s10 + $0x8] sm:$0xf]
    %v173 = vld [vmem:[%s10 + $0xc] sm:$0xf]
    %v174 = vld [vmem:[#allocation9] sm:$0xf]
    %v175 = vld [vmem:[#allocation9 + $0x4] sm:$0xf]
    %v176 = vld [vmem:[#allocation9 + $0x8] sm:$0xf]
    %v177 = vld [vmem:[#allocation9 + $0xc] sm:$0xf]
    %v178 = vld [vmem:[%s12] sm:$0x1]
    %v179 = vld [vmem:[%s13] sm:$0x1]
    %v181 = vlaneseq
    %v182 = vshrl.u32 %v181, 7
    %v183 = vsub.s32 0, %v182
    %v184 = vrot.slane %v179, %v183
    %v185 = vld [vmem:[%s0] sm:$0xff]
    %v186 = vld [vmem:[%s0 + $0x8] sm:$0xff]
    %v187 = vld [vmem:[%s0 + $0x10] sm:$0xff]
    %v188 = vld [vmem:[%s0 + $0x18] sm:$0xff]
    %v189 = vld [vmem:[%s0 + $0x20] sm:$0xff]
    %v190 = vld [vmem:[%s0 + $0x28] sm:$0xff]
    %v191 = vld [vmem:[%s0 + $0x30] sm:$0xff]
    %v192 = vld [vmem:[%s0 + $0x38] sm:$0xff]
    %v193 = vpack.c.bf16 %v186, %v185
    %v194 = vpack.c.bf16 %v188, %v187
    %v195 = vpack.c.bf16 %v190, %v189
    %v196 = vpack.c.bf16 %v192, %v191
    %v198 = vlaneseq
    %v199 = vshrl.u32 %v198, 7
    %v200 = vsub.s32 0, %v199
    %v201 = vrot.slane %v148, %v200
    %vm203 = vcmask 48128
    %v205 = vsel %vm203, %v193, 0
    %v208 = vsel %vm203, %v194, 0
    %v211 = vsel %vm203, %v195, 0
    %v214 = vsel %vm203, %v196, 0
    %vm216 = vcmask 1042432
    %v218 = vsel %vm216, %v143, 0
    %220 = vmatprep.subr.bf16.mxu0 0
    %221 = vmatpush1.bf16.msra.mxu0 %v218
    %222 = vmatprep.subr.bf16.mxu0 0
    %223 = vmatpush1.bf16.msra.mxu0 0
    %224 = vmatprep.subr.bf16.mxu0 0
    %225 = vmatpush1.bf16.msra.mxu0 0
    %226 = vmatprep.subr.bf16.mxu0 0
    %227 = vmatpush1.bf16.msra.mxu0 0
    %228 = vmatprep.subr.bf16.mxu0 0
    %229 = vmatpush1.bf16.msra.mxu0 0
    %230 = vmatprep.subr.bf16.mxu0 0
    %231 = vmatpush1.bf16.msra.mxu0 0
    %232 = vmatprep.subr.bf16.mxu0 0
    %233 = vmatpush1.bf16.msra.mxu0 0
    %234 = vmatprep.subr.bf16.mxu0 0
    %235 = vmatpush1.bf16.msra.mxu0 0
    %236 = vmatprep.subr.bf16.mxu0 0
    %237 = vmatpush1.bf16.msra.mxu0 0
    %238 = vmatprep.subr.bf16.mxu0 0
    %239 = vmatpush1.bf16.msra.mxu0 0
    %240 = vmatprep.subr.bf16.mxu0 0
    %241 = vmatpush1.bf16.msra.mxu0 0
    %242 = vmatprep.subr.bf16.mxu0 0
    %243 = vmatpush1.bf16.msra.mxu0 0
    %244 = vmatprep.subr.bf16.mxu0 0
    %245 = vmatpush1.bf16.msra.mxu0 0
    %246 = vmatprep.subr.bf16.mxu0 0
    %247 = vmatpush1.bf16.msra.mxu0 0
    %248 = vmatprep.subr.bf16.mxu0 0
    %249 = vmatpush1.bf16.msra.mxu0 0
    %250 = vmatprep.subr.bf16.mxu0 0
    %251 = vmatpush1.bf16.msra.mxu0 0
    %252 = vmatprep.mubr.bf16.mxu0 0
    %253 = vmatmul.mubr.bf16.gmra.mrb[0].mxu0 %v205
    %v254 = vpop.f32.mrb[0].mxu0
    %v255 = vadd.f32 %v201, %v254
    %v256 = vpop.f32.mrb[0].mxu0
    %v257 = vpop.f32.mrb[0].mxu0
    %v258 = vadd.f32 %v201, %v257
    %v259 = vpop.f32.mrb[0].mxu0
    %260 = vmatprep.mubr.bf16.mxu0 0
    %261 = vmatmul.mubr.bf16.gmra.mrb[0].mxu0 %v208
    %v262 = vpop.f32.mrb[0].mxu0
    %v263 = vadd.f32 %v201, %v262
    %v264 = vpop.f32.mrb[0].mxu0
    %v265 = vpop.f32.mrb[0].mxu0
    %v266 = vadd.f32 %v201, %v265
    %v267 = vpop.f32.mrb[0].mxu0
    %268 = vmatprep.mubr.bf16.mxu0 0
    %269 = vmatmul.mubr.bf16.gmra.mrb[0].mxu0 %v211
    %v270 = vpop.f32.mrb[0].mxu0
    %v271 = vadd.f32 %v201, %v270
    %v272 = vpop.f32.mrb[0].mxu0
    %v273 = vpop.f32.mrb[0].mxu0
    %v274 = vadd.f32 %v201, %v273
    %v275 = vpop.f32.mrb[0].mxu0
    %276 = vmatprep.mubr.bf16.mxu0 0
    %277 = vmatmul.mubr.bf16.gmra.mrb[0].mxu0 %v214
    %v278 = vpop.f32.mrb[0].mxu0
    %v279 = vadd.f32 %v201, %v278
    %v280 = vpop.f32.mrb[0].mxu0
    %v281 = vpop.f32.mrb[0].mxu0
    %v282 = vadd.f32 %v201, %v281
    %v283 = vpop.f32.mrb[0].mxu0
    %284 = vdwg.mxu0
    %v285 = vld [vmem:[%s1] sm:$0xff]
    %v290 = vunpack.c.l.b16 %v144
    %v291 = vunpack.c.l.b16 %v145
    %v292 = vunpack.c.l.b16 %v146
    %v293 = vunpack.c.l.b16 %v147
    %v294 = vpack.c.b16 %v291, %v290
    %v295 = vpack.c.b16 %v293, %v292
    %vm298 = vcmask 261120
    %v300 = vsel %vm298, 0, 0
    %302 = vmatprep.subr.bf16.mxu0 0
    %303 = vmatpush1.bf16.msra.mxu0 %v294
    %304 = vmatprep.subr.bf16.mxu0 0
    %305 = vmatpush1.bf16.msra.mxu0 %v295
    %306 = vmatprep.subr.bf16.mxu0 0
    %307 = vmatpush1.bf16.msra.mxu0 0
    %308 = vmatprep.subr.bf16.mxu0 0
    %309 = vmatpush1.bf16.msra.mxu0 0
    %310 = vmatprep.subr.bf16.mxu0 0
    %311 = vmatpush1.bf16.msra.mxu0 0
    %312 = vmatprep.subr.bf16.mxu0 0
    %313 = vmatpush1.bf16.msra.mxu0 0
    %314 = vmatprep.subr.bf16.mxu0 0
    %315 = vmatpush1.bf16.msra.mxu0 0
    %316 = vmatprep.subr.bf16.mxu0 0
    %317 = vmatpush1.bf16.msra.mxu0 0
    %318 = vmatprep.subr.bf16.mxu0 0
    %319 = vmatpush1.bf16.msra.mxu0 0
    %320 = vmatprep.subr.bf16.mxu0 0
    %321 = vmatpush1.bf16.msra.mxu0 0
    %322 = vmatprep.subr.bf16.mxu0 0
    %323 = vmatpush1.bf16.msra.mxu0 0
    %324 = vmatprep.subr.bf16.mxu0 0
    %325 = vmatpush1.bf16.msra.mxu0 0
    %326 = vmatprep.subr.bf16.mxu0 0
    %327 = vmatpush1.bf16.msra.mxu0 0
    %328 = vmatprep.subr.bf16.mxu0 0
    %329 = vmatpush1.bf16.msra.mxu0 0
    %330 = vmatprep.subr.bf16.mxu0 0
    %331 = vmatpush1.bf16.msra.mxu0 0
    %332 = vmatprep.subr.bf16.mxu0 0
    %333 = vmatpush1.bf16.msra.mxu0 0
    %334 = vmatprep.mubr.bf16.mxu0 0
    %335 = vmatmul.mubr.bf16.gmra.mrb[0].mxu0 %v300
    %v336 = vpop.f32.mrb[0].mxu0
    %v337 = vadd.f32 0.0, %v336
    %v338 = vpop.f32.mrb[0].mxu0
    %v339 = vpop.f32.mrb[0].mxu0
    %v340 = vpop.f32.mrb[0].mxu0
    %341 = vdwg.mxu0
    %v342 = vadd.f32 %v255, %v337
    %v343 = vxor.u32 %v342, 2147483648
    %v344 = vmul.f32 %v343, 1.442695
    %v345 = vpow.pop %v344
    %v346 = vadd.f32 %v345, 1.0
    %v347 = vrcp.pop %v346
    %v348 = vmul.f32 1.0, %v347
    %349 = vrot.lane.b32.xlu0 %v154, 64
    %v350 = vpop.permute.xlu0 %349
    %v352 = vadd.f32 %v337, %v350
    %354 = vrot.lane.b32.xlu0 %v352, 64
    %v355 = vpop.permute.xlu0 %354
    %v357 = vmul.f32 %v348, %v355
    %359 = vrot.lane.b32.xlu0 %v357, 64
    %v360 = vpop.permute.xlu0 %359
    %v362 = vadd.f32 %v255, %v360
    %v363 = vtanh.pop %v362
    %v364 = vsub.f32 1.0, %v348
    %366 = vrot.lane.b32.xlu0 %v363, 96
    %v367 = vpop.permute.xlu0 %366
    %v369 = vmul.f32 %v364, %v367
    %v370 = vmul.f32 %v348, 0.0
    %v371 = vadd.f32 %v369, %v370
    %v372 = vpack.c.bf16 %v371, %v371
    %374 = vrot.lane.b32.xlu0 %v372, 96
    %v375 = vpop.permute.xlu0 %374
    %v377 = vsel %vm298, %v375, 0
    %379 = vmatprep.subr.bf16.mxu0 0
    %380 = vmatpush1.bf16.msra.mxu0 %v294
    %381 = vmatprep.subr.bf16.mxu0 0
    %382 = vmatpush1.bf16.msra.mxu0 %v295
    %383 = vmatprep.subr.bf16.mxu0 0
    %384 = vmatpush1.bf16.msra.mxu0 0
    %385 = vmatprep.subr.bf16.mxu0 0
    %386 = vmatpush1.bf16.msra.mxu0 0
    %387 = vmatprep.subr.bf16.mxu0 0
    %388 = vmatpush1.bf16.msra.mxu0 0
    %389 = vmatprep.subr.bf16.mxu0 0
    %390 = vmatpush1.bf16.msra.mxu0 0
    %391 = vmatprep.subr.bf16.mxu0 0
    %392 = vmatpush1.bf16.msra.mxu0 0
    %393 = vmatprep.subr.bf16.mxu0 0
    %394 = vmatpush1.bf16.msra.mxu0 0
    %395 = vmatprep.subr.bf16.mxu0 0
    %396 = vmatpush1.bf16.msra.mxu0 0
    %397 = vmatprep.subr.bf16.mxu0 0
    %398 = vmatpush1.bf16.msra.mxu0 0
    %399 = vmatprep.subr.bf16.mxu0 0
    %400 = vmatpush1.bf16.msra.mxu0 0
    %401 = vmatprep.subr.bf16.mxu0 0
    %402 = vmatpush1.bf16.msra.mxu0 0
    %403 = vmatprep.subr.bf16.mxu0 0
    %404 = vmatpush1.bf16.msra.mxu0 0
    %405 = vmatprep.subr.bf16.mxu0 0
    %406 = vmatpush1.bf16.msra.mxu0 0
    %407 = vmatprep.subr.bf16.mxu0 0
    %408 = vmatpush1.bf16.msra.mxu0 0
    %409 = vmatprep.subr.bf16.mxu0 0
    %410 = vmatpush1.bf16.msra.mxu0 0
    %411 = vmatprep.mubr.bf16.mxu0 0
    %412 = vmatmul.mubr.bf16.gmra.mrb[0].mxu0 %v377
    %v413 = vpop.f32.mrb[0].mxu0
    %v414 = vadd.f32 0.0, %v413
    %v415 = vpop.f32.mrb[0].mxu0
    %v416 = vpop.f32.mrb[0].mxu0
    %v417 = vpop.f32.mrb[0].mxu0
    %418 = vdwg.mxu0
    %v419 = vadd.f32 %v258, %v414
    %v420 = vxor.u32 %v419, 2147483648
    %v421 = vmul.f32 %v420, 1.442695
    %v422 = vpow.pop %v421
    %v423 = vadd.f32 %v422, 1.0
    %v424 = vrcp.pop %v423
    %v425 = vmul.f32 1.0, %v424
    %v426 = vadd.f32 %v414, %v350
    %428 = vrot.lane.b32.xlu0 %v426, 64
    %v429 = vpop.permute.xlu0 %428
    %v431 = vmul.f32 %v425, %v429
    %433 = vrot.lane.b32.xlu0 %v431, 64
    %v434 = vpop.permute.xlu0 %433
    %v436 = vadd.f32 %v258, %v434
    %v437 = vtanh.pop %v436
    %v438 = vsub.f32 1.0, %v425
    %440 = vrot.lane.b32.xlu0 %v437, 96
    %v441 = vpop.permute.xlu0 %440
    %v443 = vmul.f32 %v438, %v441
    %v444 = vmul.f32 %v425, %v371
    %v445 = vadd.f32 %v443, %v444
    %v447 = vlaneseq
    %v448 = vshrl.u32 %v447, 7
    %v449 = vsub.s32 0, %v448
    %v450 = vrot.slane %v163, %v449
    %v456 = vunpack.c.l.b16 %v155
    %v457 = vunpack.c.l.b16 %v156
    %v458 = vunpack.c.l.b16 %v157
    %v459 = vunpack.c.l.b16 %v158
    %v460 = vpack.c.b16 %v457, %v456
    %v461 = vpack.c.b16 %v459, %v458
    %464 = vmatprep.subr.bf16.mxu0 0
    %465 = vmatpush1.bf16.msra.mxu0 %v460
    %466 = vmatprep.subr.bf16.mxu0 0
    %467 = vmatpush1.bf16.msra.mxu0 %v461
    %468 = vmatprep.subr.bf16.mxu0 0
    %469 = vmatpush1.bf16.msra.mxu0 0
    %470 = vmatprep.subr.bf16.mxu0 0
    %471 = vmatpush1.bf16.msra.mxu0 0
    %472 = vmatprep.subr.bf16.mxu0 0
    %473 = vmatpush1.bf16.msra.mxu0 0
    %474 = vmatprep.subr.bf16.mxu0 0
    %475 = vmatpush1.bf16.msra.mxu0 0
    %476 = vmatprep.subr.bf16.mxu0 0
    %477 = vmatpush1.bf16.msra.mxu0 0
    %478 = vmatprep.subr.bf16.mxu0 0
    %479 = vmatpush1.bf16.msra.mxu0 0
    %480 = vmatprep.subr.bf16.mxu0 0
    %481 = vmatpush1.bf16.msra.mxu0 0
    %482 = vmatprep.subr.bf16.mxu0 0
    %483 = vmatpush1.bf16.msra.mxu0 0
    %484 = vmatprep.subr.bf16.mxu0 0
    %485 = vmatpush1.bf16.msra.mxu0 0
    %486 = vmatprep.subr.bf16.mxu0 0
    %487 = vmatpush1.bf16.msra.mxu0 0
    %488 = vmatprep.subr.bf16.mxu0 0
    %489 = vmatpush1.bf16.msra.mxu0 0
    %490 = vmatprep.subr.bf16.mxu0 0
    %491 = vmatpush1.bf16.msra.mxu0 0
    %492 = vmatprep.subr.bf16.mxu0 0
    %493 = vmatpush1.bf16.msra.mxu0 0
    %494 = vmatprep.subr.bf16.mxu0 0
    %495 = vmatpush1.bf16.msra.mxu0 0
    %496 = vmatprep.mubr.bf16.mxu0 0
    %497 = vmatmul.mubr.bf16.gmra.mrb[0].mxu0 %v377
    %v498 = vpop.f32.mrb[0].mxu0
    %v499 = vadd.f32 %v450, %v498
    %v500 = vpop.f32.mrb[0].mxu0
    %v501 = vpop.f32.mrb[0].mxu0
    %v502 = vpop.f32.mrb[0].mxu0
    %503 = vdwg.mxu0
    %v508 = vunpack.c.l.b16 %v159
    %v509 = vunpack.c.l.b16 %v160
    %v510 = vunpack.c.l.b16 %v161
    %v511 = vunpack.c.l.b16 %v162
    %v512 = vpack.c.b16 %v509, %v508
    %v513 = vpack.c.b16 %v511, %v510
    %516 = vmatprep.subr.bf16.mxu0 0
    %517 = vmatpush1.bf16.msra.mxu0 %v512
    %518 = vmatprep.subr.bf16.mxu0 0
    %519 = vmatpush1.bf16.msra.mxu0 %v513
    %520 = vmatprep.subr.bf16.mxu0 0
    %521 = vmatpush1.bf16.msra.mxu0 0
    %522 = vmatprep.subr.bf16.mxu0 0
    %523 = vmatpush1.bf16.msra.mxu0 0
    %524 = vmatprep.subr.bf16.mxu0 0
    %525 = vmatpush1.bf16.msra.mxu0 0
    %526 = vmatprep.subr.bf16.mxu0 0
    %527 = vmatpush1.bf16.msra.mxu0 0
    %528 = vmatprep.subr.bf16.mxu0 0
    %529 = vmatpush1.bf16.msra.mxu0 0
    %530 = vmatprep.subr.bf16.mxu0 0
    %531 = vmatpush1.bf16.msra.mxu0 0
    %532 = vmatprep.subr.bf16.mxu0 0
    %533 = vmatpush1.bf16.msra.mxu0 0
    %534 = vmatprep.subr.bf16.mxu0 0
    %535 = vmatpush1.bf16.msra.mxu0 0
    %536 = vmatprep.subr.bf16.mxu0 0
    %537 = vmatpush1.bf16.msra.mxu0 0
    %538 = vmatprep.subr.bf16.mxu0 0
    %539 = vmatpush1.bf16.msra.mxu0 0
    %540 = vmatprep.subr.bf16.mxu0 0
    %541 = vmatpush1.bf16.msra.mxu0 0
    %542 = vmatprep.subr.bf16.mxu0 0
    %543 = vmatpush1.bf16.msra.mxu0 0
    %544 = vmatprep.subr.bf16.mxu0 0
    %545 = vmatpush1.bf16.msra.mxu0 0
    %546 = vmatprep.subr.bf16.mxu0 0
    %547 = vmatpush1.bf16.msra.mxu0 0
    %548 = vmatprep.mubr.bf16.mxu0 0
    %549 = vmatmul.mubr.bf16.gmra.mrb[0].mxu0 %v300
    %v550 = vpop.f32.mrb[0].mxu0
    %v551 = vadd.f32 0.0, %v550
    %v552 = vpop.f32.mrb[0].mxu0
    %v553 = vpop.f32.mrb[0].mxu0
    %v554 = vpop.f32.mrb[0].mxu0
    %555 = vdwg.mxu0
    %v556 = vadd.f32 %v499, %v551
    %v557 = vxor.u32 %v556, 2147483648
    %v558 = vmul.f32 %v557, 1.442695
    %v559 = vpow.pop %v558
    %v560 = vadd.f32 %v559, 1.0
    %v561 = vrcp.pop %v560
    %v562 = vmul.f32 1.0, %v561
    %563 = vrot.lane.b32.xlu0 %v169, 64
    %v564 = vpop.permute.xlu0 %563
    %v566 = vadd.f32 %v551, %v564
    %568 = vrot.lane.b32.xlu0 %v566, 64
    %v569 = vpop.permute.xlu0 %568
    %v571 = vmul.f32 %v562, %v569
    %573 = vrot.lane.b32.xlu0 %v571, 64
    %v574 = vpop.permute.xlu0 %573
    %v576 = vadd.f32 %v499, %v574
    %v577 = vtanh.pop %v576
    %v578 = vsub.f32 1.0, %v562
    %580 = vrot.lane.b32.xlu0 %v577, 96
    %v581 = vpop.permute.xlu0 %580
    %v583 = vmul.f32 %v578, %v581
    %v584 = vmul.f32 %v562, 0.0
    %v585 = vadd.f32 %v583, %v584
    %v586 = vpack.c.bf16 %v445, %v445
    %588 = vrot.lane.b32.xlu0 %v586, 96
    %v589 = vpop.permute.xlu0 %588
    %v591 = vsel %vm298, %v589, 0
    %593 = vmatprep.subr.bf16.mxu0 0
    %594 = vmatpush1.bf16.msra.mxu0 %v294
    %595 = vmatprep.subr.bf16.mxu0 0
    %596 = vmatpush1.bf16.msra.mxu0 %v295
    %597 = vmatprep.subr.bf16.mxu0 0
    %598 = vmatpush1.bf16.msra.mxu0 0
    %599 = vmatprep.subr.bf16.mxu0 0
    %600 = vmatpush1.bf16.msra.mxu0 0
    %601 = vmatprep.subr.bf16.mxu0 0
    %602 = vmatpush1.bf16.msra.mxu0 0
    %603 = vmatprep.subr.bf16.mxu0 0
    %604 = vmatpush1.bf16.msra.mxu0 0
    %605 = vmatprep.subr.bf16.mxu0 0
    %606 = vmatpush1.bf16.msra.mxu0 0
    %607 = vmatprep.subr.bf16.mxu0 0
    %608 = vmatpush1.bf16.msra.mxu0 0
    %609 = vmatprep.subr.bf16.mxu0 0
    %610 = vmatpush1.bf16.msra.mxu0 0
    %611 = vmatprep.subr.bf16.mxu0 0
    %612 = vmatpush1.bf16.msra.mxu0 0
    %613 = vmatprep.subr.bf16.mxu0 0
    %614 = vmatpush1.bf16.msra.mxu0 0
    %615 = vmatprep.subr.bf16.mxu0 0
    %616 = vmatpush1.bf16.msra.mxu0 0
    %617 = vmatprep.subr.bf16.mxu0 0
    %618 = vmatpush1.bf16.msra.mxu0 0
    %619 = vmatprep.subr.bf16.mxu0 0
    %620 = vmatpush1.bf16.msra.mxu0 0
    %621 = vmatprep.subr.bf16.mxu0 0
    %622 = vmatpush1.bf16.msra.mxu0 0
    %623 = vmatprep.subr.bf16.mxu0 0
    %624 = vmatpush1.bf16.msra.mxu0 0
    %625 = vmatprep.mubr.bf16.mxu0 0
    %626 = vmatmul.mubr.bf16.gmra.mrb[0].mxu0 %v591
    %v627 = vpop.f32.mrb[0].mxu0
    %v628 = vadd.f32 0.0, %v627
    %v629 = vpop.f32.mrb[0].mxu0
    %v630 = vpop.f32.mrb[0].mxu0
    %v631 = vpop.f32.mrb[0].mxu0
    %632 = vdwg.mxu0
    %v633 = vadd.f32 %v263, %v628
    %v634 = vxor.u32 %v633, 2147483648
    %v635 = vmul.f32 %v634, 1.442695
    %v636 = vpow.pop %v635
    %v637 = vadd.f32 %v636, 1.0
    %v638 = vrcp.pop %v637
    %v639 = vmul.f32 1.0, %v638
    %v640 = vadd.f32 %v628, %v350
    %642 = vrot.lane.b32.xlu0 %v640, 64
    %v643 = vpop.permute.xlu0 %642
    %v645 = vmul.f32 %v639, %v643
    %647 = vrot.lane.b32.xlu0 %v645, 64
    %v648 = vpop.permute.xlu0 %647
    %v650 = vadd.f32 %v263, %v648
    %v651 = vtanh.pop %v650
    %v652 = vsub.f32 1.0, %v639
    %654 = vrot.lane.b32.xlu0 %v651, 96
    %v655 = vpop.permute.xlu0 %654
    %v657 = vmul.f32 %v652, %v655
    %v658 = vmul.f32 %v639, %v445
    %v659 = vadd.f32 %v657, %v658
    %660 = vmatprep.subr.bf16.mxu0 0
    %661 = vmatpush1.bf16.msra.mxu0 %v460
    %662 = vmatprep.subr.bf16.mxu0 0
    %663 = vmatpush1.bf16.msra.mxu0 %v461
    %664 = vmatprep.subr.bf16.mxu0 0
    %665 = vmatpush1.bf16.msra.mxu0 0
    %666 = vmatprep.subr.bf16.mxu0 0
    %667 = vmatpush1.bf16.msra.mxu0 0
    %668 = vmatprep.subr.bf16.mxu0 0
    %669 = vmatpush1.bf16.msra.mxu0 0
    %670 = vmatprep.subr.bf16.mxu0 0
    %671 = vmatpush1.bf16.msra.mxu0 0
    %672 = vmatprep.subr.bf16.mxu0 0
    %673 = vmatpush1.bf16.msra.mxu0 0
    %674 = vmatprep.subr.bf16.mxu0 0
    %675 = vmatpush1.bf16.msra.mxu0 0
    %676 = vmatprep.subr.bf16.mxu0 0
    %677 = vmatpush1.bf16.msra.mxu0 0
    %678 = vmatprep.subr.bf16.mxu0 0
    %679 = vmatpush1.bf16.msra.mxu0 0
    %680 = vmatprep.subr.bf16.mxu0 0
    %681 = vmatpush1.bf16.msra.mxu0 0
    %682 = vmatprep.subr.bf16.mxu0 0
    %683 = vmatpush1.bf16.msra.mxu0 0
    %684 = vmatprep.subr.bf16.mxu0 0
    %685 = vmatpush1.bf16.msra.mxu0 0
    %686 = vmatprep.subr.bf16.mxu0 0
    %687 = vmatpush1.bf16.msra.mxu0 0
    %688 = vmatprep.subr.bf16.mxu0 0
    %689 = vmatpush1.bf16.msra.mxu0 0
    %690 = vmatprep.subr.bf16.mxu0 0
    %691 = vmatpush1.bf16.msra.mxu0 0
    %692 = vmatprep.mubr.bf16.mxu0 0
    %693 = vmatmul.mubr.bf16.gmra.mrb[0].mxu0 %v591
    %v694 = vpop.f32.mrb[0].mxu0
    %v695 = vadd.f32 %v450, %v694
    %v696 = vpop.f32.mrb[0].mxu0
    %v697 = vpop.f32.mrb[0].mxu0
    %v698 = vpop.f32.mrb[0].mxu0
    %699 = vdwg.mxu0
    %v700 = vpack.c.bf16 %v585, %v585
    %702 = vrot.lane.b32.xlu0 %v700, 96
    %v703 = vpop.permute.xlu0 %702
    %v705 = vsel %vm298, %v703, 0
    %707 = vmatprep.subr.bf16.mxu0 0
    %708 = vmatpush1.bf16.msra.mxu0 %v512
    %709 = vmatprep.subr.bf16.mxu0 0
    %710 = vmatpush1.bf16.msra.mxu0 %v513
    %711 = vmatprep.subr.bf16.mxu0 0
    %712 = vmatpush1.bf16.msra.mxu0 0
    %713 = vmatprep.subr.bf16.mxu0 0
    %714 = vmatpush1.bf16.msra.mxu0 0
    %715 = vmatprep.subr.bf16.mxu0 0
    %716 = vmatpush1.bf16.msra.mxu0 0
    %717 = vmatprep.subr.bf16.mxu0 0
    %718 = vmatpush1.bf16.msra.mxu0 0
    %719 = vmatprep.subr.bf16.mxu0 0
    %720 = vmatpush1.bf16.msra.mxu0 0
    %721 = vmatprep.subr.bf16.mxu0 0
    %722 = vmatpush1.bf16.msra.mxu0 0
    %723 = vmatprep.subr.bf16.mxu0 0
    %724 = vmatpush1.bf16.msra.mxu0 0
    %725 = vmatprep.subr.bf16.mxu0 0
    %726 = vmatpush1.bf16.msra.mxu0 0
    %727 = vmatprep.subr.bf16.mxu0 0
    %728 = vmatpush1.bf16.msra.mxu0 0
    %729 = vmatprep.subr.bf16.mxu0 0
    %730 = vmatpush1.bf16.msra.mxu0 0
    %731 = vmatprep.subr.bf16.mxu0 0
    %732 = vmatpush1.bf16.msra.mxu0 0
    %733 = vmatprep.subr.bf16.mxu0 0
    %734 = vmatpush1.bf16.msra.mxu0 0
    %735 = vmatprep.subr.bf16.mxu0 0
    %736 = vmatpush1.bf16.msra.mxu0 0
    %737 = vmatprep.subr.bf16.mxu0 0
    %738 = vmatpush1.bf16.msra.mxu0 0
    %739 = vmatprep.mubr.bf16.mxu0 0
    %740 = vmatmul.mubr.bf16.gmra.mrb[0].mxu0 %v705
    %v741 = vpop.f32.mrb[0].mxu0
    %v742 = vadd.f32 0.0, %v741
    %v743 = vpop.f32.mrb[0].mxu0
    %v744 = vpop.f32.mrb[0].mxu0
    %v745 = vpop.f32.mrb[0].mxu0
    %746 = vdwg.mxu0
    %v747 = vadd.f32 %v695, %v742
    %v748 = vxor.u32 %v747, 2147483648
    %v749 = vmul.f32 %v748, 1.442695
    %v750 = vpow.pop %v749
    %v751 = vadd.f32 %v750, 1.0
    %v752 = vrcp.pop %v751
    %v753 = vmul.f32 1.0, %v752
    %v754 = vadd.f32 %v742, %v564
    %756 = vrot.lane.b32.xlu0 %v754, 64
    %v757 = vpop.permute.xlu0 %756
    %v759 = vmul.f32 %v753, %v757
    %761 = vrot.lane.b32.xlu0 %v759, 64
    %v762 = vpop.permute.xlu0 %761
    %v764 = vadd.f32 %v695, %v762
    %v765 = vtanh.pop %v764
    %v766 = vsub.f32 1.0, %v753
    %768 = vrot.lane.b32.xlu0 %v765, 96
    %v769 = vpop.permute.xlu0 %768
    %v771 = vmul.f32 %v766, %v769
    %v772 = vmul.f32 %v753, %v585
    %v773 = vadd.f32 %v771, %v772
    %v775 = vlaneseq
    %v776 = vshrl.u32 %v775, 7
    %v777 = vsub.s32 0, %v776
    %v778 = vrot.slane %v178, %v777
    %v784 = vunpack.c.l.b16 %v170
    %v785 = vunpack.c.l.b16 %v171
    %v786 = vunpack.c.l.b16 %v172
    %v787 = vunpack.c.l.b16 %v173
    %v788 = vpack.c.b16 %v785, %v784
    %v789 = vpack.c.b16 %v787, %v786
    %792 = vmatprep.subr.bf16.mxu0 0
    %793 = vmatpush1.bf16.msra.mxu0 %v788
    %794 = vmatprep.subr.bf16.mxu0 0
    %795 = vmatpush1.bf16.msra.mxu0 %v789
    %796 = vmatprep.subr.bf16.mxu0 0
    %797 = vmatpush1.bf16.msra.mxu0 0
    %798 = vmatprep.subr.bf16.mxu0 0
    %799 = vmatpush1.bf16.msra.mxu0 0
    %800 = vmatprep.subr.bf16.mxu0 0
    %801 = vmatpush1.bf16.msra.mxu0 0
    %802 = vmatprep.subr.bf16.mxu0 0
    %803 = vmatpush1.bf16.msra.mxu0 0
    %804 = vmatprep.subr.bf16.mxu0 0
    %805 = vmatpush1.bf16.msra.mxu0 0
    %806 = vmatprep.subr.bf16.mxu0 0
    %807 = vmatpush1.bf16.msra.mxu0 0
    %808 = vmatprep.subr.bf16.mxu0 0
    %809 = vmatpush1.bf16.msra.mxu0 0
    %810 = vmatprep.subr.bf16.mxu0 0
    %811 = vmatpush1.bf16.msra.mxu0 0
    %812 = vmatprep.subr.bf16.mxu0 0
    %813 = vmatpush1.bf16.msra.mxu0 0
    %814 = vmatprep.subr.bf16.mxu0 0
    %815 = vmatpush1.bf16.msra.mxu0 0
    %816 = vmatprep.subr.bf16.mxu0 0
    %817 = vmatpush1.bf16.msra.mxu0 0
    %818 = vmatprep.subr.bf16.mxu0 0
    %819 = vmatpush1.bf16.msra.mxu0 0
    %820 = vmatprep.subr.bf16.mxu0 0
    %821 = vmatpush1.bf16.msra.mxu0 0
    %822 = vmatprep.subr.bf16.mxu0 0
    %823 = vmatpush1.bf16.msra.mxu0 0
    %824 = vmatprep.mubr.bf16.mxu0 0
    %825 = vmatmul.mubr.bf16.gmra.mrb[0].mxu0 %v705
    %v826 = vpop.f32.mrb[0].mxu0
    %v827 = vadd.f32 %v778, %v826
    %v828 = vpop.f32.mrb[0].mxu0
    %v829 = vpop.f32.mrb[0].mxu0
    %v830 = vpop.f32.mrb[0].mxu0
    %831 = vdwg.mxu0
    %v836 = vunpack.c.l.b16 %v174
    %v837 = vunpack.c.l.b16 %v175
    %v838 = vunpack.c.l.b16 %v176
    %v839 = vunpack.c.l.b16 %v177
    %v840 = vpack.c.b16 %v837, %v836
    %v841 = vpack.c.b16 %v839, %v838
    %844 = vmatprep.subr.bf16.mxu0 0
    %845 = vmatpush1.bf16.msra.mxu0 %v840
    %846 = vmatprep.subr.bf16.mxu0 0
    %847 = vmatpush1.bf16.msra.mxu0 %v841
    %848 = vmatprep.subr.bf16.mxu0 0
    %849 = vmatpush1.bf16.msra.mxu0 0
    %850 = vmatprep.subr.bf16.mxu0 0
    %851 = vmatpush1.bf16.msra.mxu0 0
    %852 = vmatprep.subr.bf16.mxu0 0
    %853 = vmatpush1.bf16.msra.mxu0 0
    %854 = vmatprep.subr.bf16.mxu0 0
    %855 = vmatpush1.bf16.msra.mxu0 0
    %856 = vmatprep.subr.bf16.mxu0 0
    %857 = vmatpush1.bf16.msra.mxu0 0
    %858 = vmatprep.subr.bf16.mxu0 0
    %859 = vmatpush1.bf16.msra.mxu0 0
    %860 = vmatprep.subr.bf16.mxu0 0
    %861 = vmatpush1.bf16.msra.mxu0 0
    %862 = vmatprep.subr.bf16.mxu0 0
    %863 = vmatpush1.bf16.msra.mxu0 0
    %864 = vmatprep.subr.bf16.mxu0 0
    %865 = vmatpush1.bf16.msra.mxu0 0
    %866 = vmatprep.subr.bf16.mxu0 0
    %867 = vmatpush1.bf16.msra.mxu0 0
    %868 = vmatprep.subr.bf16.mxu0 0
    %869 = vmatpush1.bf16.msra.mxu0 0
    %870 = vmatprep.subr.bf16.mxu0 0
    %871 = vmatpush1.bf16.msra.mxu0 0
    %872 = vmatprep.subr.bf16.mxu0 0
    %873 = vmatpush1.bf16.msra.mxu0 0
    %874 = vmatprep.subr.bf16.mxu0 0
    %875 = vmatpush1.bf16.msra.mxu0 0
    %876 = vmatprep.mubr.bf16.mxu0 0
    %877 = vmatmul.mubr.bf16.gmra.mrb[0].mxu0 %v300
    %v878 = vpop.f32.mrb[0].mxu0
    %v879 = vadd.f32 0.0, %v878
    %v880 = vpop.f32.mrb[0].mxu0
    %v881 = vpop.f32.mrb[0].mxu0
    %v882 = vpop.f32.mrb[0].mxu0
    %883 = vdwg.mxu0
    %v884 = vadd.f32 %v827, %v879
    %v885 = vxor.u32 %v884, 2147483648
    %v886 = vmul.f32 %v885, 1.442695
    %v887 = vpow.pop %v886
    %v888 = vadd.f32 %v887, 1.0
    %v889 = vrcp.pop %v888
    %v890 = vmul.f32 1.0, %v889
    %891 = vrot.lane.b32.xlu0 %v184, 64
    %v892 = vpop.permute.xlu0 %891
    %v894 = vadd.f32 %v879, %v892
    %896 = vrot.lane.b32.xlu0 %v894, 64
    %v897 = vpop.permute.xlu0 %896
    %v899 = vmul.f32 %v890, %v897
    %901 = vrot.lane.b32.xlu0 %v899, 64
    %v902 = vpop.permute.xlu0 %901
    %v904 = vadd.f32 %v827, %v902
    %v905 = vtanh.pop %v904
    %v906 = vsub.f32 1.0, %v890
    %908 = vrot.lane.b32.xlu0 %v905, 96
    %v909 = vpop.permute.xlu0 %908
    %v911 = vmul.f32 %v906, %v909
    %v912 = vmul.f32 %v890, 0.0
    %v913 = vadd.f32 %v911, %v912
    %vm914 = vcmp.gt.s32.totalorder %v285, 0
    %v915 = vsel %vm914, 1, 0
    %916 = vset.pattern.permute.xlu0 0
    %917 = vperm.xlu0 %916, %v915
    %v918 = vpop.permute.xlu0 %917
    %vm919 = vcmp.eq.s32.totalorder %v918, 1
    %v920 = vsel %vm919, %v913, 0.0
    %v921 = vpack.c.bf16 %v659, %v659
    %923 = vrot.lane.b32.xlu0 %v921, 96
    %v924 = vpop.permute.xlu0 %923
    %v926 = vsel %vm298, %v924, 0
    %928 = vmatprep.subr.bf16.mxu0 0
    %929 = vmatpush1.bf16.msra.mxu0 %v294
    %930 = vmatprep.subr.bf16.mxu0 0
    %931 = vmatpush1.bf16.msra.mxu0 %v295
    %932 = vmatprep.subr.bf16.mxu0 0
    %933 = vmatpush1.bf16.msra.mxu0 0
    %934 = vmatprep.subr.bf16.mxu0 0
    %935 = vmatpush1.bf16.msra.mxu0 0
    %936 = vmatprep.subr.bf16.mxu0 0
    %937 = vmatpush1.bf16.msra.mxu0 0
    %938 = vmatprep.subr.bf16.mxu0 0
    %939 = vmatpush1.bf16.msra.mxu0 0
    %940 = vmatprep.subr.bf16.mxu0 0
    %941 = vmatpush1.bf16.msra.mxu0 0
    %942 = vmatprep.subr.bf16.mxu0 0
    %943 = vmatpush1.bf16.msra.mxu0 0
    %944 = vmatprep.subr.bf16.mxu0 0
    %945 = vmatpush1.bf16.msra.mxu0 0
    %946 = vmatprep.subr.bf16.mxu0 0
    %947 = vmatpush1.bf16.msra.mxu0 0
    %948 = vmatprep.subr.bf16.mxu0 0
    %949 = vmatpush1.bf16.msra.mxu0 0
    %950 = vmatprep.subr.bf16.mxu0 0
    %951 = vmatpush1.bf16.msra.mxu0 0
    %952 = vmatprep.subr.bf16.mxu0 0
    %953 = vmatpush1.bf16.msra.mxu0 0
    %954 = vmatprep.subr.bf16.mxu0 0
    %955 = vmatpush1.bf16.msra.mxu0 0
    %956 = vmatprep.subr.bf16.mxu0 0
    %957 = vmatpush1.bf16.msra.mxu0 0
    %958 = vmatprep.subr.bf16.mxu0 0
    %959 = vmatpush1.bf16.msra.mxu0 0
    %960 = vmatprep.mubr.bf16.mxu0 0
    %961 = vmatmul.mubr.bf16.gmra.mrb[0].mxu0 %v926
    %v962 = vpop.f32.mrb[0].mxu0
    %v963 = vadd.f32 0.0, %v962
    %v964 = vpop.f32.mrb[0].mxu0
    %v965 = vpop.f32.mrb[0].mxu0
    %v966 = vpop.f32.mrb[0].mxu0
    %967 = vdwg.mxu0
    %v968 = vadd.f32 %v266, %v963
    %v969 = vxor.u32 %v968, 2147483648
    %v970 = vmul.f32 %v969, 1.442695
    %v971 = vpow.pop %v970
    %v972 = vadd.f32 %v971, 1.0
    %v973 = vrcp.pop %v972
    %v974 = vmul.f32 1.0, %v973
    %v975 = vadd.f32 %v963, %v350
    %977 = vrot.lane.b32.xlu0 %v975, 64
    %v978 = vpop.permute.xlu0 %977
    %v980 = vmul.f32 %v974, %v978
    %982 = vrot.lane.b32.xlu0 %v980, 64
    %v983 = vpop.permute.xlu0 %982
    %v985 = vadd.f32 %v266, %v983
    %v986 = vtanh.pop %v985
    %v987 = vsub.f32 1.0, %v974
    %989 = vrot.lane.b32.xlu0 %v986, 96
    %v990 = vpop.permute.xlu0 %989
    %v992 = vmul.f32 %v987, %v990
    %v993 = vmul.f32 %v974, %v659
    %v994 = vadd.f32 %v992, %v993
    %995 = vmatprep.subr.bf16.mxu0 0
    %996 = vmatpush1.bf16.msra.mxu0 %v460
    %997 = vmatprep.subr.bf16.mxu0 0
    %998 = vmatpush1.bf16.msra.mxu0 %v461
    %999 = vmatprep.subr.bf16.mxu0 0
    %1000 = vmatpush1.bf16.msra.mxu0 0
    %1001 = vmatprep.subr.bf16.mxu0 0
    %1002 = vmatpush1.bf16.msra.mxu0 0
    %1003 = vmatprep.subr.bf16.mxu0 0
    %1004 = vmatpush1.bf16.msra.mxu0 0
    %1005 = vmatprep.subr.bf16.mxu0 0
    %1006 = vmatpush1.bf16.msra.mxu0 0
    %1007 = vmatprep.subr.bf16.mxu0 0
    %1008 = vmatpush1.bf16.msra.mxu0 0
    %1009 = vmatprep.subr.bf16.mxu0 0
    %1010 = vmatpush1.bf16.msra.mxu0 0
    %1011 = vmatprep.subr.bf16.mxu0 0
    %1012 = vmatpush1.bf16.msra.mxu0 0
    %1013 = vmatprep.subr.bf16.mxu0 0
    %1014 = vmatpush1.bf16.msra.mxu0 0
    %1015 = vmatprep.subr.bf16.mxu0 0
    %1016 = vmatpush1.bf16.msra.mxu0 0
    %1017 = vmatprep.subr.bf16.mxu0 0
    %1018 = vmatpush1.bf16.msra.mxu0 0
    %1019 = vmatprep.subr.bf16.mxu0 0
    %1020 = vmatpush1.bf16.msra.mxu0 0
    %1021 = vmatprep.subr.bf16.mxu0 0
    %1022 = vmatpush1.bf16.msra.mxu0 0
    %1023 = vmatprep.subr.bf16.mxu0 0
    %1024 = vmatpush1.bf16.msra.mxu0 0
    %1025 = vmatprep.subr.bf16.mxu0 0
    %1026 = vmatpush1.bf16.msra.mxu0 0
    %1027 = vmatprep.mubr.bf16.mxu0 0
    %1028 = vmatmul.mubr.bf16.gmra.mrb[0].mxu0 %v926
    %v1029 = vpop.f32.mrb[0].mxu0
    %v1030 = vadd.f32 %v450, %v1029
    %v1031 = vpop.f32.mrb[0].mxu0
    %v1032 = vpop.f32.mrb[0].mxu0
    %v1033 = vpop.f32.mrb[0].mxu0
    %1034 = vdwg.mxu0
    %v1035 = vpack.c.bf16 %v773, %v773
    %1037 = vrot.lane.b32.xlu0 %v1035, 96
    %v1038 = vpop.permute.xlu0 %1037
    %v1040 = vsel %vm298, %v1038, 0
    %1042 = vmatprep.subr.bf16.mxu0 0
    %1043 = vmatpush1.bf16.msra.mxu0 %v512
    %1044 = vmatprep.subr.bf16.mxu0 0
    %1045 = vmatpush1.bf16.msra.mxu0 %v513
    %1046 = vmatprep.subr.bf16.mxu0 0
    %1047 = vmatpush1.bf16.msra.mxu0 0
    %1048 = vmatprep.subr.bf16.mxu0 0
    %1049 = vmatpush1.bf16.msra.mxu0 0
    %1050 = vmatprep.subr.bf16.mxu0 0
    %1051 = vmatpush1.bf16.msra.mxu0 0
    %1052 = vmatprep.subr.bf16.mxu0 0
    %1053 = vmatpush1.bf16.msra.mxu0 0
    %1054 = vmatprep.subr.bf16.mxu0 0
    %1055 = vmatpush1.bf16.msra.mxu0 0
    %1056 = vmatprep.subr.bf16.mxu0 0
    %1057 = vmatpush1.bf16.msra.mxu0 0
    %1058 = vmatprep.subr.bf16.mxu0 0
    %1059 = vmatpush1.bf16.msra.mxu0 0
    %1060 = vmatprep.subr.bf16.mxu0 0
    %1061 = vmatpush1.bf16.msra.mxu0 0
    %1062 = vmatprep.subr.bf16.mxu0 0
    %1063 = vmatpush1.bf16.msra.mxu0 0
    %1064 = vmatprep.subr.bf16.mxu0 0
    %1065 = vmatpush1.bf16.msra.mxu0 0
    %1066 = vmatprep.subr.bf16.mxu0 0
    %1067 = vmatpush1.bf16.msra.mxu0 0
    %1068 = vmatprep.subr.bf16.mxu0 0
    %1069 = vmatpush1.bf16.msra.mxu0 0
    %1070 = vmatprep.subr.bf16.mxu0 0
    %1071 = vmatpush1.bf16.msra.mxu0 0
    %1072 = vmatprep.subr.bf16.mxu0 0
    %1073 = vmatpush1.bf16.msra.mxu0 0
    %1074 = vmatprep.mubr.bf16.mxu0 0
    %1075 = vmatmul.mubr.bf16.gmra.mrb[0].mxu0 %v1040
    %v1076 = vpop.f32.mrb[0].mxu0
    %v1077 = vadd.f32 0.0, %v1076
    %v1078 = vpop.f32.mrb[0].mxu0
    %v1079 = vpop.f32.mrb[0].mxu0
    %v1080 = vpop.f32.mrb[0].mxu0
    %1081 = vdwg.mxu0
    %v1082 = vadd.f32 %v1030, %v1077
    %v1083 = vxor.u32 %v1082, 2147483648
    %v1084 = vmul.f32 %v1083, 1.442695
    %v1085 = vpow.pop %v1084
    %v1086 = vadd.f32 %v1085, 1.0
    %v1087 = vrcp.pop %v1086
    %v1088 = vmul.f32 1.0, %v1087
    %v1089 = vadd.f32 %v1077, %v564
    %1091 = vrot.lane.b32.xlu0 %v1089, 64
    %v1092 = vpop.permute.xlu0 %1091
    %v1094 = vmul.f32 %v1088, %v1092
    %1096 = vrot.lane.b32.xlu0 %v1094, 64
    %v1097 = vpop.permute.xlu0 %1096
    %v1099 = vadd.f32 %v1030, %v1097
    %v1100 = vtanh.pop %v1099
    %v1101 = vsub.f32 1.0, %v1088
    %1103 = vrot.lane.b32.xlu0 %v1100, 96
    %v1104 = vpop.permute.xlu0 %1103
    %v1106 = vmul.f32 %v1101, %v1104
    %v1107 = vmul.f32 %v1088, %v773
    %v1108 = vadd.f32 %v1106, %v1107
    %1109 = vmatprep.subr.bf16.mxu0 0
    %1110 = vmatpush1.bf16.msra.mxu0 %v788
    %1111 = vmatprep.subr.bf16.mxu0 0
    %1112 = vmatpush1.bf16.msra.mxu0 %v789
    %1113 = vmatprep.subr.bf16.mxu0 0
    %1114 = vmatpush1.bf16.msra.mxu0 0
    %1115 = vmatprep.subr.bf16.mxu0 0
    %1116 = vmatpush1.bf16.msra.mxu0 0
    %1117 = vmatprep.subr.bf16.mxu0 0
    %1118 = vmatpush1.bf16.msra.mxu0 0
    %1119 = vmatprep.subr.bf16.mxu0 0
    %1120 = vmatpush1.bf16.msra.mxu0 0
    %1121 = vmatprep.subr.bf16.mxu0 0
    %1122 = vmatpush1.bf16.msra.mxu0 0
    %1123 = vmatprep.subr.bf16.mxu0 0
    %1124 = vmatpush1.bf16.msra.mxu0 0
    %1125 = vmatprep.subr.bf16.mxu0 0
    %1126 = vmatpush1.bf16.msra.mxu0 0
    %1127 = vmatprep.subr.bf16.mxu0 0
    %1128 = vmatpush1.bf16.msra.mxu0 0
    %1129 = vmatprep.subr.bf16.mxu0 0
    %1130 = vmatpush1.bf16.msra.mxu0 0
    %1131 = vmatprep.subr.bf16.mxu0 0
    %1132 = vmatpush1.bf16.msra.mxu0 0
    %1133 = vmatprep.subr.bf16.mxu0 0
    %1134 = vmatpush1.bf16.msra.mxu0 0
    %1135 = vmatprep.subr.bf16.mxu0 0
    %1136 = vmatpush1.bf16.msra.mxu0 0
    %1137 = vmatprep.subr.bf16.mxu0 0
    %1138 = vmatpush1.bf16.msra.mxu0 0
    %1139 = vmatprep.subr.bf16.mxu0 0
    %1140 = vmatpush1.bf16.msra.mxu0 0
    %1141 = vmatprep.mubr.bf16.mxu0 0
    %1142 = vmatmul.mubr.bf16.gmra.mrb[0].mxu0 %v1040
    %v1143 = vpop.f32.mrb[0].mxu0
    %v1144 = vadd.f32 %v778, %v1143
    %v1145 = vpop.f32.mrb[0].mxu0
    %v1146 = vpop.f32.mrb[0].mxu0
    %v1147 = vpop.f32.mrb[0].mxu0
    %1148 = vdwg.mxu0
    %v1149 = vpack.c.bf16 %v913, %v913
    %1151 = vrot.lane.b32.xlu0 %v1149, 96
    %v1152 = vpop.permute.xlu0 %1151
    %v1154 = vsel %vm298, %v1152, 0
    %1156 = vmatprep.subr.bf16.mxu0 0
    %1157 = vmatpush1.bf16.msra.mxu0 %v840
    %1158 = vmatprep.subr.bf16.mxu0 0
    %1159 = vmatpush1.bf16.msra.mxu0 %v841
    %1160 = vmatprep.subr.bf16.mxu0 0
    %1161 = vmatpush1.bf16.msra.mxu0 0
    %1162 = vmatprep.subr.bf16.mxu0 0
    %1163 = vmatpush1.bf16.msra.mxu0 0
    %1164 = vmatprep.subr.bf16.mxu0 0
    %1165 = vmatpush1.bf16.msra.mxu0 0
    %1166 = vmatprep.subr.bf16.mxu0 0
    %1167 = vmatpush1.bf16.msra.mxu0 0
    %1168 = vmatprep.subr.bf16.mxu0 0
    %1169 = vmatpush1.bf16.msra.mxu0 0
    %1170 = vmatprep.subr.bf16.mxu0 0
    %1171 = vmatpush1.bf16.msra.mxu0 0
    %1172 = vmatprep.subr.bf16.mxu0 0
    %1173 = vmatpush1.bf16.msra.mxu0 0
    %1174 = vmatprep.subr.bf16.mxu0 0
    %1175 = vmatpush1.bf16.msra.mxu0 0
    %1176 = vmatprep.subr.bf16.mxu0 0
    %1177 = vmatpush1.bf16.msra.mxu0 0
    %1178 = vmatprep.subr.bf16.mxu0 0
    %1179 = vmatpush1.bf16.msra.mxu0 0
    %1180 = vmatprep.subr.bf16.mxu0 0
    %1181 = vmatpush1.bf16.msra.mxu0 0
    %1182 = vmatprep.subr.bf16.mxu0 0
    %1183 = vmatpush1.bf16.msra.mxu0 0
    %1184 = vmatprep.subr.bf16.mxu0 0
    %1185 = vmatpush1.bf16.msra.mxu0 0
    %1186 = vmatprep.subr.bf16.mxu0 0
    %1187 = vmatpush1.bf16.msra.mxu0 0
    %1188 = vmatprep.mubr.bf16.mxu0 0
    %1189 = vmatmul.mubr.bf16.gmra.mrb[0].mxu0 %v1154
    %v1190 = vpop.f32.mrb[0].mxu0
    %v1191 = vadd.f32 0.0, %v1190
    %v1192 = vpop.f32.mrb[0].mxu0
    %v1193 = vpop.f32.mrb[0].mxu0
    %v1194 = vpop.f32.mrb[0].mxu0
    %1195 = vdwg.mxu0
    %v1196 = vadd.f32 %v1144, %v1191
    %v1197 = vxor.u32 %v1196, 2147483648
    %v1198 = vmul.f32 %v1197, 1.442695
    %v1199 = vpow.pop %v1198
    %v1200 = vadd.f32 %v1199, 1.0
    %v1201 = vrcp.pop %v1200
    %v1202 = vmul.f32 1.0, %v1201
    %v1203 = vadd.f32 %v1191, %v892
    %1205 = vrot.lane.b32.xlu0 %v1203, 64
    %v1206 = vpop.permute.xlu0 %1205
    %v1208 = vmul.f32 %v1202, %v1206
    %1210 = vrot.lane.b32.xlu0 %v1208, 64
    %v1211 = vpop.permute.xlu0 %1210
    %v1213 = vadd.f32 %v1144, %v1211
    %v1214 = vtanh.pop %v1213
    %v1215 = vsub.f32 1.0, %v1202
    %1217 = vrot.lane.b32.xlu0 %v1214, 96
    %v1218 = vpop.permute.xlu0 %1217
    %v1220 = vmul.f32 %v1215, %v1218
    %v1221 = vmul.f32 %v1202, %v913
    %v1222 = vadd.f32 %v1220, %v1221
    %vm1223 = vcmp.gt.s32.totalorder %v285, 1
    %v1224 = vsel %vm1223, 1, 0
    %1225 = vset.pattern.permute.xlu0 0
    %1226 = vperm.xlu0 %1225, %v1224
    %v1227 = vpop.permute.xlu0 %1226
    %vm1228 = vcmp.eq.s32.totalorder %v1227, 1
    %v1229 = vsel %vm1228, %v1222, 0.0
    %v1230 = vpack.c.bf16 %v994, %v994
    %1232 = vrot.lane.b32.xlu0 %v1230, 96
    %v1233 = vpop.permute.xlu0 %1232
    %v1235 = vsel %vm298, %v1233, 0
    %1237 = vmatprep.subr.bf16.mxu0 0
    %1238 = vmatpush1.bf16.msra.mxu0 %v294
    %1239 = vmatprep.subr.bf16.mxu0 0
    %1240 = vmatpush1.bf16.msra.mxu0 %v295
    %1241 = vmatprep.subr.bf16.mxu0 0
    %1242 = vmatpush1.bf16.msra.mxu0 0
    %1243 = vmatprep.subr.bf16.mxu0 0
    %1244 = vmatpush1.bf16.msra.mxu0 0
    %1245 = vmatprep.subr.bf16.mxu0 0
    %1246 = vmatpush1.bf16.msra.mxu0 0
    %1247 = vmatprep.subr.bf16.mxu0 0
    %1248 = vmatpush1.bf16.msra.mxu0 0
    %1249 = vmatprep.subr.bf16.mxu0 0
    %1250 = vmatpush1.bf16.msra.mxu0 0
    %1251 = vmatprep.subr.bf16.mxu0 0
    %1252 = vmatpush1.bf16.msra.mxu0 0
    %1253 = vmatprep.subr.bf16.mxu0 0
    %1254 = vmatpush1.bf16.msra.mxu0 0
    %1255 = vmatprep.subr.bf16.mxu0 0
    %1256 = vmatpush1.bf16.msra.mxu0 0
    %1257 = vmatprep.subr.bf16.mxu0 0
    %1258 = vmatpush1.bf16.msra.mxu0 0
    %1259 = vmatprep.subr.bf16.mxu0 0
    %1260 = vmatpush1.bf16.msra.mxu0 0
    %1261 = vmatprep.subr.bf16.mxu0 0
    %1262 = vmatpush1.bf16.msra.mxu0 0
    %1263 = vmatprep.subr.bf16.mxu0 0
    %1264 = vmatpush1.bf16.msra.mxu0 0
    %1265 = vmatprep.subr.bf16.mxu0 0
    %1266 = vmatpush1.bf16.msra.mxu0 0
    %1267 = vmatprep.subr.bf16.mxu0 0
    %1268 = vmatpush1.bf16.msra.mxu0 0
    %1269 = vmatprep.mubr.bf16.mxu0 0
    %1270 = vmatmul.mubr.bf16.gmra.mrb[0].mxu0 %v1235
    %v1271 = vpop.f32.mrb[0].mxu0
    %v1272 = vadd.f32 0.0, %v1271
    %v1273 = vpop.f32.mrb[0].mxu0
    %v1274 = vpop.f32.mrb[0].mxu0
    %v1275 = vpop.f32.mrb[0].mxu0
    %1276 = vdwg.mxu0
    %v1277 = vadd.f32 %v271, %v1272
    %v1278 = vxor.u32 %v1277, 2147483648
    %v1279 = vmul.f32 %v1278, 1.442695
    %v1280 = vpow.pop %v1279
    %v1281 = vadd.f32 %v1280, 1.0
    %v1282 = vrcp.pop %v1281
    %v1283 = vmul.f32 1.0, %v1282
    %v1284 = vadd.f32 %v1272, %v350
    %1286 = vrot.lane.b32.xlu0 %v1284, 64
    %v1287 = vpop.permute.xlu0 %1286
    %v1289 = vmul.f32 %v1283, %v1287
    %1291 = vrot.lane.b32.xlu0 %v1289, 64
    %v1292 = vpop.permute.xlu0 %1291
    %v1294 = vadd.f32 %v271, %v1292
    %v1295 = vtanh.pop %v1294
    %v1296 = vsub.f32 1.0, %v1283
    %1298 = vrot.lane.b32.xlu0 %v1295, 96
    %v1299 = vpop.permute.xlu0 %1298
    %v1301 = vmul.f32 %v1296, %v1299
    %v1302 = vmul.f32 %v1283, %v994
    %v1303 = vadd.f32 %v1301, %v1302
    %1304 = vmatprep.subr.bf16.mxu0 0
    %1305 = vmatpush1.bf16.msra.mxu0 %v460
    %1306 = vmatprep.subr.bf16.mxu0 0
    %1307 = vmatpush1.bf16.msra.mxu0 %v461
    %1308 = vmatprep.subr.bf16.mxu0 0
    %1309 = vmatpush1.bf16.msra.mxu0 0
    %1310 = vmatprep.subr.bf16.mxu0 0
    %1311 = vmatpush1.bf16.msra.mxu0 0
    %1312 = vmatprep.subr.bf16.mxu0 0
    %1313 = vmatpush1.bf16.msra.mxu0 0
    %1314 = vmatprep.subr.bf16.mxu0 0
    %1315 = vmatpush1.bf16.msra.mxu0 0
    %1316 = vmatprep.subr.bf16.mxu0 0
    %1317 = vmatpush1.bf16.msra.mxu0 0
    %1318 = vmatprep.subr.bf16.mxu0 0
    %1319 = vmatpush1.bf16.msra.mxu0 0
    %1320 = vmatprep.subr.bf16.mxu0 0
    %1321 = vmatpush1.bf16.msra.mxu0 0
    %1322 = vmatprep.subr.bf16.mxu0 0
    %1323 = vmatpush1.bf16.msra.mxu0 0
    %1324 = vmatprep.subr.bf16.mxu0 0
    %1325 = vmatpush1.bf16.msra.mxu0 0
    %1326 = vmatprep.subr.bf16.mxu0 0
    %1327 = vmatpush1.bf16.msra.mxu0 0
    %1328 = vmatprep.subr.bf16.mxu0 0
    %1329 = vmatpush1.bf16.msra.mxu0 0
    %1330 = vmatprep.subr.bf16.mxu0 0
    %1331 = vmatpush1.bf16.msra.mxu0 0
    %1332 = vmatprep.subr.bf16.mxu0 0
    %1333 = vmatpush1.bf16.msra.mxu0 0
    %1334 = vmatprep.subr.bf16.mxu0 0
    %1335 = vmatpush1.bf16.msra.mxu0 0
    %1336 = vmatprep.mubr.bf16.mxu0 0
    %1337 = vmatmul.mubr.bf16.gmra.mrb[0].mxu0 %v1235
    %v1338 = vpop.f32.mrb[0].mxu0
    %v1339 = vadd.f32 %v450, %v1338
    %v1340 = vpop.f32.mrb[0].mxu0
    %v1341 = vpop.f32.mrb[0].mxu0
    %v1342 = vpop.f32.mrb[0].mxu0
    %1343 = vdwg.mxu0
    %v1344 = vpack.c.bf16 %v1108, %v1108
    %1346 = vrot.lane.b32.xlu0 %v1344, 96
    %v1347 = vpop.permute.xlu0 %1346
    %v1349 = vsel %vm298, %v1347, 0
    %1351 = vmatprep.subr.bf16.mxu0 0
    %1352 = vmatpush1.bf16.msra.mxu0 %v512
    %1353 = vmatprep.subr.bf16.mxu0 0
    %1354 = vmatpush1.bf16.msra.mxu0 %v513
    %1355 = vmatprep.subr.bf16.mxu0 0
    %1356 = vmatpush1.bf16.msra.mxu0 0
    %1357 = vmatprep.subr.bf16.mxu0 0
    %1358 = vmatpush1.bf16.msra.mxu0 0
    %1359 = vmatprep.subr.bf16.mxu0 0
    %1360 = vmatpush1.bf16.msra.mxu0 0
    %1361 = vmatprep.subr.bf16.mxu0 0
    %1362 = vmatpush1.bf16.msra.mxu0 0
    %1363 = vmatprep.subr.bf16.mxu0 0
    %1364 = vmatpush1.bf16.msra.mxu0 0
    %1365 = vmatprep.subr.bf16.mxu0 0
    %1366 = vmatpush1.bf16.msra.mxu0 0
    %1367 = vmatprep.subr.bf16.mxu0 0
    %1368 = vmatpush1.bf16.msra.mxu0 0
    %1369 = vmatprep.subr.bf16.mxu0 0
    %1370 = vmatpush1.bf16.msra.mxu0 0
    %1371 = vmatprep.subr.bf16.mxu0 0
    %1372 = vmatpush1.bf16.msra.mxu0 0
    %1373 = vmatprep.subr.bf16.mxu0 0
    %1374 = vmatpush1.bf16.msra.mxu0 0
    %1375 = vmatprep.subr.bf16.mxu0 0
    %1376 = vmatpush1.bf16.msra.mxu0 0
    %1377 = vmatprep.subr.bf16.mxu0 0
    %1378 = vmatpush1.bf16.msra.mxu0 0
    %1379 = vmatprep.subr.bf16.mxu0 0
    %1380 = vmatpush1.bf16.msra.mxu0 0
    %1381 = vmatprep.subr.bf16.mxu0 0
    %1382 = vmatpush1.bf16.msra.mxu0 0
    %1383 = vmatprep.mubr.bf16.mxu0 0
    %1384 = vmatmul.mubr.bf16.gmra.mrb[0].mxu0 %v1349
    %v1385 = vpop.f32.mrb[0].mxu0
    %v1386 = vadd.f32 0.0, %v1385
    %v1387 = vpop.f32.mrb[0].mxu0
    %v1388 = vpop.f32.mrb[0].mxu0
    %v1389 = vpop.f32.mrb[0].mxu0
    %1390 = vdwg.mxu0
    %v1391 = vadd.f32 %v1339, %v1386
    %v1392 = vxor.u32 %v1391, 2147483648
    %v1393 = vmul.f32 %v1392, 1.442695
    %v1394 = vpow.pop %v1393
    %v1395 = vadd.f32 %v1394, 1.0
    %v1396 = vrcp.pop %v1395
    %v1397 = vmul.f32 1.0, %v1396
    %v1398 = vadd.f32 %v1386, %v564
    %1400 = vrot.lane.b32.xlu0 %v1398, 64
    %v1401 = vpop.permute.xlu0 %1400
    %v1403 = vmul.f32 %v1397, %v1401
    %1405 = vrot.lane.b32.xlu0 %v1403, 64
    %v1406 = vpop.permute.xlu0 %1405
    %v1408 = vadd.f32 %v1339, %v1406
    %v1409 = vtanh.pop %v1408
    %v1410 = vsub.f32 1.0, %v1397
    %1412 = vrot.lane.b32.xlu0 %v1409, 96
    %v1413 = vpop.permute.xlu0 %1412
    %v1415 = vmul.f32 %v1410, %v1413
    %v1416 = vmul.f32 %v1397, %v1108
    %v1417 = vadd.f32 %v1415, %v1416
    %1418 = vmatprep.subr.bf16.mxu0 0
    %1419 = vmatpush1.bf16.msra.mxu0 %v788
    %1420 = vmatprep.subr.bf16.mxu0 0
    %1421 = vmatpush1.bf16.msra.mxu0 %v789
    %1422 = vmatprep.subr.bf16.mxu0 0
    %1423 = vmatpush1.bf16.msra.mxu0 0
    %1424 = vmatprep.subr.bf16.mxu0 0
    %1425 = vmatpush1.bf16.msra.mxu0 0
    %1426 = vmatprep.subr.bf16.mxu0 0
    %1427 = vmatpush1.bf16.msra.mxu0 0
    %1428 = vmatprep.subr.bf16.mxu0 0
    %1429 = vmatpush1.bf16.msra.mxu0 0
    %1430 = vmatprep.subr.bf16.mxu0 0
    %1431 = vmatpush1.bf16.msra.mxu0 0
    %1432 = vmatprep.subr.bf16.mxu0 0
    %1433 = vmatpush1.bf16.msra.mxu0 0
    %1434 = vmatprep.subr.bf16.mxu0 0
    %1435 = vmatpush1.bf16.msra.mxu0 0
    %1436 = vmatprep.subr.bf16.mxu0 0
    %1437 = vmatpush1.bf16.msra.mxu0 0
    %1438 = vmatprep.subr.bf16.mxu0 0
    %1439 = vmatpush1.bf16.msra.mxu0 0
    %1440 = vmatprep.subr.bf16.mxu0 0
    %1441 = vmatpush1.bf16.msra.mxu0 0
    %1442 = vmatprep.subr.bf16.mxu0 0
    %1443 = vmatpush1.bf16.msra.mxu0 0
    %1444 = vmatprep.subr.bf16.mxu0 0
    %1445 = vmatpush1.bf16.msra.mxu0 0
    %1446 = vmatprep.subr.bf16.mxu0 0
    %1447 = vmatpush1.bf16.msra.mxu0 0
    %1448 = vmatprep.subr.bf16.mxu0 0
    %1449 = vmatpush1.bf16.msra.mxu0 0
    %1450 = vmatprep.mubr.bf16.mxu0 0
    %1451 = vmatmul.mubr.bf16.gmra.mrb[0].mxu0 %v1349
    %v1452 = vpop.f32.mrb[0].mxu0
    %v1453 = vadd.f32 %v778, %v1452
    %v1454 = vpop.f32.mrb[0].mxu0
    %v1455 = vpop.f32.mrb[0].mxu0
    %v1456 = vpop.f32.mrb[0].mxu0
    %1457 = vdwg.mxu0
    %v1458 = vpack.c.bf16 %v1222, %v1222
    %1460 = vrot.lane.b32.xlu0 %v1458, 96
    %v1461 = vpop.permute.xlu0 %1460
    %v1463 = vsel %vm298, %v1461, 0
    %1465 = vmatprep.subr.bf16.mxu0 0
    %1466 = vmatpush1.bf16.msra.mxu0 %v840
    %1467 = vmatprep.subr.bf16.mxu0 0
    %1468 = vmatpush1.bf16.msra.mxu0 %v841
    %1469 = vmatprep.subr.bf16.mxu0 0
    %1470 = vmatpush1.bf16.msra.mxu0 0
    %1471 = vmatprep.subr.bf16.mxu0 0
    %1472 = vmatpush1.bf16.msra.mxu0 0
    %1473 = vmatprep.subr.bf16.mxu0 0
    %1474 = vmatpush1.bf16.msra.mxu0 0
    %1475 = vmatprep.subr.bf16.mxu0 0
    %1476 = vmatpush1.bf16.msra.mxu0 0
    %1477 = vmatprep.subr.bf16.mxu0 0
    %1478 = vmatpush1.bf16.msra.mxu0 0
    %1479 = vmatprep.subr.bf16.mxu0 0
    %1480 = vmatpush1.bf16.msra.mxu0 0
    %1481 = vmatprep.subr.bf16.mxu0 0
    %1482 = vmatpush1.bf16.msra.mxu0 0
    %1483 = vmatprep.subr.bf16.mxu0 0
    %1484 = vmatpush1.bf16.msra.mxu0 0
    %1485 = vmatprep.subr.bf16.mxu0 0
    %1486 = vmatpush1.bf16.msra.mxu0 0
    %1487 = vmatprep.subr.bf16.mxu0 0
    %1488 = vmatpush1.bf16.msra.mxu0 0
    %1489 = vmatprep.subr.bf16.mxu0 0
    %1490 = vmatpush1.bf16.msra.mxu0 0
    %1491 = vmatprep.subr.bf16.mxu0 0
    %1492 = vmatpush1.bf16.msra.mxu0 0
    %1493 = vmatprep.subr.bf16.mxu0 0
    %1494 = vmatpush1.bf16.msra.mxu0 0
    %1495 = vmatprep.subr.bf16.mxu0 0
    %1496 = vmatpush1.bf16.msra.mxu0 0
    %1497 = vmatprep.mubr.bf16.mxu0 0
    %1498 = vmatmul.mubr.bf16.gmra.mrb[0].mxu0 %v1463
    %v1499 = vpop.f32.mrb[0].mxu0
    %v1500 = vadd.f32 0.0, %v1499
    %v1501 = vpop.f32.mrb[0].mxu0
    %v1502 = vpop.f32.mrb[0].mxu0
    %v1503 = vpop.f32.mrb[0].mxu0
    %1504 = vdwg.mxu0
    %v1505 = vadd.f32 %v1453, %v1500
    %v1506 = vxor.u32 %v1505, 2147483648
    %v1507 = vmul.f32 %v1506, 1.442695
    %v1508 = vpow.pop %v1507
    %v1509 = vadd.f32 %v1508, 1.0
    %v1510 = vrcp.pop %v1509
    %v1511 = vmul.f32 1.0, %v1510
    %v1512 = vadd.f32 %v1500, %v892
    %1514 = vrot.lane.b32.xlu0 %v1512, 64
    %v1515 = vpop.permute.xlu0 %1514
    %v1517 = vmul.f32 %v1511, %v1515
    %1519 = vrot.lane.b32.xlu0 %v1517, 64
    %v1520 = vpop.permute.xlu0 %1519
    %v1522 = vadd.f32 %v1453, %v1520
    %v1523 = vtanh.pop %v1522
    %v1524 = vsub.f32 1.0, %v1511
    %1526 = vrot.lane.b32.xlu0 %v1523, 96
    %v1527 = vpop.permute.xlu0 %1526
    %v1529 = vmul.f32 %v1524, %v1527
    %v1530 = vmul.f32 %v1511, %v1222
    %v1531 = vadd.f32 %v1529, %v1530
    %vm1532 = vcmp.gt.s32.totalorder %v285, 2
    %v1533 = vsel %vm1532, 1, 0
    %1534 = vset.pattern.permute.xlu0 0
    %1535 = vperm.xlu0 %1534, %v1533
    %v1536 = vpop.permute.xlu0 %1535
    %vm1537 = vcmp.eq.s32.totalorder %v1536, 1
    %v1538 = vsel %vm1537, %v1531, 0.0
    %v1539 = vpack.c.bf16 %v1303, %v1303
    %1541 = vrot.lane.b32.xlu0 %v1539, 96
    %v1542 = vpop.permute.xlu0 %1541
    %v1544 = vsel %vm298, %v1542, 0
    %1546 = vmatprep.subr.bf16.mxu0 0
    %1547 = vmatpush1.bf16.msra.mxu0 %v294
    %1548 = vmatprep.subr.bf16.mxu0 0
    %1549 = vmatpush1.bf16.msra.mxu0 %v295
    %1550 = vmatprep.subr.bf16.mxu0 0
    %1551 = vmatpush1.bf16.msra.mxu0 0
    %1552 = vmatprep.subr.bf16.mxu0 0
    %1553 = vmatpush1.bf16.msra.mxu0 0
    %1554 = vmatprep.subr.bf16.mxu0 0
    %1555 = vmatpush1.bf16.msra.mxu0 0
    %1556 = vmatprep.subr.bf16.mxu0 0
    %1557 = vmatpush1.bf16.msra.mxu0 0
    %1558 = vmatprep.subr.bf16.mxu0 0
    %1559 = vmatpush1.bf16.msra.mxu0 0
    %1560 = vmatprep.subr.bf16.mxu0 0
    %1561 = vmatpush1.bf16.msra.mxu0 0
    %1562 = vmatprep.subr.bf16.mxu0 0
    %1563 = vmatpush1.bf16.msra.mxu0 0
    %1564 = vmatprep.subr.bf16.mxu0 0
    %1565 = vmatpush1.bf16.msra.mxu0 0
    %1566 = vmatprep.subr.bf16.mxu0 0
    %1567 = vmatpush1.bf16.msra.mxu0 0
    %1568 = vmatprep.subr.bf16.mxu0 0
    %1569 = vmatpush1.bf16.msra.mxu0 0
    %1570 = vmatprep.subr.bf16.mxu0 0
    %1571 = vmatpush1.bf16.msra.mxu0 0
    %1572 = vmatprep.subr.bf16.mxu0 0
    %1573 = vmatpush1.bf16.msra.mxu0 0
    %1574 = vmatprep.subr.bf16.mxu0 0
    %1575 = vmatpush1.bf16.msra.mxu0 0
    %1576 = vmatprep.subr.bf16.mxu0 0
    %1577 = vmatpush1.bf16.msra.mxu0 0
    %1578 = vmatprep.mubr.bf16.mxu0 0
    %1579 = vmatmul.mubr.bf16.gmra.mrb[0].mxu0 %v1544
    %v1580 = vpop.f32.mrb[0].mxu0
    %v1581 = vadd.f32 0.0, %v1580
    %v1582 = vpop.f32.mrb[0].mxu0
    %v1583 = vpop.f32.mrb[0].mxu0
    %v1584 = vpop.f32.mrb[0].mxu0
    %1585 = vdwg.mxu0
    %v1586 = vadd.f32 %v274, %v1581
    %v1587 = vxor.u32 %v1586, 2147483648
    %v1588 = vmul.f32 %v1587, 1.442695
    %v1589 = vpow.pop %v1588
    %v1590 = vadd.f32 %v1589, 1.0
    %v1591 = vrcp.pop %v1590
    %v1592 = vmul.f32 1.0, %v1591
    %v1593 = vadd.f32 %v1581, %v350
    %1595 = vrot.lane.b32.xlu0 %v1593, 64
    %v1596 = vpop.permute.xlu0 %1595
    %v1598 = vmul.f32 %v1592, %v1596
    %1600 = vrot.lane.b32.xlu0 %v1598, 64
    %v1601 = vpop.permute.xlu0 %1600
    %v1603 = vadd.f32 %v274, %v1601
    %v1604 = vtanh.pop %v1603
    %v1605 = vsub.f32 1.0, %v1592
    %1607 = vrot.lane.b32.xlu0 %v1604, 96
    %v1608 = vpop.permute.xlu0 %1607
    %v1610 = vmul.f32 %v1605, %v1608
    %v1611 = vmul.f32 %v1592, %v1303
    %v1612 = vadd.f32 %v1610, %v1611
    %1613 = vmatprep.subr.bf16.mxu0 0
    %1614 = vmatpush1.bf16.msra.mxu0 %v460
    %1615 = vmatprep.subr.bf16.mxu0 0
    %1616 = vmatpush1.bf16.msra.mxu0 %v461
    %1617 = vmatprep.subr.bf16.mxu0 0
    %1618 = vmatpush1.bf16.msra.mxu0 0
    %1619 = vmatprep.subr.bf16.mxu0 0
    %1620 = vmatpush1.bf16.msra.mxu0 0
    %1621 = vmatprep.subr.bf16.mxu0 0
    %1622 = vmatpush1.bf16.msra.mxu0 0
    %1623 = vmatprep.subr.bf16.mxu0 0
    %1624 = vmatpush1.bf16.msra.mxu0 0
    %1625 = vmatprep.subr.bf16.mxu0 0
    %1626 = vmatpush1.bf16.msra.mxu0 0
    %1627 = vmatprep.subr.bf16.mxu0 0
    %1628 = vmatpush1.bf16.msra.mxu0 0
    %1629 = vmatprep.subr.bf16.mxu0 0
    %1630 = vmatpush1.bf16.msra.mxu0 0
    %1631 = vmatprep.subr.bf16.mxu0 0
    %1632 = vmatpush1.bf16.msra.mxu0 0
    %1633 = vmatprep.subr.bf16.mxu0 0
    %1634 = vmatpush1.bf16.msra.mxu0 0
    %1635 = vmatprep.subr.bf16.mxu0 0
    %1636 = vmatpush1.bf16.msra.mxu0 0
    %1637 = vmatprep.subr.bf16.mxu0 0
    %1638 = vmatpush1.bf16.msra.mxu0 0
    %1639 = vmatprep.subr.bf16.mxu0 0
    %1640 = vmatpush1.bf16.msra.mxu0 0
    %1641 = vmatprep.subr.bf16.mxu0 0
    %1642 = vmatpush1.bf16.msra.mxu0 0
    %1643 = vmatprep.subr.bf16.mxu0 0
    %1644 = vmatpush1.bf16.msra.mxu0 0
    %1645 = vmatprep.mubr.bf16.mxu0 0
    %1646 = vmatmul.mubr.bf16.gmra.mrb[0].mxu0 %v1544
    %v1647 = vpop.f32.mrb[0].mxu0
    %v1648 = vadd.f32 %v450, %v1647
    %v1649 = vpop.f32.mrb[0].mxu0
    %v1650 = vpop.f32.mrb[0].mxu0
    %v1651 = vpop.f32.mrb[0].mxu0
    %1652 = vdwg.mxu0
    %v1653 = vpack.c.bf16 %v1417, %v1417
    %1655 = vrot.lane.b32.xlu0 %v1653, 96
    %v1656 = vpop.permute.xlu0 %1655
    %v1658 = vsel %vm298, %v1656, 0
    %1660 = vmatprep.subr.bf16.mxu0 0
    %1661 = vmatpush1.bf16.msra.mxu0 %v512
    %1662 = vmatprep.subr.bf16.mxu0 0
    %1663 = vmatpush1.bf16.msra.mxu0 %v513
    %1664 = vmatprep.subr.bf16.mxu0 0
    %1665 = vmatpush1.bf16.msra.mxu0 0
    %1666 = vmatprep.subr.bf16.mxu0 0
    %1667 = vmatpush1.bf16.msra.mxu0 0
    %1668 = vmatprep.subr.bf16.mxu0 0
    %1669 = vmatpush1.bf16.msra.mxu0 0
    %1670 = vmatprep.subr.bf16.mxu0 0
    %1671 = vmatpush1.bf16.msra.mxu0 0
    %1672 = vmatprep.subr.bf16.mxu0 0
    %1673 = vmatpush1.bf16.msra.mxu0 0
    %1674 = vmatprep.subr.bf16.mxu0 0
    %1675 = vmatpush1.bf16.msra.mxu0 0
    %1676 = vmatprep.subr.bf16.mxu0 0
    %1677 = vmatpush1.bf16.msra.mxu0 0
    %1678 = vmatprep.subr.bf16.mxu0 0
    %1679 = vmatpush1.bf16.msra.mxu0 0
    %1680 = vmatprep.subr.bf16.mxu0 0
    %1681 = vmatpush1.bf16.msra.mxu0 0
    %1682 = vmatprep.subr.bf16.mxu0 0
    %1683 = vmatpush1.bf16.msra.mxu0 0
    %1684 = vmatprep.subr.bf16.mxu0 0
    %1685 = vmatpush1.bf16.msra.mxu0 0
    %1686 = vmatprep.subr.bf16.mxu0 0
    %1687 = vmatpush1.bf16.msra.mxu0 0
    %1688 = vmatprep.subr.bf16.mxu0 0
    %1689 = vmatpush1.bf16.msra.mxu0 0
    %1690 = vmatprep.subr.bf16.mxu0 0
    %1691 = vmatpush1.bf16.msra.mxu0 0
    %1692 = vmatprep.mubr.bf16.mxu0 0
    %1693 = vmatmul.mubr.bf16.gmra.mrb[0].mxu0 %v1658
    %v1694 = vpop.f32.mrb[0].mxu0
    %v1695 = vadd.f32 0.0, %v1694
    %v1696 = vpop.f32.mrb[0].mxu0
    %v1697 = vpop.f32.mrb[0].mxu0
    %v1698 = vpop.f32.mrb[0].mxu0
    %1699 = vdwg.mxu0
    %v1700 = vadd.f32 %v1648, %v1695
    %v1701 = vxor.u32 %v1700, 2147483648
    %v1702 = vmul.f32 %v1701, 1.442695
    %v1703 = vpow.pop %v1702
    %v1704 = vadd.f32 %v1703, 1.0
    %v1705 = vrcp.pop %v1704
    %v1706 = vmul.f32 1.0, %v1705
    %v1707 = vadd.f32 %v1695, %v564
    %1709 = vrot.lane.b32.xlu0 %v1707, 64
    %v1710 = vpop.permute.xlu0 %1709
    %v1712 = vmul.f32 %v1706, %v1710
    %1714 = vrot.lane.b32.xlu0 %v1712, 64
    %v1715 = vpop.permute.xlu0 %1714
    %v1717 = vadd.f32 %v1648, %v1715
    %v1718 = vtanh.pop %v1717
    %v1719 = vsub.f32 1.0, %v1706
    %1721 = vrot.lane.b32.xlu0 %v1718, 96
    %v1722 = vpop.permute.xlu0 %1721
    %v1724 = vmul.f32 %v1719, %v1722
    %v1725 = vmul.f32 %v1706, %v1417
    %v1726 = vadd.f32 %v1724, %v1725
    %1727 = vmatprep.subr.bf16.mxu0 0
    %1728 = vmatpush1.bf16.msra.mxu0 %v788
    %1729 = vmatprep.subr.bf16.mxu0 0
    %1730 = vmatpush1.bf16.msra.mxu0 %v789
    %1731 = vmatprep.subr.bf16.mxu0 0
    %1732 = vmatpush1.bf16.msra.mxu0 0
    %1733 = vmatprep.subr.bf16.mxu0 0
    %1734 = vmatpush1.bf16.msra.mxu0 0
    %1735 = vmatprep.subr.bf16.mxu0 0
    %1736 = vmatpush1.bf16.msra.mxu0 0
    %1737 = vmatprep.subr.bf16.mxu0 0
    %1738 = vmatpush1.bf16.msra.mxu0 0
    %1739 = vmatprep.subr.bf16.mxu0 0
    %1740 = vmatpush1.bf16.msra.mxu0 0
    %1741 = vmatprep.subr.bf16.mxu0 0
    %1742 = vmatpush1.bf16.msra.mxu0 0
    %1743 = vmatprep.subr.bf16.mxu0 0
    %1744 = vmatpush1.bf16.msra.mxu0 0
    %1745 = vmatprep.subr.bf16.mxu0 0
    %1746 = vmatpush1.bf16.msra.mxu0 0
    %1747 = vmatprep.subr.bf16.mxu0 0
    %1748 = vmatpush1.bf16.msra.mxu0 0
    %1749 = vmatprep.subr.bf16.mxu0 0
    %1750 = vmatpush1.bf16.msra.mxu0 0
    %1751 = vmatprep.subr.bf16.mxu0 0
    %1752 = vmatpush1.bf16.msra.mxu0 0
    %1753 = vmatprep.subr.bf16.mxu0 0
    %1754 = vmatpush1.bf16.msra.mxu0 0
    %1755 = vmatprep.subr.bf16.mxu0 0
    %1756 = vmatpush1.bf16.msra.mxu0 0
    %1757 = vmatprep.subr.bf16.mxu0 0
    %1758 = vmatpush1.bf16.msra.mxu0 0
    %1759 = vmatprep.mubr.bf16.mxu0 0
    %1760 = vmatmul.mubr.bf16.gmra.mrb[0].mxu0 %v1658
    %v1761 = vpop.f32.mrb[0].mxu0
    %v1762 = vadd.f32 %v778, %v1761
    %v1763 = vpop.f32.mrb[0].mxu0
    %v1764 = vpop.f32.mrb[0].mxu0
    %v1765 = vpop.f32.mrb[0].mxu0
    %1766 = vdwg.mxu0
    %v1767 = vpack.c.bf16 %v1531, %v1531
    %1769 = vrot.lane.b32.xlu0 %v1767, 96
    %v1770 = vpop.permute.xlu0 %1769
    %v1772 = vsel %vm298, %v1770, 0
    %1774 = vmatprep.subr.bf16.mxu0 0
    %1775 = vmatpush1.bf16.msra.mxu0 %v840
    %1776 = vmatprep.subr.bf16.mxu0 0
    %1777 = vmatpush1.bf16.msra.mxu0 %v841
    %1778 = vmatprep.subr.bf16.mxu0 0
    %1779 = vmatpush1.bf16.msra.mxu0 0
    %1780 = vmatprep.subr.bf16.mxu0 0
    %1781 = vmatpush1.bf16.msra.mxu0 0
    %1782 = vmatprep.subr.bf16.mxu0 0
    %1783 = vmatpush1.bf16.msra.mxu0 0
    %1784 = vmatprep.subr.bf16.mxu0 0
    %1785 = vmatpush1.bf16.msra.mxu0 0
    %1786 = vmatprep.subr.bf16.mxu0 0
    %1787 = vmatpush1.bf16.msra.mxu0 0
    %1788 = vmatprep.subr.bf16.mxu0 0
    %1789 = vmatpush1.bf16.msra.mxu0 0
    %1790 = vmatprep.subr.bf16.mxu0 0
    %1791 = vmatpush1.bf16.msra.mxu0 0
    %1792 = vmatprep.subr.bf16.mxu0 0
    %1793 = vmatpush1.bf16.msra.mxu0 0
    %1794 = vmatprep.subr.bf16.mxu0 0
    %1795 = vmatpush1.bf16.msra.mxu0 0
    %1796 = vmatprep.subr.bf16.mxu0 0
    %1797 = vmatpush1.bf16.msra.mxu0 0
    %1798 = vmatprep.subr.bf16.mxu0 0
    %1799 = vmatpush1.bf16.msra.mxu0 0
    %1800 = vmatprep.subr.bf16.mxu0 0
    %1801 = vmatpush1.bf16.msra.mxu0 0
    %1802 = vmatprep.subr.bf16.mxu0 0
    %1803 = vmatpush1.bf16.msra.mxu0 0
    %1804 = vmatprep.subr.bf16.mxu0 0
    %1805 = vmatpush1.bf16.msra.mxu0 0
    %1806 = vmatprep.mubr.bf16.mxu0 0
    %1807 = vmatmul.mubr.bf16.gmra.mrb[0].mxu0 %v1772
    %v1808 = vpop.f32.mrb[0].mxu0
    %v1809 = vadd.f32 0.0, %v1808
    %v1810 = vpop.f32.mrb[0].mxu0
    %v1811 = vpop.f32.mrb[0].mxu0
    %v1812 = vpop.f32.mrb[0].mxu0
    %1813 = vdwg.mxu0
    %v1814 = vadd.f32 %v1762, %v1809
    %v1815 = vxor.u32 %v1814, 2147483648
    %v1816 = vmul.f32 %v1815, 1.442695
    %v1817 = vpow.pop %v1816
    %v1818 = vadd.f32 %v1817, 1.0
    %v1819 = vrcp.pop %v1818
    %v1820 = vmul.f32 1.0, %v1819
    %v1821 = vadd.f32 %v1809, %v892
    %1823 = vrot.lane.b32.xlu0 %v1821, 64
    %v1824 = vpop.permute.xlu0 %1823
    %v1826 = vmul.f32 %v1820, %v1824
    %1828 = vrot.lane.b32.xlu0 %v1826, 64
    %v1829 = vpop.permute.xlu0 %1828
    %v1831 = vadd.f32 %v1762, %v1829
    %v1832 = vtanh.pop %v1831
    %v1833 = vsub.f32 1.0, %v1820
    %1835 = vrot.lane.b32.xlu0 %v1832, 96
    %v1836 = vpop.permute.xlu0 %1835
    %v1838 = vmul.f32 %v1833, %v1836
    %v1839 = vmul.f32 %v1820, %v1531
    %v1840 = vadd.f32 %v1838, %v1839
    %vm1841 = vcmp.gt.s32.totalorder %v285, 3
    %v1842 = vsel %vm1841, 1, 0
    %1843 = vset.pattern.permute.xlu0 0
    %1844 = vperm.xlu0 %1843, %v1842
    %v1845 = vpop.permute.xlu0 %1844
    %vm1846 = vcmp.eq.s32.totalorder %v1845, 1
    %v1847 = vsel %vm1846, %v1840, 0.0
    %v1848 = vpack.c.bf16 %v1612, %v1612
    %1850 = vrot.lane.b32.xlu0 %v1848, 96
    %v1851 = vpop.permute.xlu0 %1850
    %v1853 = vsel %vm298, %v1851, 0
    %1855 = vmatprep.subr.bf16.mxu0 0
    %1856 = vmatpush1.bf16.msra.mxu0 %v294
    %1857 = vmatprep.subr.bf16.mxu0 0
    %1858 = vmatpush1.bf16.msra.mxu0 %v295
    %1859 = vmatprep.subr.bf16.mxu0 0
    %1860 = vmatpush1.bf16.msra.mxu0 0
    %1861 = vmatprep.subr.bf16.mxu0 0
    %1862 = vmatpush1.bf16.msra.mxu0 0
    %1863 = vmatprep.subr.bf16.mxu0 0
    %1864 = vmatpush1.bf16.msra.mxu0 0
    %1865 = vmatprep.subr.bf16.mxu0 0
    %1866 = vmatpush1.bf16.msra.mxu0 0
    %1867 = vmatprep.subr.bf16.mxu0 0
    %1868 = vmatpush1.bf16.msra.mxu0 0
    %1869 = vmatprep.subr.bf16.mxu0 0
    %1870 = vmatpush1.bf16.msra.mxu0 0
    %1871 = vmatprep.subr.bf16.mxu0 0
    %1872 = vmatpush1.bf16.msra.mxu0 0
    %1873 = vmatprep.subr.bf16.mxu0 0
    %1874 = vmatpush1.bf16.msra.mxu0 0
    %1875 = vmatprep.subr.bf16.mxu0 0
    %1876 = vmatpush1.bf16.msra.mxu0 0
    %1877 = vmatprep.subr.bf16.mxu0 0
    %1878 = vmatpush1.bf16.msra.mxu0 0
    %1879 = vmatprep.subr.bf16.mxu0 0
    %1880 = vmatpush1.bf16.msra.mxu0 0
    %1881 = vmatprep.subr.bf16.mxu0 0
    %1882 = vmatpush1.bf16.msra.mxu0 0
    %1883 = vmatprep.subr.bf16.mxu0 0
    %1884 = vmatpush1.bf16.msra.mxu0 0
    %1885 = vmatprep.subr.bf16.mxu0 0
    %1886 = vmatpush1.bf16.msra.mxu0 0
    %1887 = vmatprep.mubr.bf16.mxu0 0
    %1888 = vmatmul.mubr.bf16.gmra.mrb[0].mxu0 %v1853
    %v1889 = vpop.f32.mrb[0].mxu0
    %v1890 = vadd.f32 0.0, %v1889
    %v1891 = vpop.f32.mrb[0].mxu0
    %v1892 = vpop.f32.mrb[0].mxu0
    %v1893 = vpop.f32.mrb[0].mxu0
    %1894 = vdwg.mxu0
    %v1895 = vadd.f32 %v279, %v1890
    %v1896 = vxor.u32 %v1895, 2147483648
    %v1897 = vmul.f32 %v1896, 1.442695
    %v1898 = vpow.pop %v1897
    %v1899 = vadd.f32 %v1898, 1.0
    %v1900 = vrcp.pop %v1899
    %v1901 = vmul.f32 1.0, %v1900
    %v1902 = vadd.f32 %v1890, %v350
    %1904 = vrot.lane.b32.xlu0 %v1902, 64
    %v1905 = vpop.permute.xlu0 %1904
    %v1907 = vmul.f32 %v1901, %v1905
    %1909 = vrot.lane.b32.xlu0 %v1907, 64
    %v1910 = vpop.permute.xlu0 %1909
    %v1912 = vadd.f32 %v279, %v1910
    %v1913 = vtanh.pop %v1912
    %v1914 = vsub.f32 1.0, %v1901
    %1916 = vrot.lane.b32.xlu0 %v1913, 96
    %v1917 = vpop.permute.xlu0 %1916
    %v1919 = vmul.f32 %v1914, %v1917
    %v1920 = vmul.f32 %v1901, %v1612
    %v1921 = vadd.f32 %v1919, %v1920
    %1922 = vmatprep.subr.bf16.mxu0 0
    %1923 = vmatpush1.bf16.msra.mxu0 %v460
    %1924 = vmatprep.subr.bf16.mxu0 0
    %1925 = vmatpush1.bf16.msra.mxu0 %v461
    %1926 = vmatprep.subr.bf16.mxu0 0
    %1927 = vmatpush1.bf16.msra.mxu0 0
    %1928 = vmatprep.subr.bf16.mxu0 0
    %1929 = vmatpush1.bf16.msra.mxu0 0
    %1930 = vmatprep.subr.bf16.mxu0 0
    %1931 = vmatpush1.bf16.msra.mxu0 0
    %1932 = vmatprep.subr.bf16.mxu0 0
    %1933 = vmatpush1.bf16.msra.mxu0 0
    %1934 = vmatprep.subr.bf16.mxu0 0
    %1935 = vmatpush1.bf16.msra.mxu0 0
    %1936 = vmatprep.subr.bf16.mxu0 0
    %1937 = vmatpush1.bf16.msra.mxu0 0
    %1938 = vmatprep.subr.bf16.mxu0 0
    %1939 = vmatpush1.bf16.msra.mxu0 0
    %1940 = vmatprep.subr.bf16.mxu0 0
    %1941 = vmatpush1.bf16.msra.mxu0 0
    %1942 = vmatprep.subr.bf16.mxu0 0
    %1943 = vmatpush1.bf16.msra.mxu0 0
    %1944 = vmatprep.subr.bf16.mxu0 0
    %1945 = vmatpush1.bf16.msra.mxu0 0
    %1946 = vmatprep.subr.bf16.mxu0 0
    %1947 = vmatpush1.bf16.msra.mxu0 0
    %1948 = vmatprep.subr.bf16.mxu0 0
    %1949 = vmatpush1.bf16.msra.mxu0 0
    %1950 = vmatprep.subr.bf16.mxu0 0
    %1951 = vmatpush1.bf16.msra.mxu0 0
    %1952 = vmatprep.subr.bf16.mxu0 0
    %1953 = vmatpush1.bf16.msra.mxu0 0
    %1954 = vmatprep.mubr.bf16.mxu0 0
    %1955 = vmatmul.mubr.bf16.gmra.mrb[0].mxu0 %v1853
    %v1956 = vpop.f32.mrb[0].mxu0
    %v1957 = vadd.f32 %v450, %v1956
    %v1958 = vpop.f32.mrb[0].mxu0
    %v1959 = vpop.f32.mrb[0].mxu0
    %v1960 = vpop.f32.mrb[0].mxu0
    %1961 = vdwg.mxu0
    %v1962 = vpack.c.bf16 %v1726, %v1726
    %1964 = vrot.lane.b32.xlu0 %v1962, 96
    %v1965 = vpop.permute.xlu0 %1964
    %v1967 = vsel %vm298, %v1965, 0
    %1969 = vmatprep.subr.bf16.mxu0 0
    %1970 = vmatpush1.bf16.msra.mxu0 %v512
    %1971 = vmatprep.subr.bf16.mxu0 0
    %1972 = vmatpush1.bf16.msra.mxu0 %v513
    %1973 = vmatprep.subr.bf16.mxu0 0
    %1974 = vmatpush1.bf16.msra.mxu0 0
    %1975 = vmatprep.subr.bf16.mxu0 0
    %1976 = vmatpush1.bf16.msra.mxu0 0
    %1977 = vmatprep.subr.bf16.mxu0 0
    %1978 = vmatpush1.bf16.msra.mxu0 0
    %1979 = vmatprep.subr.bf16.mxu0 0
    %1980 = vmatpush1.bf16.msra.mxu0 0
    %1981 = vmatprep.subr.bf16.mxu0 0
    %1982 = vmatpush1.bf16.msra.mxu0 0
    %1983 = vmatprep.subr.bf16.mxu0 0
    %1984 = vmatpush1.bf16.msra.mxu0 0
    %1985 = vmatprep.subr.bf16.mxu0 0
    %1986 = vmatpush1.bf16.msra.mxu0 0
    %1987 = vmatprep.subr.bf16.mxu0 0
    %1988 = vmatpush1.bf16.msra.mxu0 0
    %1989 = vmatprep.subr.bf16.mxu0 0
    %1990 = vmatpush1.bf16.msra.mxu0 0
    %1991 = vmatprep.subr.bf16.mxu0 0
    %1992 = vmatpush1.bf16.msra.mxu0 0
    %1993 = vmatprep.subr.bf16.mxu0 0
    %1994 = vmatpush1.bf16.msra.mxu0 0
    %1995 = vmatprep.subr.bf16.mxu0 0
    %1996 = vmatpush1.bf16.msra.mxu0 0
    %1997 = vmatprep.subr.bf16.mxu0 0
    %1998 = vmatpush1.bf16.msra.mxu0 0
    %1999 = vmatprep.subr.bf16.mxu0 0
    %2000 = vmatpush1.bf16.msra.mxu0 0
    %2001 = vmatprep.mubr.bf16.mxu0 0
    %2002 = vmatmul.mubr.bf16.gmra.mrb[0].mxu0 %v1967
    %v2003 = vpop.f32.mrb[0].mxu0
    %v2004 = vadd.f32 0.0, %v2003
    %v2005 = vpop.f32.mrb[0].mxu0
    %v2006 = vpop.f32.mrb[0].mxu0
    %v2007 = vpop.f32.mrb[0].mxu0
    %2008 = vdwg.mxu0
    %v2009 = vadd.f32 %v1957, %v2004
    %v2010 = vxor.u32 %v2009, 2147483648
    %v2011 = vmul.f32 %v2010, 1.442695
    %v2012 = vpow.pop %v2011
    %v2013 = vadd.f32 %v2012, 1.0
    %v2014 = vrcp.pop %v2013
    %v2015 = vmul.f32 1.0, %v2014
    %v2016 = vadd.f32 %v2004, %v564
    %2018 = vrot.lane.b32.xlu0 %v2016, 64
    %v2019 = vpop.permute.xlu0 %2018
    %v2021 = vmul.f32 %v2015, %v2019
    %2023 = vrot.lane.b32.xlu0 %v2021, 64
    %v2024 = vpop.permute.xlu0 %2023
    %v2026 = vadd.f32 %v1957, %v2024
    %v2027 = vtanh.pop %v2026
    %v2028 = vsub.f32 1.0, %v2015
    %2030 = vrot.lane.b32.xlu0 %v2027, 96
    %v2031 = vpop.permute.xlu0 %2030
    %v2033 = vmul.f32 %v2028, %v2031
    %v2034 = vmul.f32 %v2015, %v1726
    %v2035 = vadd.f32 %v2033, %v2034
    %2036 = vmatprep.subr.bf16.mxu0 0
    %2037 = vmatpush1.bf16.msra.mxu0 %v788
    %2038 = vmatprep.subr.bf16.mxu0 0
    %2039 = vmatpush1.bf16.msra.mxu0 %v789
    %2040 = vmatprep.subr.bf16.mxu0 0
    %2041 = vmatpush1.bf16.msra.mxu0 0
    %2042 = vmatprep.subr.bf16.mxu0 0
    %2043 = vmatpush1.bf16.msra.mxu0 0
    %2044 = vmatprep.subr.bf16.mxu0 0
    %2045 = vmatpush1.bf16.msra.mxu0 0
    %2046 = vmatprep.subr.bf16.mxu0 0
    %2047 = vmatpush1.bf16.msra.mxu0 0
    %2048 = vmatprep.subr.bf16.mxu0 0
    %2049 = vmatpush1.bf16.msra.mxu0 0
    %2050 = vmatprep.subr.bf16.mxu0 0
    %2051 = vmatpush1.bf16.msra.mxu0 0
    %2052 = vmatprep.subr.bf16.mxu0 0
    %2053 = vmatpush1.bf16.msra.mxu0 0
    %2054 = vmatprep.subr.bf16.mxu0 0
    %2055 = vmatpush1.bf16.msra.mxu0 0
    %2056 = vmatprep.subr.bf16.mxu0 0
    %2057 = vmatpush1.bf16.msra.mxu0 0
    %2058 = vmatprep.subr.bf16.mxu0 0
    %2059 = vmatpush1.bf16.msra.mxu0 0
    %2060 = vmatprep.subr.bf16.mxu0 0
    %2061 = vmatpush1.bf16.msra.mxu0 0
    %2062 = vmatprep.subr.bf16.mxu0 0
    %2063 = vmatpush1.bf16.msra.mxu0 0
    %2064 = vmatprep.subr.bf16.mxu0 0
    %2065 = vmatpush1.bf16.msra.mxu0 0
    %2066 = vmatprep.subr.bf16.mxu0 0
    %2067 = vmatpush1.bf16.msra.mxu0 0
    %2068 = vmatprep.mubr.bf16.mxu0 0
    %2069 = vmatmul.mubr.bf16.gmra.mrb[0].mxu0 %v1967
    %v2070 = vpop.f32.mrb[0].mxu0
    %v2071 = vadd.f32 %v778, %v2070
    %v2072 = vpop.f32.mrb[0].mxu0
    %v2073 = vpop.f32.mrb[0].mxu0
    %v2074 = vpop.f32.mrb[0].mxu0
    %2075 = vdwg.mxu0
    %v2076 = vpack.c.bf16 %v1840, %v1840
    %2078 = vrot.lane.b32.xlu0 %v2076, 96
    %v2079 = vpop.permute.xlu0 %2078
    %v2081 = vsel %vm298, %v2079, 0
    %2083 = vmatprep.subr.bf16.mxu0 0
    %2084 = vmatpush1.bf16.msra.mxu0 %v840
    %2085 = vmatprep.subr.bf16.mxu0 0
    %2086 = vmatpush1.bf16.msra.mxu0 %v841
    %2087 = vmatprep.subr.bf16.mxu0 0
    %2088 = vmatpush1.bf16.msra.mxu0 0
    %2089 = vmatprep.subr.bf16.mxu0 0
    %2090 = vmatpush1.bf16.msra.mxu0 0
    %2091 = vmatprep.subr.bf16.mxu0 0
    %2092 = vmatpush1.bf16.msra.mxu0 0
    %2093 = vmatprep.subr.bf16.mxu0 0
    %2094 = vmatpush1.bf16.msra.mxu0 0
    %2095 = vmatprep.subr.bf16.mxu0 0
    %2096 = vmatpush1.bf16.msra.mxu0 0
    %2097 = vmatprep.subr.bf16.mxu0 0
    %2098 = vmatpush1.bf16.msra.mxu0 0
    %2099 = vmatprep.subr.bf16.mxu0 0
    %2100 = vmatpush1.bf16.msra.mxu0 0
    %2101 = vmatprep.subr.bf16.mxu0 0
    %2102 = vmatpush1.bf16.msra.mxu0 0
    %2103 = vmatprep.subr.bf16.mxu0 0
    %2104 = vmatpush1.bf16.msra.mxu0 0
    %2105 = vmatprep.subr.bf16.mxu0 0
    %2106 = vmatpush1.bf16.msra.mxu0 0
    %2107 = vmatprep.subr.bf16.mxu0 0
    %2108 = vmatpush1.bf16.msra.mxu0 0
    %2109 = vmatprep.subr.bf16.mxu0 0
    %2110 = vmatpush1.bf16.msra.mxu0 0
    %2111 = vmatprep.subr.bf16.mxu0 0
    %2112 = vmatpush1.bf16.msra.mxu0 0
    %2113 = vmatprep.subr.bf16.mxu0 0
    %2114 = vmatpush1.bf16.msra.mxu0 0
    %2115 = vmatprep.mubr.bf16.mxu0 0
    %2116 = vmatmul.mubr.bf16.gmra.mrb[0].mxu0 %v2081
    %v2117 = vpop.f32.mrb[0].mxu0
    %v2118 = vadd.f32 0.0, %v2117
    %v2119 = vpop.f32.mrb[0].mxu0
    %v2120 = vpop.f32.mrb[0].mxu0
    %v2121 = vpop.f32.mrb[0].mxu0
    %2122 = vdwg.mxu0
    %v2123 = vadd.f32 %v2071, %v2118
    %v2124 = vxor.u32 %v2123, 2147483648
    %v2125 = vmul.f32 %v2124, 1.442695
    %v2126 = vpow.pop %v2125
    %v2127 = vadd.f32 %v2126, 1.0
    %v2128 = vrcp.pop %v2127
    %v2129 = vmul.f32 1.0, %v2128
    %v2130 = vadd.f32 %v2118, %v892
    %2132 = vrot.lane.b32.xlu0 %v2130, 64
    %v2133 = vpop.permute.xlu0 %2132
    %v2135 = vmul.f32 %v2129, %v2133
    %2137 = vrot.lane.b32.xlu0 %v2135, 64
    %v2138 = vpop.permute.xlu0 %2137
    %v2140 = vadd.f32 %v2071, %v2138
    %v2141 = vtanh.pop %v2140
    %v2142 = vsub.f32 1.0, %v2129
    %2144 = vrot.lane.b32.xlu0 %v2141, 96
    %v2145 = vpop.permute.xlu0 %2144
    %v2147 = vmul.f32 %v2142, %v2145
    %v2148 = vmul.f32 %v2129, %v1840
    %v2149 = vadd.f32 %v2147, %v2148
    %vm2150 = vcmp.gt.s32.totalorder %v285, 4
    %v2151 = vsel %vm2150, 1, 0
    %2152 = vset.pattern.permute.xlu0 0
    %2153 = vperm.xlu0 %2152, %v2151
    %v2154 = vpop.permute.xlu0 %2153
    %vm2155 = vcmp.eq.s32.totalorder %v2154, 1
    %v2156 = vsel %vm2155, %v2149, 0.0
    %v2157 = vpack.c.bf16 %v1921, %v1921
    %2159 = vrot.lane.b32.xlu0 %v2157, 96
    %v2160 = vpop.permute.xlu0 %2159
    %v2162 = vsel %vm298, %v2160, 0
    %2164 = vmatprep.subr.bf16.mxu0 0
    %2165 = vmatpush1.bf16.msra.mxu0 %v294
    %2166 = vmatprep.subr.bf16.mxu0 0
    %2167 = vmatpush1.bf16.msra.mxu0 %v295
    %2168 = vmatprep.subr.bf16.mxu0 0
    %2169 = vmatpush1.bf16.msra.mxu0 0
    %2170 = vmatprep.subr.bf16.mxu0 0
    %2171 = vmatpush1.bf16.msra.mxu0 0
    %2172 = vmatprep.subr.bf16.mxu0 0
    %2173 = vmatpush1.bf16.msra.mxu0 0
    %2174 = vmatprep.subr.bf16.mxu0 0
    %2175 = vmatpush1.bf16.msra.mxu0 0
    %2176 = vmatprep.subr.bf16.mxu0 0
    %2177 = vmatpush1.bf16.msra.mxu0 0
    %2178 = vmatprep.subr.bf16.mxu0 0
    %2179 = vmatpush1.bf16.msra.mxu0 0
    %2180 = vmatprep.subr.bf16.mxu0 0
    %2181 = vmatpush1.bf16.msra.mxu0 0
    %2182 = vmatprep.subr.bf16.mxu0 0
    %2183 = vmatpush1.bf16.msra.mxu0 0
    %2184 = vmatprep.subr.bf16.mxu0 0
    %2185 = vmatpush1.bf16.msra.mxu0 0
    %2186 = vmatprep.subr.bf16.mxu0 0
    %2187 = vmatpush1.bf16.msra.mxu0 0
    %2188 = vmatprep.subr.bf16.mxu0 0
    %2189 = vmatpush1.bf16.msra.mxu0 0
    %2190 = vmatprep.subr.bf16.mxu0 0
    %2191 = vmatpush1.bf16.msra.mxu0 0
    %2192 = vmatprep.subr.bf16.mxu0 0
    %2193 = vmatpush1.bf16.msra.mxu0 0
    %2194 = vmatprep.subr.bf16.mxu0 0
    %2195 = vmatpush1.bf16.msra.mxu0 0
    %2196 = vmatprep.mubr.bf16.mxu0 0
    %2197 = vmatmul.mubr.bf16.gmra.mrb[0].mxu0 %v2162
    %v2198 = vpop.f32.mrb[0].mxu0
    %v2199 = vadd.f32 0.0, %v2198
    %v2200 = vpop.f32.mrb[0].mxu0
    %v2201 = vpop.f32.mrb[0].mxu0
    %v2202 = vpop.f32.mrb[0].mxu0
    %2203 = vdwg.mxu0
    %v2204 = vadd.f32 %v282, %v2199
    %v2205 = vxor.u32 %v2204, 2147483648
    %v2206 = vmul.f32 %v2205, 1.442695
    %v2207 = vpow.pop %v2206
    %v2208 = vadd.f32 %v2207, 1.0
    %v2209 = vrcp.pop %v2208
    %v2210 = vmul.f32 1.0, %v2209
    %v2211 = vadd.f32 %v2199, %v350
    %2213 = vrot.lane.b32.xlu0 %v2211, 64
    %v2214 = vpop.permute.xlu0 %2213
    %v2216 = vmul.f32 %v2210, %v2214
    %2218 = vrot.lane.b32.xlu0 %v2216, 64
    %v2219 = vpop.permute.xlu0 %2218
    %v2221 = vadd.f32 %v282, %v2219
    %v2222 = vtanh.pop %v2221
    %v2223 = vsub.f32 1.0, %v2210
    %2225 = vrot.lane.b32.xlu0 %v2222, 96
    %v2226 = vpop.permute.xlu0 %2225
    %v2228 = vmul.f32 %v2223, %v2226
    %v2229 = vmul.f32 %v2210, %v1921
    %v2230 = vadd.f32 %v2228, %v2229
    %2231 = vmatprep.subr.bf16.mxu0 0
    %2232 = vmatpush1.bf16.msra.mxu0 %v460
    %2233 = vmatprep.subr.bf16.mxu0 0
    %2234 = vmatpush1.bf16.msra.mxu0 %v461
    %2235 = vmatprep.subr.bf16.mxu0 0
    %2236 = vmatpush1.bf16.msra.mxu0 0
    %2237 = vmatprep.subr.bf16.mxu0 0
    %2238 = vmatpush1.bf16.msra.mxu0 0
    %2239 = vmatprep.subr.bf16.mxu0 0
    %2240 = vmatpush1.bf16.msra.mxu0 0
    %2241 = vmatprep.subr.bf16.mxu0 0
    %2242 = vmatpush1.bf16.msra.mxu0 0
    %2243 = vmatprep.subr.bf16.mxu0 0
    %2244 = vmatpush1.bf16.msra.mxu0 0
    %2245 = vmatprep.subr.bf16.mxu0 0
    %2246 = vmatpush1.bf16.msra.mxu0 0
    %2247 = vmatprep.subr.bf16.mxu0 0
    %2248 = vmatpush1.bf16.msra.mxu0 0
    %2249 = vmatprep.subr.bf16.mxu0 0
    %2250 = vmatpush1.bf16.msra.mxu0 0
    %2251 = vmatprep.subr.bf16.mxu0 0
    %2252 = vmatpush1.bf16.msra.mxu0 0
    %2253 = vmatprep.subr.bf16.mxu0 0
    %2254 = vmatpush1.bf16.msra.mxu0 0
    %2255 = vmatprep.subr.bf16.mxu0 0
    %2256 = vmatpush1.bf16.msra.mxu0 0
    %2257 = vmatprep.subr.bf16.mxu0 0
    %2258 = vmatpush1.bf16.msra.mxu0 0
    %2259 = vmatprep.subr.bf16.mxu0 0
    %2260 = vmatpush1.bf16.msra.mxu0 0
    %2261 = vmatprep.subr.bf16.mxu0 0
    %2262 = vmatpush1.bf16.msra.mxu0 0
    %2263 = vmatprep.mubr.bf16.mxu0 0
    %2264 = vmatmul.mubr.bf16.gmra.mrb[0].mxu0 %v2162
    %v2265 = vpop.f32.mrb[0].mxu0
    %v2266 = vadd.f32 %v450, %v2265
    %v2267 = vpop.f32.mrb[0].mxu0
    %v2268 = vpop.f32.mrb[0].mxu0
    %v2269 = vpop.f32.mrb[0].mxu0
    %2270 = vdwg.mxu0
    %v2271 = vpack.c.bf16 %v2035, %v2035
    %2273 = vrot.lane.b32.xlu0 %v2271, 96
    %v2274 = vpop.permute.xlu0 %2273
    %v2276 = vsel %vm298, %v2274, 0
    %2278 = vmatprep.subr.bf16.mxu0 0
    %2279 = vmatpush1.bf16.msra.mxu0 %v512
    %2280 = vmatprep.subr.bf16.mxu0 0
    %2281 = vmatpush1.bf16.msra.mxu0 %v513
    %2282 = vmatprep.subr.bf16.mxu0 0
    %2283 = vmatpush1.bf16.msra.mxu0 0
    %2284 = vmatprep.subr.bf16.mxu0 0
    %2285 = vmatpush1.bf16.msra.mxu0 0
    %2286 = vmatprep.subr.bf16.mxu0 0
    %2287 = vmatpush1.bf16.msra.mxu0 0
    %2288 = vmatprep.subr.bf16.mxu0 0
    %2289 = vmatpush1.bf16.msra.mxu0 0
    %2290 = vmatprep.subr.bf16.mxu0 0
    %2291 = vmatpush1.bf16.msra.mxu0 0
    %2292 = vmatprep.subr.bf16.mxu0 0
    %2293 = vmatpush1.bf16.msra.mxu0 0
    %2294 = vmatprep.subr.bf16.mxu0 0
    %2295 = vmatpush1.bf16.msra.mxu0 0
    %2296 = vmatprep.subr.bf16.mxu0 0
    %2297 = vmatpush1.bf16.msra.mxu0 0
    %2298 = vmatprep.subr.bf16.mxu0 0
    %2299 = vmatpush1.bf16.msra.mxu0 0
    %2300 = vmatprep.subr.bf16.mxu0 0
    %2301 = vmatpush1.bf16.msra.mxu0 0
    %2302 = vmatprep.subr.bf16.mxu0 0
    %2303 = vmatpush1.bf16.msra.mxu0 0
    %2304 = vmatprep.subr.bf16.mxu0 0
    %2305 = vmatpush1.bf16.msra.mxu0 0
    %2306 = vmatprep.subr.bf16.mxu0 0
    %2307 = vmatpush1.bf16.msra.mxu0 0
    %2308 = vmatprep.subr.bf16.mxu0 0
    %2309 = vmatpush1.bf16.msra.mxu0 0
    %2310 = vmatprep.mubr.bf16.mxu0 0
    %2311 = vmatmul.mubr.bf16.gmra.mrb[0].mxu0 %v2276
    %v2312 = vpop.f32.mrb[0].mxu0
    %v2313 = vadd.f32 0.0, %v2312
    %v2314 = vpop.f32.mrb[0].mxu0
    %v2315 = vpop.f32.mrb[0].mxu0
    %v2316 = vpop.f32.mrb[0].mxu0
    %2317 = vdwg.mxu0
    %v2318 = vadd.f32 %v2266, %v2313
    %v2319 = vxor.u32 %v2318, 2147483648
    %v2320 = vmul.f32 %v2319, 1.442695
    %v2321 = vpow.pop %v2320
    %v2322 = vadd.f32 %v2321, 1.0
    %v2323 = vrcp.pop %v2322
    %v2324 = vmul.f32 1.0, %v2323
    %v2325 = vadd.f32 %v2313, %v564
    %2327 = vrot.lane.b32.xlu0 %v2325, 64
    %v2328 = vpop.permute.xlu0 %2327
    %v2330 = vmul.f32 %v2324, %v2328
    %2332 = vrot.lane.b32.xlu0 %v2330, 64
    %v2333 = vpop.permute.xlu0 %2332
    %v2335 = vadd.f32 %v2266, %v2333
    %v2336 = vtanh.pop %v2335
    %v2337 = vsub.f32 1.0, %v2324
    %2339 = vrot.lane.b32.xlu0 %v2336, 96
    %v2340 = vpop.permute.xlu0 %2339
    %v2342 = vmul.f32 %v2337, %v2340
    %v2343 = vmul.f32 %v2324, %v2035
    %v2344 = vadd.f32 %v2342, %v2343
    %2345 = vmatprep.subr.bf16.mxu0 0
    %2346 = vmatpush1.bf16.msra.mxu0 %v788
    %2347 = vmatprep.subr.bf16.mxu0 0
    %2348 = vmatpush1.bf16.msra.mxu0 %v789
    %2349 = vmatprep.subr.bf16.mxu0 0
    %2350 = vmatpush1.bf16.msra.mxu0 0
    %2351 = vmatprep.subr.bf16.mxu0 0
    %2352 = vmatpush1.bf16.msra.mxu0 0
    %2353 = vmatprep.subr.bf16.mxu0 0
    %2354 = vmatpush1.bf16.msra.mxu0 0
    %2355 = vmatprep.subr.bf16.mxu0 0
    %2356 = vmatpush1.bf16.msra.mxu0 0
    %2357 = vmatprep.subr.bf16.mxu0 0
    %2358 = vmatpush1.bf16.msra.mxu0 0
    %2359 = vmatprep.subr.bf16.mxu0 0
    %2360 = vmatpush1.bf16.msra.mxu0 0
    %2361 = vmatprep.subr.bf16.mxu0 0
    %2362 = vmatpush1.bf16.msra.mxu0 0
    %2363 = vmatprep.subr.bf16.mxu0 0
    %2364 = vmatpush1.bf16.msra.mxu0 0
    %2365 = vmatprep.subr.bf16.mxu0 0
    %2366 = vmatpush1.bf16.msra.mxu0 0
    %2367 = vmatprep.subr.bf16.mxu0 0
    %2368 = vmatpush1.bf16.msra.mxu0 0
    %2369 = vmatprep.subr.bf16.mxu0 0
    %2370 = vmatpush1.bf16.msra.mxu0 0
    %2371 = vmatprep.subr.bf16.mxu0 0
    %2372 = vmatpush1.bf16.msra.mxu0 0
    %2373 = vmatprep.subr.bf16.mxu0 0
    %2374 = vmatpush1.bf16.msra.mxu0 0
    %2375 = vmatprep.subr.bf16.mxu0 0
    %2376 = vmatpush1.bf16.msra.mxu0 0
    %2377 = vmatprep.mubr.bf16.mxu0 0
    %2378 = vmatmul.mubr.bf16.gmra.mrb[0].mxu0 %v2276
    %v2379 = vpop.f32.mrb[0].mxu0
    %v2380 = vadd.f32 %v778, %v2379
    %v2381 = vpop.f32.mrb[0].mxu0
    %v2382 = vpop.f32.mrb[0].mxu0
    %v2383 = vpop.f32.mrb[0].mxu0
    %2384 = vdwg.mxu0
    %v2385 = vpack.c.bf16 %v2149, %v2149
    %2387 = vrot.lane.b32.xlu0 %v2385, 96
    %v2388 = vpop.permute.xlu0 %2387
    %v2390 = vsel %vm298, %v2388, 0
    %2392 = vmatprep.subr.bf16.mxu0 0
    %2393 = vmatpush1.bf16.msra.mxu0 %v840
    %2394 = vmatprep.subr.bf16.mxu0 0
    %2395 = vmatpush1.bf16.msra.mxu0 %v841
    %2396 = vmatprep.subr.bf16.mxu0 0
    %2397 = vmatpush1.bf16.msra.mxu0 0
    %2398 = vmatprep.subr.bf16.mxu0 0
    %2399 = vmatpush1.bf16.msra.mxu0 0
    %2400 = vmatprep.subr.bf16.mxu0 0
    %2401 = vmatpush1.bf16.msra.mxu0 0
    %2402 = vmatprep.subr.bf16.mxu0 0
    %2403 = vmatpush1.bf16.msra.mxu0 0
    %2404 = vmatprep.subr.bf16.mxu0 0
    %2405 = vmatpush1.bf16.msra.mxu0 0
    %2406 = vmatprep.subr.bf16.mxu0 0
    %2407 = vmatpush1.bf16.msra.mxu0 0
    %2408 = vmatprep.subr.bf16.mxu0 0
    %2409 = vmatpush1.bf16.msra.mxu0 0
    %2410 = vmatprep.subr.bf16.mxu0 0
    %2411 = vmatpush1.bf16.msra.mxu0 0
    %2412 = vmatprep.subr.bf16.mxu0 0
    %2413 = vmatpush1.bf16.msra.mxu0 0
    %2414 = vmatprep.subr.bf16.mxu0 0
    %2415 = vmatpush1.bf16.msra.mxu0 0
    %2416 = vmatprep.subr.bf16.mxu0 0
    %2417 = vmatpush1.bf16.msra.mxu0 0
    %2418 = vmatprep.subr.bf16.mxu0 0
    %2419 = vmatpush1.bf16.msra.mxu0 0
    %2420 = vmatprep.subr.bf16.mxu0 0
    %2421 = vmatpush1.bf16.msra.mxu0 0
    %2422 = vmatprep.subr.bf16.mxu0 0
    %2423 = vmatpush1.bf16.msra.mxu0 0
    %2424 = vmatprep.mubr.bf16.mxu0 0
    %2425 = vmatmul.mubr.bf16.gmra.mrb[0].mxu0 %v2390
    %v2426 = vpop.f32.mrb[0].mxu0
    %v2427 = vadd.f32 0.0, %v2426
    %v2428 = vpop.f32.mrb[0].mxu0
    %v2429 = vpop.f32.mrb[0].mxu0
    %v2430 = vpop.f32.mrb[0].mxu0
    %2431 = vdwg.mxu0
    %v2432 = vadd.f32 %v2380, %v2427
    %v2433 = vxor.u32 %v2432, 2147483648
    %v2434 = vmul.f32 %v2433, 1.442695
    %v2435 = vpow.pop %v2434
    %v2436 = vadd.f32 %v2435, 1.0
    %v2437 = vrcp.pop %v2436
    %v2438 = vmul.f32 1.0, %v2437
    %v2439 = vadd.f32 %v2427, %v892
    %2441 = vrot.lane.b32.xlu0 %v2439, 64
    %v2442 = vpop.permute.xlu0 %2441
    %v2444 = vmul.f32 %v2438, %v2442
    %2446 = vrot.lane.b32.xlu0 %v2444, 64
    %v2447 = vpop.permute.xlu0 %2446
    %v2449 = vadd.f32 %v2380, %v2447
    %v2450 = vtanh.pop %v2449
    %v2451 = vsub.f32 1.0, %v2438
    %2453 = vrot.lane.b32.xlu0 %v2450, 96
    %v2454 = vpop.permute.xlu0 %2453
    %v2456 = vmul.f32 %v2451, %v2454
    %v2457 = vmul.f32 %v2438, %v2149
    %v2458 = vadd.f32 %v2456, %v2457
    %vm2459 = vcmp.gt.s32.totalorder %v285, 5
    %v2460 = vsel %vm2459, 1, 0
    %2461 = vset.pattern.permute.xlu0 0
    %2462 = vperm.xlu0 %2461, %v2460
    %v2463 = vpop.permute.xlu0 %2462
    %vm2464 = vcmp.eq.s32.totalorder %v2463, 1
    %v2465 = vsel %vm2464, %v2458, 0.0
    %v2466 = vpack.c.bf16 %v2230, %v2230
    %2468 = vrot.lane.b32.xlu0 %v2466, 96
    %v2469 = vpop.permute.xlu0 %2468
    %v2471 = vsel %vm298, %v2469, 0
    %2473 = vmatprep.subr.bf16.mxu0 0
    %2474 = vmatpush1.bf16.msra.mxu0 %v460
    %2475 = vmatprep.subr.bf16.mxu0 0
    %2476 = vmatpush1.bf16.msra.mxu0 %v461
    %2477 = vmatprep.subr.bf16.mxu0 0
    %2478 = vmatpush1.bf16.msra.mxu0 0
    %2479 = vmatprep.subr.bf16.mxu0 0
    %2480 = vmatpush1.bf16.msra.mxu0 0
    %2481 = vmatprep.subr.bf16.mxu0 0
    %2482 = vmatpush1.bf16.msra.mxu0 0
    %2483 = vmatprep.subr.bf16.mxu0 0
    %2484 = vmatpush1.bf16.msra.mxu0 0
    %2485 = vmatprep.subr.bf16.mxu0 0
    %2486 = vmatpush1.bf16.msra.mxu0 0
    %2487 = vmatprep.subr.bf16.mxu0 0
    %2488 = vmatpush1.bf16.msra.mxu0 0
    %2489 = vmatprep.subr.bf16.mxu0 0
    %2490 = vmatpush1.bf16.msra.mxu0 0
    %2491 = vmatprep.subr.bf16.mxu0 0
    %2492 = vmatpush1.bf16.msra.mxu0 0
    %2493 = vmatprep.subr.bf16.mxu0 0
    %2494 = vmatpush1.bf16.msra.mxu0 0
    %2495 = vmatprep.subr.bf16.mxu0 0
    %2496 = vmatpush1.bf16.msra.mxu0 0
    %2497 = vmatprep.subr.bf16.mxu0 0
    %2498 = vmatpush1.bf16.msra.mxu0 0
    %2499 = vmatprep.subr.bf16.mxu0 0
    %2500 = vmatpush1.bf16.msra.mxu0 0
    %2501 = vmatprep.subr.bf16.mxu0 0
    %2502 = vmatpush1.bf16.msra.mxu0 0
    %2503 = vmatprep.subr.bf16.mxu0 0
    %2504 = vmatpush1.bf16.msra.mxu0 0
    %2505 = vmatprep.mubr.bf16.mxu0 0
    %2506 = vmatmul.mubr.bf16.gmra.mrb[0].mxu0 %v2471
    %v2507 = vpop.f32.mrb[0].mxu0
    %v2508 = vadd.f32 %v450, %v2507
    %v2509 = vpop.f32.mrb[0].mxu0
    %v2510 = vpop.f32.mrb[0].mxu0
    %v2511 = vpop.f32.mrb[0].mxu0
    %2512 = vdwg.mxu0
    %v2513 = vpack.c.bf16 %v2344, %v2344
    %2515 = vrot.lane.b32.xlu0 %v2513, 96
    %v2516 = vpop.permute.xlu0 %2515
    %v2518 = vsel %vm298, %v2516, 0
    %2520 = vmatprep.subr.bf16.mxu0 0
    %2521 = vmatpush1.bf16.msra.mxu0 %v512
    %2522 = vmatprep.subr.bf16.mxu0 0
    %2523 = vmatpush1.bf16.msra.mxu0 %v513
    %2524 = vmatprep.subr.bf16.mxu0 0
    %2525 = vmatpush1.bf16.msra.mxu0 0
    %2526 = vmatprep.subr.bf16.mxu0 0
    %2527 = vmatpush1.bf16.msra.mxu0 0
    %2528 = vmatprep.subr.bf16.mxu0 0
    %2529 = vmatpush1.bf16.msra.mxu0 0
    %2530 = vmatprep.subr.bf16.mxu0 0
    %2531 = vmatpush1.bf16.msra.mxu0 0
    %2532 = vmatprep.subr.bf16.mxu0 0
    %2533 = vmatpush1.bf16.msra.mxu0 0
    %2534 = vmatprep.subr.bf16.mxu0 0
    %2535 = vmatpush1.bf16.msra.mxu0 0
    %2536 = vmatprep.subr.bf16.mxu0 0
    %2537 = vmatpush1.bf16.msra.mxu0 0
    %2538 = vmatprep.subr.bf16.mxu0 0
    %2539 = vmatpush1.bf16.msra.mxu0 0
    %2540 = vmatprep.subr.bf16.mxu0 0
    %2541 = vmatpush1.bf16.msra.mxu0 0
    %2542 = vmatprep.subr.bf16.mxu0 0
    %2543 = vmatpush1.bf16.msra.mxu0 0
    %2544 = vmatprep.subr.bf16.mxu0 0
    %2545 = vmatpush1.bf16.msra.mxu0 0
    %2546 = vmatprep.subr.bf16.mxu0 0
    %2547 = vmatpush1.bf16.msra.mxu0 0
    %2548 = vmatprep.subr.bf16.mxu0 0
    %2549 = vmatpush1.bf16.msra.mxu0 0
    %2550 = vmatprep.subr.bf16.mxu0 0
    %2551 = vmatpush1.bf16.msra.mxu0 0
    %2552 = vmatprep.mubr.bf16.mxu0 0
    %2553 = vmatmul.mubr.bf16.gmra.mrb[0].mxu0 %v2518
    %v2554 = vpop.f32.mrb[0].mxu0
    %v2555 = vadd.f32 0.0, %v2554
    %v2556 = vpop.f32.mrb[0].mxu0
    %v2557 = vpop.f32.mrb[0].mxu0
    %v2558 = vpop.f32.mrb[0].mxu0
    %2559 = vdwg.mxu0
    %v2560 = vadd.f32 %v2508, %v2555
    %v2561 = vxor.u32 %v2560, 2147483648
    %v2562 = vmul.f32 %v2561, 1.442695
    %v2563 = vpow.pop %v2562
    %v2564 = vadd.f32 %v2563, 1.0
    %v2565 = vrcp.pop %v2564
    %v2566 = vmul.f32 1.0, %v2565
    %v2567 = vadd.f32 %v2555, %v564
    %2569 = vrot.lane.b32.xlu0 %v2567, 64
    %v2570 = vpop.permute.xlu0 %2569
    %v2572 = vmul.f32 %v2566, %v2570
    %2574 = vrot.lane.b32.xlu0 %v2572, 64
    %v2575 = vpop.permute.xlu0 %2574
    %v2577 = vadd.f32 %v2508, %v2575
    %v2578 = vtanh.pop %v2577
    %v2579 = vsub.f32 1.0, %v2566
    %2581 = vrot.lane.b32.xlu0 %v2578, 96
    %v2582 = vpop.permute.xlu0 %2581
    %v2584 = vmul.f32 %v2579, %v2582
    %v2585 = vmul.f32 %v2566, %v2344
    %v2586 = vadd.f32 %v2584, %v2585
    %2587 = vmatprep.subr.bf16.mxu0 0
    %2588 = vmatpush1.bf16.msra.mxu0 %v788
    %2589 = vmatprep.subr.bf16.mxu0 0
    %2590 = vmatpush1.bf16.msra.mxu0 %v789
    %2591 = vmatprep.subr.bf16.mxu0 0
    %2592 = vmatpush1.bf16.msra.mxu0 0
    %2593 = vmatprep.subr.bf16.mxu0 0
    %2594 = vmatpush1.bf16.msra.mxu0 0
    %2595 = vmatprep.subr.bf16.mxu0 0
    %2596 = vmatpush1.bf16.msra.mxu0 0
    %2597 = vmatprep.subr.bf16.mxu0 0
    %2598 = vmatpush1.bf16.msra.mxu0 0
    %2599 = vmatprep.subr.bf16.mxu0 0
    %2600 = vmatpush1.bf16.msra.mxu0 0
    %2601 = vmatprep.subr.bf16.mxu0 0
    %2602 = vmatpush1.bf16.msra.mxu0 0
    %2603 = vmatprep.subr.bf16.mxu0 0
    %2604 = vmatpush1.bf16.msra.mxu0 0
    %2605 = vmatprep.subr.bf16.mxu0 0
    %2606 = vmatpush1.bf16.msra.mxu0 0
    %2607 = vmatprep.subr.bf16.mxu0 0
    %2608 = vmatpush1.bf16.msra.mxu0 0
    %2609 = vmatprep.subr.bf16.mxu0 0
    %2610 = vmatpush1.bf16.msra.mxu0 0
    %2611 = vmatprep.subr.bf16.mxu0 0
    %2612 = vmatpush1.bf16.msra.mxu0 0
    %2613 = vmatprep.subr.bf16.mxu0 0
    %2614 = vmatpush1.bf16.msra.mxu0 0
    %2615 = vmatprep.subr.bf16.mxu0 0
    %2616 = vmatpush1.bf16.msra.mxu0 0
    %2617 = vmatprep.subr.bf16.mxu0 0
    %2618 = vmatpush1.bf16.msra.mxu0 0
    %2619 = vmatprep.mubr.bf16.mxu0 0
    %2620 = vmatmul.mubr.bf16.gmra.mrb[0].mxu0 %v2518
    %v2621 = vpop.f32.mrb[0].mxu0
    %v2622 = vadd.f32 %v778, %v2621
    %v2623 = vpop.f32.mrb[0].mxu0
    %v2624 = vpop.f32.mrb[0].mxu0
    %v2625 = vpop.f32.mrb[0].mxu0
    %2626 = vdwg.mxu0
    %v2627 = vpack.c.bf16 %v2458, %v2458
    %2629 = vrot.lane.b32.xlu0 %v2627, 96
    %v2630 = vpop.permute.xlu0 %2629
    %v2632 = vsel %vm298, %v2630, 0
    %2634 = vmatprep.subr.bf16.mxu0 0
    %2635 = vmatpush1.bf16.msra.mxu0 %v840
    %2636 = vmatprep.subr.bf16.mxu0 0
    %2637 = vmatpush1.bf16.msra.mxu0 %v841
    %2638 = vmatprep.subr.bf16.mxu0 0
    %2639 = vmatpush1.bf16.msra.mxu0 0
    %2640 = vmatprep.subr.bf16.mxu0 0
    %2641 = vmatpush1.bf16.msra.mxu0 0
    %2642 = vmatprep.subr.bf16.mxu0 0
    %2643 = vmatpush1.bf16.msra.mxu0 0
    %2644 = vmatprep.subr.bf16.mxu0 0
    %2645 = vmatpush1.bf16.msra.mxu0 0
    %2646 = vmatprep.subr.bf16.mxu0 0
    %2647 = vmatpush1.bf16.msra.mxu0 0
    %2648 = vmatprep.subr.bf16.mxu0 0
    %2649 = vmatpush1.bf16.msra.mxu0 0
    %2650 = vmatprep.subr.bf16.mxu0 0
    %2651 = vmatpush1.bf16.msra.mxu0 0
    %2652 = vmatprep.subr.bf16.mxu0 0
    %2653 = vmatpush1.bf16.msra.mxu0 0
    %2654 = vmatprep.subr.bf16.mxu0 0
    %2655 = vmatpush1.bf16.msra.mxu0 0
    %2656 = vmatprep.subr.bf16.mxu0 0
    %2657 = vmatpush1.bf16.msra.mxu0 0
    %2658 = vmatprep.subr.bf16.mxu0 0
    %2659 = vmatpush1.bf16.msra.mxu0 0
    %2660 = vmatprep.subr.bf16.mxu0 0
    %2661 = vmatpush1.bf16.msra.mxu0 0
    %2662 = vmatprep.subr.bf16.mxu0 0
    %2663 = vmatpush1.bf16.msra.mxu0 0
    %2664 = vmatprep.subr.bf16.mxu0 0
    %2665 = vmatpush1.bf16.msra.mxu0 0
    %2666 = vmatprep.mubr.bf16.mxu0 0
    %2667 = vmatmul.mubr.bf16.gmra.mrb[0].mxu0 %v2632
    %v2668 = vpop.f32.mrb[0].mxu0
    %v2669 = vadd.f32 0.0, %v2668
    %v2670 = vpop.f32.mrb[0].mxu0
    %v2671 = vpop.f32.mrb[0].mxu0
    %v2672 = vpop.f32.mrb[0].mxu0
    %2673 = vdwg.mxu0
    %v2674 = vadd.f32 %v2622, %v2669
    %v2675 = vxor.u32 %v2674, 2147483648
    %v2676 = vmul.f32 %v2675, 1.442695
    %v2677 = vpow.pop %v2676
    %v2678 = vadd.f32 %v2677, 1.0
    %v2679 = vrcp.pop %v2678
    %v2680 = vmul.f32 1.0, %v2679
    %v2681 = vadd.f32 %v2669, %v892
    %2683 = vrot.lane.b32.xlu0 %v2681, 64
    %v2684 = vpop.permute.xlu0 %2683
    %v2686 = vmul.f32 %v2680, %v2684
    %2688 = vrot.lane.b32.xlu0 %v2686, 64
    %v2689 = vpop.permute.xlu0 %2688
    %v2691 = vadd.f32 %v2622, %v2689
    %v2692 = vtanh.pop %v2691
    %v2693 = vsub.f32 1.0, %v2680
    %2695 = vrot.lane.b32.xlu0 %v2692, 96
    %v2696 = vpop.permute.xlu0 %2695
    %v2698 = vmul.f32 %v2693, %v2696
    %v2699 = vmul.f32 %v2680, %v2458
    %v2700 = vadd.f32 %v2698, %v2699
    %vm2701 = vcmp.gt.s32.totalorder %v285, 6
    %v2702 = vsel %vm2701, 1, 0
    %2703 = vset.pattern.permute.xlu0 0
    %2704 = vperm.xlu0 %2703, %v2702
    %v2705 = vpop.permute.xlu0 %2704
    %vm2706 = vcmp.eq.s32.totalorder %v2705, 1
    %v2707 = vsel %vm2706, %v2700, 0.0
    %v2708 = vpack.c.bf16 %v2586, %v2586
    %2710 = vrot.lane.b32.xlu0 %v2708, 96
    %v2711 = vpop.permute.xlu0 %2710
    %v2713 = vsel %vm298, %v2711, 0
    %2715 = vmatprep.subr.bf16.mxu0 0
    %2716 = vmatpush1.bf16.msra.mxu0 %v788
    %2717 = vmatprep.subr.bf16.mxu0 0
    %2718 = vmatpush1.bf16.msra.mxu0 %v789
    %2719 = vmatprep.subr.bf16.mxu0 0
    %2720 = vmatpush1.bf16.msra.mxu0 0
    %2721 = vmatprep.subr.bf16.mxu0 0
    %2722 = vmatpush1.bf16.msra.mxu0 0
    %2723 = vmatprep.subr.bf16.mxu0 0
    %2724 = vmatpush1.bf16.msra.mxu0 0
    %2725 = vmatprep.subr.bf16.mxu0 0
    %2726 = vmatpush1.bf16.msra.mxu0 0
    %2727 = vmatprep.subr.bf16.mxu0 0
    %2728 = vmatpush1.bf16.msra.mxu0 0
    %2729 = vmatprep.subr.bf16.mxu0 0
    %2730 = vmatpush1.bf16.msra.mxu0 0
    %2731 = vmatprep.subr.bf16.mxu0 0
    %2732 = vmatpush1.bf16.msra.mxu0 0
    %2733 = vmatprep.subr.bf16.mxu0 0
    %2734 = vmatpush1.bf16.msra.mxu0 0
    %2735 = vmatprep.subr.bf16.mxu0 0
    %2736 = vmatpush1.bf16.msra.mxu0 0
    %2737 = vmatprep.subr.bf16.mxu0 0
    %2738 = vmatpush1.bf16.msra.mxu0 0
    %2739 = vmatprep.subr.bf16.mxu0 0
    %2740 = vmatpush1.bf16.msra.mxu0 0
    %2741 = vmatprep.subr.bf16.mxu0 0
    %2742 = vmatpush1.bf16.msra.mxu0 0
    %2743 = vmatprep.subr.bf16.mxu0 0
    %2744 = vmatpush1.bf16.msra.mxu0 0
    %2745 = vmatprep.subr.bf16.mxu0 0
    %2746 = vmatpush1.bf16.msra.mxu0 0
    %2747 = vmatprep.mubr.bf16.mxu0 0
    %2748 = vmatmul.mubr.bf16.gmra.mrb[0].mxu0 %v2713
    %v2749 = vpop.f32.mrb[0].mxu0
    %v2750 = vadd.f32 %v778, %v2749
    %v2751 = vpop.f32.mrb[0].mxu0
    %v2752 = vpop.f32.mrb[0].mxu0
    %v2753 = vpop.f32.mrb[0].mxu0
    %2754 = vdwg.mxu0
    %v2755 = vpack.c.bf16 %v2700, %v2700
    %2757 = vrot.lane.b32.xlu0 %v2755, 96
    %v2758 = vpop.permute.xlu0 %2757
    %v2760 = vsel %vm298, %v2758, 0
    %2762 = vmatprep.subr.bf16.mxu0 0
    %2763 = vmatpush1.bf16.msra.mxu0 %v840
    %2764 = vmatprep.subr.bf16.mxu0 0
    %2765 = vmatpush1.bf16.msra.mxu0 %v841
    %2766 = vmatprep.subr.bf16.mxu0 0
    %2767 = vmatpush1.bf16.msra.mxu0 0
    %2768 = vmatprep.subr.bf16.mxu0 0
    %2769 = vmatpush1.bf16.msra.mxu0 0
    %2770 = vmatprep.subr.bf16.mxu0 0
    %2771 = vmatpush1.bf16.msra.mxu0 0
    %2772 = vmatprep.subr.bf16.mxu0 0
    %2773 = vmatpush1.bf16.msra.mxu0 0
    %2774 = vmatprep.subr.bf16.mxu0 0
    %2775 = vmatpush1.bf16.msra.mxu0 0
    %2776 = vmatprep.subr.bf16.mxu0 0
    %2777 = vmatpush1.bf16.msra.mxu0 0
    %2778 = vmatprep.subr.bf16.mxu0 0
    %2779 = vmatpush1.bf16.msra.mxu0 0
    %2780 = vmatprep.subr.bf16.mxu0 0
    %2781 = vmatpush1.bf16.msra.mxu0 0
    %2782 = vmatprep.subr.bf16.mxu0 0
    %2783 = vmatpush1.bf16.msra.mxu0 0
    %2784 = vmatprep.subr.bf16.mxu0 0
    %2785 = vmatpush1.bf16.msra.mxu0 0
    %2786 = vmatprep.subr.bf16.mxu0 0
    %2787 = vmatpush1.bf16.msra.mxu0 0
    %2788 = vmatprep.subr.bf16.mxu0 0
    %2789 = vmatpush1.bf16.msra.mxu0 0
    %2790 = vmatprep.subr.bf16.mxu0 0
    %2791 = vmatpush1.bf16.msra.mxu0 0
    %2792 = vmatprep.subr.bf16.mxu0 0
    %2793 = vmatpush1.bf16.msra.mxu0 0
    %2794 = vmatprep.mubr.bf16.mxu0 0
    %2795 = vmatmul.mubr.bf16.gmra.mrb[0].mxu0 %v2760
    %v2796 = vpop.f32.mrb[0].mxu0
    %v2797 = vadd.f32 0.0, %v2796
    %v2798 = vpop.f32.mrb[0].mxu0
    %v2799 = vpop.f32.mrb[0].mxu0
    %v2800 = vpop.f32.mrb[0].mxu0
    %2801 = vdwg.mxu0
    %v2802 = vadd.f32 %v2750, %v2797
    %v2803 = vxor.u32 %v2802, 2147483648
    %v2804 = vmul.f32 %v2803, 1.442695
    %v2805 = vpow.pop %v2804
    %v2806 = vadd.f32 %v2805, 1.0
    %v2807 = vrcp.pop %v2806
    %v2808 = vmul.f32 1.0, %v2807
    %v2809 = vadd.f32 %v2797, %v892
    %2811 = vrot.lane.b32.xlu0 %v2809, 64
    %v2812 = vpop.permute.xlu0 %2811
    %v2814 = vmul.f32 %v2808, %v2812
    %2816 = vrot.lane.b32.xlu0 %v2814, 64
    %v2817 = vpop.permute.xlu0 %2816
    %v2819 = vadd.f32 %v2750, %v2817
    %v2820 = vtanh.pop %v2819
    %v2821 = vsub.f32 1.0, %v2808
    %2823 = vrot.lane.b32.xlu0 %v2820, 96
    %v2824 = vpop.permute.xlu0 %2823
    %v2826 = vmul.f32 %v2821, %v2824
    %v2827 = vmul.f32 %v2808, %v2700
    %v2828 = vadd.f32 %v2826, %v2827
    %vm2829 = vcmp.gt.s32.totalorder %v285, 7
    %v2830 = vsel %vm2829, 1, 0
    %2831 = vset.pattern.permute.xlu0 0
    %2832 = vperm.xlu0 %2831, %v2830
    %v2833 = vpop.permute.xlu0 %2832
    %vm2834 = vcmp.eq.s32.totalorder %v2833, 1
    %v2835 = vsel %vm2834, %v2828, 0.0
    %v2836 = vld [vmem:[%s14] sm:$0xff]
    %v2837 = vld [vmem:[%s14 + $0x8] sm:$0xff]
    %v2838 = vld [vmem:[%s14 + $0x10] sm:$0xff]
    %v2839 = vld [vmem:[%s14 + $0x18] sm:$0xff]
    %v2840 = vld [vmem:[#allocation10] sm:$0x1]
    %v2842 = vlaneseq
    %v2843 = vshrl.u32 %v2842, 7
    %v2844 = vsub.s32 0, %v2843
    %v2845 = vrot.slane %v2840, %v2844
    %2855 = vrot.lane.b32.xlu0 %v920, 96
    %v2856 = vpop.permute.xlu0 %2855
    %2857 = vrot.lane.b32.xlu0 %v1229, 96
    %v2858 = vpop.permute.xlu0 %2857
    %2859 = vrot.lane.b32.xlu0 %v1538, 96
    %v2860 = vpop.permute.xlu0 %2859
    %2861 = vrot.lane.b32.xlu0 %v1847, 96
    %v2862 = vpop.permute.xlu0 %2861
    %2863 = vrot.lane.b32.xlu0 %v2156, 96
    %v2864 = vpop.permute.xlu0 %2863
    %2865 = vrot.lane.b32.xlu0 %v2465, 96
    %v2866 = vpop.permute.xlu0 %2865
    %2867 = vrot.lane.b32.xlu0 %v2707, 96
    %v2868 = vpop.permute.xlu0 %2867
    %2869 = vrot.lane.b32.xlu0 %v2835, 96
    %v2870 = vpop.permute.xlu0 %2869
    %v2871 = vsel %vm298, %v2856, 0
    %v2873 = vsel %vm298, %v2858, 0
    %v2875 = vsel %vm298, %v2860, 0
    %v2877 = vsel %vm298, %v2862, 0
    %v2879 = vsel %vm298, %v2864, 0
    %v2881 = vsel %vm298, %v2866, 0
    %v2883 = vsel %vm298, %v2868, 0
    %v2885 = vsel %vm298, %v2870, 0
    %2887 = vmatprep.subr.mxu0 0.0
    %2888 = vmatpush1.msra.mxu0 %v2836
    %2889 = vmatprep.subr.mxu0 0.0
    %2890 = vmatpush1.msra.mxu0 %v2837
    %2891 = vmatprep.subr.mxu0 0.0
    %2892 = vmatpush1.msra.mxu0 %v2838
    %2893 = vmatprep.subr.mxu0 0.0
    %2894 = vmatpush1.msra.mxu0 %v2839
    %2895 = vmatprep.subr.mxu0 0.0
    %2896 = vmatpush1.msra.mxu0 0.0
    %2897 = vmatprep.subr.mxu0 0.0
    %2898 = vmatpush1.msra.mxu0 0.0
    %2899 = vmatprep.subr.mxu0 0.0
    %2900 = vmatpush1.msra.mxu0 0.0
    %2901 = vmatprep.subr.mxu0 0.0
    %2902 = vmatpush1.msra.mxu0 0.0
    %2903 = vmatprep.subr.mxu0 0.0
    %2904 = vmatpush1.msra.mxu0 0.0
    %2905 = vmatprep.subr.mxu0 0.0
    %2906 = vmatpush1.msra.mxu0 0.0
    %2907 = vmatprep.subr.mxu0 0.0
    %2908 = vmatpush1.msra.mxu0 0.0
    %2909 = vmatprep.subr.mxu0 0.0
    %2910 = vmatpush1.msra.mxu0 0.0
    %2911 = vmatprep.subr.mxu0 0.0
    %2912 = vmatpush1.msra.mxu0 0.0
    %2913 = vmatprep.subr.mxu0 0.0
    %2914 = vmatpush1.msra.mxu0 0.0
    %2915 = vmatprep.subr.mxu0 0.0
    %2916 = vmatpush1.msra.mxu0 0.0
    %2917 = vmatprep.subr.mxu0 0.0
    %2918 = vmatpush1.msra.mxu0 0.0
    %2919 = vmatprep.subr.mxu0 0.0
    %2920 = vmatpush1.msra.mxu0 0.0
    %2921 = vmatprep.subr.mxu0 0.0
    %2922 = vmatpush1.msra.mxu0 0.0
    %2923 = vmatprep.subr.mxu0 0.0
    %2924 = vmatpush1.msra.mxu0 0.0
    %2925 = vmatprep.subr.mxu0 0.0
    %2926 = vmatpush1.msra.mxu0 0.0
    %2927 = vmatprep.subr.mxu0 0.0
    %2928 = vmatpush1.msra.mxu0 0.0
    %2929 = vmatprep.subr.mxu0 0.0
    %2930 = vmatpush1.msra.mxu0 0.0
    %2931 = vmatprep.subr.mxu0 0.0
    %2932 = vmatpush1.msra.mxu0 0.0
    %2933 = vmatprep.subr.mxu0 0.0
    %2934 = vmatpush1.msra.mxu0 0.0
    %2935 = vmatprep.subr.mxu0 0.0
    %2936 = vmatpush1.msra.mxu0 0.0
    %2937 = vmatprep.subr.mxu0 0.0
    %2938 = vmatpush1.msra.mxu0 0.0
    %2939 = vmatprep.subr.mxu0 0.0
    %2940 = vmatpush1.msra.mxu0 0.0
    %2941 = vmatprep.subr.mxu0 0.0
    %2942 = vmatpush1.msra.mxu0 0.0
    %2943 = vmatprep.subr.mxu0 0.0
    %2944 = vmatpush1.msra.mxu0 0.0
    %2945 = vmatprep.subr.mxu0 0.0
    %2946 = vmatpush1.msra.mxu0 0.0
    %2947 = vmatprep.subr.mxu0 0.0
    %2948 = vmatpush1.msra.mxu0 0.0
    %2949 = vmatprep.subr.mxu0 0.0
    %2950 = vmatpush1.msra.mxu0 0.0
    %2951 = vmatprep.mubr.f32.mxu0 0.0
    %2952 = vmatmul.mubr.f32.gmra.mrb[0].mxu0 %v2871
    %v2953 = vpop.f32.mrb[0].mxu0
    %v2954 = vadd.f32 %v2845, %v2953
    %v2955 = vpop.f32.mrb[0].mxu0
    %2956 = vmatprep.mubr.f32.mxu0 0.0
    %2957 = vmatmul.mubr.f32.gmra.mrb[0].mxu0 %v2873
    %v2958 = vpop.f32.mrb[0].mxu0
    %v2959 = vadd.f32 %v2845, %v2958
    %v2960 = vpop.f32.mrb[0].mxu0
    %2961 = vmatprep.mubr.f32.mxu0 0.0
    %2962 = vmatmul.mubr.f32.gmra.mrb[0].mxu0 %v2875
    %v2963 = vpop.f32.mrb[0].mxu0
    %v2964 = vadd.f32 %v2845, %v2963
    %v2965 = vpop.f32.mrb[0].mxu0
    %2966 = vmatprep.mubr.f32.mxu0 0.0
    %2967 = vmatmul.mubr.f32.gmra.mrb[0].mxu0 %v2877
    %v2968 = vpop.f32.mrb[0].mxu0
    %v2969 = vadd.f32 %v2845, %v2968
    %v2970 = vpop.f32.mrb[0].mxu0
    %2971 = vmatprep.mubr.f32.mxu0 0.0
    %2972 = vmatmul.mubr.f32.gmra.mrb[0].mxu0 %v2879
    %v2973 = vpop.f32.mrb[0].mxu0
    %v2974 = vadd.f32 %v2845, %v2973
    %v2975 = vpop.f32.mrb[0].mxu0
    %2976 = vmatprep.mubr.f32.mxu0 0.0
    %2977 = vmatmul.mubr.f32.gmra.mrb[0].mxu0 %v2881
    %v2978 = vpop.f32.mrb[0].mxu0
    %v2979 = vadd.f32 %v2845, %v2978
    %v2980 = vpop.f32.mrb[0].mxu0
    %2981 = vmatprep.mubr.f32.mxu0 0.0
    %2982 = vmatmul.mubr.f32.gmra.mrb[0].mxu0 %v2883
    %v2983 = vpop.f32.mrb[0].mxu0
    %v2984 = vadd.f32 %v2845, %v2983
    %v2985 = vpop.f32.mrb[0].mxu0
    %2986 = vmatprep.mubr.f32.mxu0 0.0
    %2987 = vmatmul.mubr.f32.gmra.mrb[0].mxu0 %v2885
    %v2988 = vpop.f32.mrb[0].mxu0
    %v2989 = vadd.f32 %v2845, %v2988
    %v2990 = vpop.f32.mrb[0].mxu0
    %2991 = vdwg.mxu0
    %v2992 = vmax.f32 %v2954, 0.0
    %v2993 = vmax.f32 %v2959, 0.0
    %v2994 = vmax.f32 %v2964, 0.0
    %v2995 = vmax.f32 %v2969, 0.0
    %v2996 = vmax.f32 %v2974, 0.0
    %v2997 = vmax.f32 %v2979, 0.0
    %v2998 = vmax.f32 %v2984, 0.0
    %v2999 = vmax.f32 %v2989, 0.0
    %v3000 = vld [vmem:[%s16] sm:$0xff]
    %v3001 = vld [vmem:[%s16 + $0x8] sm:$0xff]
    %v3002 = vld [vmem:[%s16 + $0x10] sm:$0xff]
    %v3003 = vld [vmem:[%s16 + $0x18] sm:$0xff]
    %v3004 = vld [vmem:[%s16 + $0x20] sm:$0xff]
    %v3005 = vld [vmem:[%s16 + $0x28] sm:$0xff]
    %v3006 = vld [vmem:[%s16 + $0x30] sm:$0xff]
    %v3007 = vld [vmem:[%s16 + $0x38] sm:$0xff]
    %v3008 = vld [vmem:[%s16 + $0x40] sm:$0xff]
    %v3009 = vld [vmem:[%s16 + $0x48] sm:$0xff]
    %v3010 = vld [vmem:[%s16 + $0x50] sm:$0xff]
    %v3011 = vld [vmem:[%s16 + $0x58] sm:$0xff]
    %v3012 = vld [vmem:[%s16 + $0x60] sm:$0xff]
    %v3013 = vld [vmem:[%s16 + $0x68] sm:$0xff]
    %v3014 = vld [vmem:[%s16 + $0x70] sm:$0xff]
    %v3015 = vld [vmem:[%s16 + $0x78] sm:$0xff]
    %v3016 = vld [vmem:[#allocation12] sm:$0x1]
    %v3018 = vlaneseq
    %v3019 = vshrl.u32 %v3018, 7
    %v3020 = vsub.s32 0, %v3019
    %v3021 = vrot.slane %v3016, %v3020
    %3023 = vmatprep.subr.mxu0 0.0
    %3024 = vmatpush1.msra.mxu0 %v3000
    %3025 = vmatprep.subr.mxu0 0.0
    %3026 = vmatpush1.msra.mxu0 %v3001
    %3027 = vmatprep.subr.mxu0 0.0
    %3028 = vmatpush1.msra.mxu0 %v3002
    %3029 = vmatprep.subr.mxu0 0.0
    %3030 = vmatpush1.msra.mxu0 %v3003
    %3031 = vmatprep.subr.mxu0 0.0
    %3032 = vmatpush1.msra.mxu0 %v3004
    %3033 = vmatprep.subr.mxu0 0.0
    %3034 = vmatpush1.msra.mxu0 %v3005
    %3035 = vmatprep.subr.mxu0 0.0
    %3036 = vmatpush1.msra.mxu0 %v3006
    %3037 = vmatprep.subr.mxu0 0.0
    %3038 = vmatpush1.msra.mxu0 %v3007
    %3039 = vmatprep.subr.mxu0 0.0
    %3040 = vmatpush1.msra.mxu0 %v3008
    %3041 = vmatprep.subr.mxu0 0.0
    %3042 = vmatpush1.msra.mxu0 %v3009
    %3043 = vmatprep.subr.mxu0 0.0
    %3044 = vmatpush1.msra.mxu0 %v3010
    %3045 = vmatprep.subr.mxu0 0.0
    %3046 = vmatpush1.msra.mxu0 %v3011
    %3047 = vmatprep.subr.mxu0 0.0
    %3048 = vmatpush1.msra.mxu0 %v3012
    %3049 = vmatprep.subr.mxu0 0.0
    %3050 = vmatpush1.msra.mxu0 %v3013
    %3051 = vmatprep.subr.mxu0 0.0
    %3052 = vmatpush1.msra.mxu0 %v3014
    %3053 = vmatprep.subr.mxu0 0.0
    %3054 = vmatpush1.msra.mxu0 %v3015
    %3055 = vmatprep.subr.mxu0 0.0
    %3056 = vmatpush1.msra.mxu0 0.0
    %3057 = vmatprep.subr.mxu0 0.0
    %3058 = vmatpush1.msra.mxu0 0.0
    %3059 = vmatprep.subr.mxu0 0.0
    %3060 = vmatpush1.msra.mxu0 0.0
    %3061 = vmatprep.subr.mxu0 0.0
    %3062 = vmatpush1.msra.mxu0 0.0
    %3063 = vmatprep.subr.mxu0 0.0
    %3064 = vmatpush1.msra.mxu0 0.0
    %3065 = vmatprep.subr.mxu0 0.0
    %3066 = vmatpush1.msra.mxu0 0.0
    %3067 = vmatprep.subr.mxu0 0.0
    %3068 = vmatpush1.msra.mxu0 0.0
    %3069 = vmatprep.subr.mxu0 0.0
    %3070 = vmatpush1.msra.mxu0 0.0
    %3071 = vmatprep.subr.mxu0 0.0
    %3072 = vmatpush1.msra.mxu0 0.0
    %3073 = vmatprep.subr.mxu0 0.0
    %3074 = vmatpush1.msra.mxu0 0.0
    %3075 = vmatprep.subr.mxu0 0.0
    %3076 = vmatpush1.msra.mxu0 0.0
    %3077 = vmatprep.subr.mxu0 0.0
    %3078 = vmatpush1.msra.mxu0 0.0
    %3079 = vmatprep.subr.mxu0 0.0
    %3080 = vmatpush1.msra.mxu0 0.0
    %3081 = vmatprep.subr.mxu0 0.0
    %3082 = vmatpush1.msra.mxu0 0.0
    %3083 = vmatprep.subr.mxu0 0.0
    %3084 = vmatpush1.msra.mxu0 0.0
    %3085 = vmatprep.subr.mxu0 0.0
    %3086 = vmatpush1.msra.mxu0 0.0
    %3087 = vmatprep.mubr.f32.mxu0 0.0
    %3088 = vmatmul.mubr.f32.gmra.mrb[0].mxu0 %v2992
    %v3089 = vpop.f32.mrb[0].mxu0
    %v3090 = vadd.f32 %v3021, %v3089
    %v3091 = vpop.f32.mrb[0].mxu0
    %3092 = vmatprep.mubr.f32.mxu0 0.0
    %3093 = vmatmul.mubr.f32.gmra.mrb[0].mxu0 %v2993
    %v3094 = vpop.f32.mrb[0].mxu0
    %v3095 = vadd.f32 %v3021, %v3094
    %v3096 = vpop.f32.mrb[0].mxu0
    %3097 = vmatprep.mubr.f32.mxu0 0.0
    %3098 = vmatmul.mubr.f32.gmra.mrb[0].mxu0 %v2994
    %v3099 = vpop.f32.mrb[0].mxu0
    %v3100 = vadd.f32 %v3021, %v3099
    %v3101 = vpop.f32.mrb[0].mxu0
    %3102 = vmatprep.mubr.f32.mxu0 0.0
    %3103 = vmatmul.mubr.f32.gmra.mrb[0].mxu0 %v2995
    %v3104 = vpop.f32.mrb[0].mxu0
    %v3105 = vadd.f32 %v3021, %v3104
    %v3106 = vpop.f32.mrb[0].mxu0
    %3107 = vmatprep.mubr.f32.mxu0 0.0
    %3108 = vmatmul.mubr.f32.gmra.mrb[0].mxu0 %v2996
    %v3109 = vpop.f32.mrb[0].mxu0
    %v3110 = vadd.f32 %v3021, %v3109
    %v3111 = vpop.f32.mrb[0].mxu0
    %3112 = vmatprep.mubr.f32.mxu0 0.0
    %3113 = vmatmul.mubr.f32.gmra.mrb[0].mxu0 %v2997
    %v3114 = vpop.f32.mrb[0].mxu0
    %v3115 = vadd.f32 %v3021, %v3114
    %v3116 = vpop.f32.mrb[0].mxu0
    %3117 = vmatprep.mubr.f32.mxu0 0.0
    %3118 = vmatmul.mubr.f32.gmra.mrb[0].mxu0 %v2998
    %v3119 = vpop.f32.mrb[0].mxu0
    %v3120 = vadd.f32 %v3021, %v3119
    %v3121 = vpop.f32.mrb[0].mxu0
    %3122 = vmatprep.mubr.f32.mxu0 0.0
    %3123 = vmatmul.mubr.f32.gmra.mrb[0].mxu0 %v2999
    %v3124 = vpop.f32.mrb[0].mxu0
    %v3125 = vadd.f32 %v3021, %v3124
    %v3126 = vpop.f32.mrb[0].mxu0
    %3127 = vdwg.mxu0
    %3128 = vst [vmem:[%s18] sm:$0xff] %v3090
    %3129 = vst [vmem:[%s18 + $0x8] sm:$0xff] %v3095
    %3130 = vst [vmem:[%s18 + $0x10] sm:$0xff] %v3100
    %3131 = vst [vmem:[%s18 + $0x18] sm:$0xff] %v3105
    %3132 = vst [vmem:[%s18 + $0x20] sm:$0xff] %v3110
    %3133 = vst [vmem:[%s18 + $0x28] sm:$0xff] %v3115
    %3134 = vst [vmem:[%s18 + $0x30] sm:$0xff] %v3120
    %3135 = vst [vmem:[%s18 + $0x38] sm:$0xff] %v3125
    // Predicated region
    $region102: #{imu_to_trajectory_forward.1} parent=1 // pred_check
      _
    $region103: #{imu_to_trajectory_forward.1} parent=1 // pred_check_branch
      %3137 = sbr.rel (0) target = $region105
    $region104: #{imu_to_trajectory_forward.1} parent=1 // pred_region
      _
    $region105: #{imu_to_trajectory_forward.1} parent=1 // pred_fallthru
      _
    // Predicated region
    $region106: #{imu_to_trajectory_forward.1} parent=1 // pred_check
      _
    $region107: #{imu_to_trajectory_forward.1} parent=1 // pred_check_branch
      %3139 = sbr.rel (0) target = $region109
    $region108: #{imu_to_trajectory_forward.1} parent=1 // pred_region
      _
    $region109: #{imu_to_trajectory_forward.1} parent=1 // pred_fallthru
      _
    %3140 = vsyncpa [#allocation3], 1
    %3141 = vsyncpa [#allocation5], 1
    %3142 = vsyncpa [#allocation8], 1
    %3143 = vsyncpa [#allocation11], 1

</llo_original>
